<compile_context>
chip_gen: v7x
topology: tpu7x:2x2x1
jax: 0.10.0
libtpu: 0.0.40
codegen_flags: <defaults>
</compile_context>

<pallas_src>
import math
import functools

import jax
import jax.numpy as jnp
from jax.experimental import pallas as pl
from jax.experimental.pallas import tpu as pltpu

NEG_INF = -1e30
LN_EPS = 1e-5
MXU_DTYPE = jnp.bfloat16          # matmul operand dtype; accumulation stays fp32


def _round_up(x, m):
    return (x + m - 1) // m * m


def _pick_nb(n, max_nb=8):
    """Batch columns per grid step: largest divisor of n that is <= max_nb."""
    if n <= max_nb:
        return n
    for cand in range(max_nb, 0, -1):
        if n % cand == 0:
            return cand
    return 1


# --------------------------------------------------------------------------
# In-kernel helpers
# --------------------------------------------------------------------------
def _add_layernorm(x, y, gamma, beta):
    """LayerNorm(x + y) * gamma + beta, statistics in fp32."""
    z = x + y
    mean = jnp.mean(z, axis=-1, keepdims=True)
    var = jnp.mean(jnp.square(z - mean), axis=-1, keepdims=True)
    return (z - mean) * jax.lax.rsqrt(var + LN_EPS) * gamma + beta


def _mha_block(x, kp_bias, attn_bias, wqkv, bqkv, wo, bo, *,
               nb, seq, num_heads, head_dim):
    """Multi-head self-attention with add_zero_attn semantics.

    x:         (nb*seq, E) fp32 -- nb batch columns, each a (seq, E) sequence.
    kp_bias:   (nb, seq)  fp32  -- additive key-padding bias (0 or NEG_INF).
    attn_bias: (seq, seq) fp32 or None -- additive attention mask.
    Returns    (nb*seq, E) fp32 attention output (out_proj applied).
    """
    emb = num_heads * head_dim
    scale = 1.0 / math.sqrt(head_dim)

    # Fused QKV projection: one (R, E) @ (E, 3E) matmul on the MXU.
    qkv = jnp.dot(x.astype(MXU_DTYPE), wqkv.astype(MXU_DTYPE),
                  preferred_element_type=jnp.float32) + bqkv            # (R, 3E)

    # Head-batched tensors (num_heads*nb, seq, head_dim).  seq % 8 == 0 so the
    # reshapes below are layout-trivial; concatenation is along the major axis.
    def heads_of(col0):
        parts = [
            qkv[:, col0 + h * head_dim: col0 + (h + 1) * head_dim]
            .reshape(nb, seq, head_dim)
            for h in range(num_heads)
        ]
        return jnp.concatenate(parts, axis=0)

    q = heads_of(0) * scale
    k = heads_of(emb)
    v = heads_of(2 * emb)

    # All heads' scores in one batched contraction.
    s = jnp.einsum('bqd,bkd->bqk', q.astype(MXU_DTYPE), k.astype(MXU_DTYPE),
                   preferred_element_type=jnp.float32)                  # (H*nb, S, S)

    kp = jnp.broadcast_to(kp_bias[None], (num_heads, nb, seq))
    kp = kp.reshape(num_heads * nb, seq)[:, None, :]                    # (H*nb, 1, S)
    s = s + kp
    if attn_bias is not None:
        s = s + attn_bias[None, :, :]

    # add_zero_attn: one extra key whose logit is exactly 0 with a zero value;
    # folded into the softmax analytically (no S+1 column materialised).
    m = jnp.maximum(jnp.max(s, axis=-1, keepdims=True), 0.0)
    p = jnp.exp(s - m)
    denom = jnp.sum(p, axis=-1, keepdims=True) + jnp.exp(-m)

    o = jnp.einsum('bqk,bkd->bqd', p.astype(MXU_DTYPE), v.astype(MXU_DTYPE),
                   preferred_element_type=jnp.float32)                  # (H*nb, S, D)
    o = o / denom

    # Concatenate heads back to (R, E) and apply out_proj as ONE matmul.
    head_slabs = [o[h * nb:(h + 1) * nb].reshape(nb * seq, head_dim)
                  for h in range(num_heads)]
    cat = jnp.concatenate(head_slabs, axis=-1)                          # (R, E)
    return jnp.dot(cat.astype(MXU_DTYPE), wo.astype(MXU_DTYPE),
                   preferred_element_type=jnp.float32) + bo


# --------------------------------------------------------------------------
# Kernel 1: temporal attention + residual + norm1
# --------------------------------------------------------------------------
def _time_attn_ln_kernel(x_ref, kp_ref, am_ref, wqkv_ref, bqkv_ref, wo_ref, bo_ref,
                         g_ref, b_ref, o_ref, *, nb, seq, num_heads, head_dim):
    x = x_ref[...]                                                      # (nb*seq, E)
    attn = _mha_block(x, kp_ref[...], am_ref[...], wqkv_ref[...], bqkv_ref[...],
                      wo_ref[...], bo_ref[...],
                      nb=nb, seq=seq, num_heads=num_heads, head_dim=head_dim)
    o_ref[...] = _add_layernorm(x, attn, g_ref[...], b_ref[...]).astype(o_ref.dtype)


# --------------------------------------------------------------------------
# Kernel 2: person attention + residual + norm  +  FFN + residual + norm2
# --------------------------------------------------------------------------
def _person_attn_ffn_kernel(x_ref, kp_ref, wqkv_ref, bqkv_ref, wo_ref, bo_ref,
                            gp_ref, bp_ref, w1_ref, b1_ref, w2_ref, b2_ref,
                            g2_ref, be2_ref, o_ref, *, nb, seq, num_heads, head_dim):
    x = x_ref[...]                                                      # (nb*seq, E)
    attn = _mha_block(x, kp_ref[...], None, wqkv_ref[...], bqkv_ref[...],
                      wo_ref[...], bo_ref[...],
                      nb=nb, seq=seq, num_heads=num_heads, head_dim=head_dim)
    y = _add_layernorm(x, attn, gp_ref[...], bp_ref[...])               # after person norm

    h = jnp.dot(y.astype(MXU_DTYPE), w1_ref[...].astype(MXU_DTYPE),
                preferred_element_type=jnp.float32) + b1_ref[...]
    h = jnp.maximum(h, 0.0)
    ff = jnp.dot(h.astype(MXU_DTYPE), w2_ref[...].astype(MXU_DTYPE),
                 preferred_element_type=jnp.float32) + b2_ref[...]
    o_ref[...] = _add_layernorm(y, ff, g2_ref[...], be2_ref[...]).astype(o_ref.dtype)


# --------------------------------------------------------------------------
# pallas_call wrappers
# --------------------------------------------------------------------------
def _const2(i):
    return (0, 0)


def time_attention_norm(x2d, kp_bias, attn_bias, attn_params, gamma, beta,
                        *, num_heads, n_cols, seq, emb):
    nb = _pick_nb(n_cols)
    wqkv, bqkv, wo, bo = attn_params
    kernel = functools.partial(_time_attn_ln_kernel, nb=nb, seq=seq,
                               num_heads=num_heads, head_dim=emb // num_heads)
    r = nb * seq
    return pl.pallas_call(
        kernel,
        out_shape=jax.ShapeDtypeStruct((n_cols * seq, emb), jnp.float32),
        grid=(n_cols // nb,),
        in_specs=[
            pl.BlockSpec((r, emb), lambda i: (i, 0)),      # x (rows)
            pl.BlockSpec((nb, seq), lambda i: (i, 0)),     # key-padding bias
            pl.BlockSpec((seq, seq), _const2),             # causal mask bias
            pl.BlockSpec((emb, 3 * emb), _const2),         # fused Wqkv
            pl.BlockSpec((1, 3 * emb), _const2),           # fused bqkv
            pl.BlockSpec((emb, emb), _const2),             # Wo
            pl.BlockSpec((1, emb), _const2),               # bo
            pl.BlockSpec((1, emb), _const2),               # gamma1
            pl.BlockSpec((1, emb), _const2),               # beta1
        ],
        out_specs=pl.BlockSpec((r, emb), lambda i: (i, 0)),
        compiler_params=pltpu.CompilerParams(dimension_semantics=("parallel",)),
    )(x2d, kp_bias, attn_bias, wqkv, bqkv, wo, bo, gamma, beta)


def person_attention_ffn_norm(x2d, kp_bias, attn_params, gamma_p, beta_p,
                              w1, b1, w2, b2, gamma2, beta2,
                              *, num_heads, n_cols, seq, emb, hidden):
    nb = _pick_nb(n_cols)
    wqkv, bqkv, wo, bo = attn_params
    kernel = functools.partial(_person_attn_ffn_kernel, nb=nb, seq=seq,
                               num_heads=num_heads, head_dim=emb // num_heads)
    r = nb * seq
    return pl.pallas_call(
        kernel,
        out_shape=jax.ShapeDtypeStruct((n_cols * seq, emb), jnp.float32),
        grid=(n_cols // nb,),
        in_specs=[
            pl.BlockSpec((r, emb), lambda i: (i, 0)),      # x (rows)
            pl.BlockSpec((nb, seq), lambda i: (i, 0)),     # key-padding bias
            pl.BlockSpec((emb, 3 * emb), _const2),         # fused Wqkv
            pl.BlockSpec((1, 3 * emb), _const2),           # fused bqkv
            pl.BlockSpec((emb, emb), _const2),             # Wo
            pl.BlockSpec((1, emb), _const2),               # bo
            pl.BlockSpec((1, emb), _const2),               # gamma (person norm)
            pl.BlockSpec((1, emb), _const2),               # beta  (person norm)
            pl.BlockSpec((emb, hidden), _const2),          # W1
            pl.BlockSpec((1, hidden), _const2),            # b1
            pl.BlockSpec((hidden, emb), _const2),          # W2
            pl.BlockSpec((1, emb), _const2),               # b2
            pl.BlockSpec((1, emb), _const2),               # gamma2
            pl.BlockSpec((1, emb), _const2),               # beta2
        ],
        out_specs=pl.BlockSpec((r, emb), lambda i: (i, 0)),
        compiler_params=pltpu.CompilerParams(dimension_semantics=("parallel",)),
    )(x2d, kp_bias, wqkv, bqkv, wo, bo, gamma_p, beta_p,
      w1, b1, w2, b2, gamma2, beta2)


# --------------------------------------------------------------------------
# Parameter packing / initialisation
# --------------------------------------------------------------------------
def _mha_param_pack(in_w, in_b, out_w, out_b):
    """in_w: (3E, E) rows [q; k; v] -> fused (E, 3E) weight + (1, 3E) bias."""
    return (in_w.T, in_b[None, :], out_w.T, out_b[None, :])


def init_params(key, embedding_dim, hidden_dim):
    f = embedding_dim
    ks = jax.random.split(key, 9)

    def lin(k, out_dim, in_dim):
        kw, kb = jax.random.split(k)
        w = jax.random.normal(kw, (out_dim, in_dim), jnp.float32) * 0.1
        b = jax.random.normal(kb, (out_dim,), jnp.float32) * 0.1
        return w, b

    def lnorm(k):
        kg, kb = jax.random.split(k)
        g = 1.0 + 0.1 * jax.random.normal(kg, (f,), jnp.float32)
        b = 0.1 * jax.random.normal(kb, (f,), jnp.float32)
        return g[None, :], b[None, :]

    in_w_t, in_b_t = lin(ks[0], 3 * f, f)       # time_attn in_proj
    out_w_t, out_b_t = lin(ks[1], f, f)         # time_attn out_proj
    in_w_p, in_b_p = lin(ks[2], 3 * f, f)       # person_attn in_proj
    out_w_p, out_b_p = lin(ks[3], f, f)         # person_attn out_proj
    w1, b1 = lin(ks[4], hidden_dim, f)          # linear1
    w2, b2 = lin(ks[5], f, hidden_dim)          # linear2
    g1, be1 = lnorm(ks[6])                      # norm1
    gp, bep = lnorm(ks[7])                      # PersonAttention.norm
    g2, be2 = lnorm(ks[8])                      # norm2

    return dict(
        time_attn=_mha_param_pack(in_w_t, in_b_t, out_w_t, out_b_t),
        time_heads=4,
        person_attn=_mha_param_pack(in_w_p, in_b_p, out_w_p, out_b_p),
        person_heads=2,
        w1_t=w1.T, b1=b1[None, :], w2_t=w2.T, b2=b2[None, :],
        gamma1=g1, beta1=be1,
        gamma_person=gp, beta_person=bep,
        gamma2=g2, beta2=be2,
    )


# --------------------------------------------------------------------------
# Full forward pass
# --------------------------------------------------------------------------
def custom_attention_layer(src, padding_mask, temp_mask, params):
    """src: (t, b, p, f) fp32; padding_mask: (t, b, p) bool (True = masked);
    temp_mask: (t, t) bool (True = masked)."""
    t, b, p, f = src.shape

    # Pad time / people axes to sublane multiples; padded tokens are fully masked
    # (zero-attn keeps them finite) and are sliced off at the end.
    t_pad = _round_up(t, 8)
    p_pad = _round_up(p, 8)
    if (t_pad, p_pad) != (t, p):
        src = jnp.pad(src, ((0, t_pad - t), (0, 0), (0, p_pad - p), (0, 0)))
        padding_mask = jnp.pad(padding_mask,
                               ((0, t_pad - t), (0, 0), (0, p_pad - p)),
                               constant_values=True)
        temp_mask = jnp.pad(temp_mask, ((0, t_pad - t), (0, t_pad - t)),
                            constant_values=True)

    # ---- temporal attention + residual + norm1 (batch-major, one transpose each way) ----
    n1 = b * p_pad
    x_t = jnp.transpose(src.reshape(t_pad, n1, f), (1, 0, 2))            # (n1, t, f)
    kp_t = jnp.where(jnp.transpose(padding_mask.reshape(t_pad, n1)),
                     NEG_INF, 0.0).astype(jnp.float32)                   # (n1, t)
    am_t = jnp.where(temp_mask, NEG_INF, 0.0).astype(jnp.float32)        # (t, t)
    y1 = time_attention_norm(
        x_t.reshape(n1 * t_pad, f), kp_t, am_t,
        params["time_attn"], params["gamma1"], params["beta1"],
        num_heads=params["time_heads"], n_cols=n1, seq=t_pad, emb=f)
    src1 = jnp.transpose(y1.reshape(n1, t_pad, f), (1, 0, 2)).reshape(t_pad, b, p_pad, f)

    # ---- person attention + norm + FFN + norm2 (natural layout: free reshapes only) ----
    n2 = t_pad * b
    hidden = params["w1_t"].shape[-1]
    kp_p = jnp.where(padding_mask.reshape(n2, p_pad),
                     NEG_INF, 0.0).astype(jnp.float32)                   # (n2, p_pad)
    y2 = person_attention_ffn_norm(
        src1.reshape(n2 * p_pad, f), kp_p,
        params["person_attn"], params["gamma_person"], params["beta_person"],
        params["w1_t"], params["b1"], params["w2_t"], params["b2"],
        params["gamma2"], params["beta2"],
        num_heads=params["person_heads"], n_cols=n2, seq=p_pad, emb=f, hidden=hidden)

    return y2.reshape(t_pad, b, p_pad, f)[:t, :, :p, :]


if __name__ == "__main__":
    key = jax.random.PRNGKey(0)
    t, b, p, f, hidden = 8, 2, 4, 32, 64          # seq_len, batch, people, embed, hidden
    k_src, k_pad, k_par = jax.random.split(key, 3)

    src = jax.random.normal(k_src, (t, b, p, f), jnp.float32)
    padding_mask = jax.random.bernoulli(k_pad, 0.2, (t, b, p))           # True = masked
    temp_mask = jnp.arange(t)[None, :] > jnp.arange(t)[:, None]          # causal: mask future

    params = init_params(k_par, f, hidden)
    out = custom_attention_layer(src, padding_mask, temp_mask, params)
    jax.block_until_ready(out)
    assert out.shape == (t, b, p, f)
    assert bool(jnp.all(jnp.isfinite(out)))
    print("KERNEL_OK")
</pallas_src>

<mosaic_0001>
module attributes {stable_mosaic.version = 11 : i64} {
  func.func @_time_attn_ln_kernel(%arg0: i32, %arg1: memref<64x32xf32, #tpu.memory_space<vmem>>, %arg2: memref<8x8xf32, #tpu.memory_space<vmem>>, %arg3: memref<8x8xf32, #tpu.memory_space<vmem>>, %arg4: memref<32x96xf32, #tpu.memory_space<vmem>>, %arg5: memref<1x96xf32, #tpu.memory_space<vmem>>, %arg6: memref<32x32xf32, #tpu.memory_space<vmem>>, %arg7: memref<1x32xf32, #tpu.memory_space<vmem>>, %arg8: memref<1x32xf32, #tpu.memory_space<vmem>>, %arg9: memref<1x32xf32, #tpu.memory_space<vmem>>, %arg10: memref<64x32xf32, #tpu.memory_space<vmem>>) attributes {dimension_semantics = [#tpu.dimension_semantics<parallel>], iteration_bounds = array<i64: 2>, scalar_prefetch = 0 : i64, scratch_operands = 0 : i64, tpu.core_type = #tpu.core_type<tc>, window_params = [{transform_indices = @transform_0, window_bounds = array<i64: 64, 32>}, {transform_indices = @transform_1, window_bounds = array<i64: 8, 8>}, {pipeline_mode = #tpu.pipeline_mode<synchronous>, transform_indices = @transform_2, window_bounds = array<i64: 8, 8>}, {pipeline_mode = #tpu.pipeline_mode<synchronous>, transform_indices = @transform_3, window_bounds = array<i64: 32, 96>}, {pipeline_mode = #tpu.pipeline_mode<synchronous>, transform_indices = @transform_4, window_bounds = array<i64: 1, 96>}, {pipeline_mode = #tpu.pipeline_mode<synchronous>, transform_indices = @transform_5, window_bounds = array<i64: 32, 32>}, {pipeline_mode = #tpu.pipeline_mode<synchronous>, transform_indices = @transform_6, window_bounds = array<i64: 1, 32>}, {pipeline_mode = #tpu.pipeline_mode<synchronous>, transform_indices = @transform_7, window_bounds = array<i64: 1, 32>}, {pipeline_mode = #tpu.pipeline_mode<synchronous>, transform_indices = @transform_8, window_bounds = array<i64: 1, 32>}, {transform_indices = @transform_9, window_bounds = array<i64: 64, 32>}]} {
    %c0 = arith.constant 0 : index
    %c0_0 = arith.constant 0 : index
    %0 = vector.load %arg1[%c0, %c0_0] : memref<64x32xf32, #tpu.memory_space<vmem>>, vector<64x32xf32>
    %c0_1 = arith.constant 0 : index
    %c0_2 = arith.constant 0 : index
    %1 = vector.load %arg2[%c0_1, %c0_2] : memref<8x8xf32, #tpu.memory_space<vmem>>, vector<8x8xf32>
    %c0_3 = arith.constant 0 : index
    %c0_4 = arith.constant 0 : index
    %2 = vector.load %arg3[%c0_3, %c0_4] : memref<8x8xf32, #tpu.memory_space<vmem>>, vector<8x8xf32>
    %c0_5 = arith.constant 0 : index
    %c0_6 = arith.constant 0 : index
    %3 = vector.load %arg4[%c0_5, %c0_6] : memref<32x96xf32, #tpu.memory_space<vmem>>, vector<32x96xf32>
    %c0_7 = arith.constant 0 : index
    %c0_8 = arith.constant 0 : index
    %4 = vector.load %arg5[%c0_7, %c0_8] : memref<1x96xf32, #tpu.memory_space<vmem>>, vector<1x96xf32>
    %c0_9 = arith.constant 0 : index
    %c0_10 = arith.constant 0 : index
    %5 = vector.load %arg6[%c0_9, %c0_10] : memref<32x32xf32, #tpu.memory_space<vmem>>, vector<32x32xf32>
    %c0_11 = arith.constant 0 : index
    %c0_12 = arith.constant 0 : index
    %6 = vector.load %arg7[%c0_11, %c0_12] : memref<1x32xf32, #tpu.memory_space<vmem>>, vector<1x32xf32>
    %7 = arith.truncf %0 : vector<64x32xf32> to vector<64x32xbf16>
    %8 = arith.truncf %3 : vector<32x96xf32> to vector<32x96xbf16>
    %cst = arith.constant dense<0.000000e+00> : vector<64x96xf32>
    %9 = tpu.matmul %7, %8, %cst {dimension_numbers = #tpu.dot_dimension_numbers<[1], [0], [0], [1], [0, 0, 1, 1], [], []>} : vector<64x32xbf16>, vector<32x96xbf16>, vector<64x96xf32> -> vector<64x96xf32>
    %10 = vector.broadcast %4 : vector<1x96xf32> to vector<64x96xf32>
    %11 = arith.addf %9, %10 : vector<64x96xf32>
    %12 = vector.extract_strided_slice %11 {offsets = [0, 0], sizes = [64, 8], strides = [1, 1]} : vector<64x96xf32> to vector<64x8xf32>
    %13 = vector.shape_cast %12 : vector<64x8xf32> to vector<8x8x8xf32>
    %14 = vector.extract_strided_slice %11 {offsets = [0, 8], sizes = [64, 8], strides = [1, 1]} : vector<64x96xf32> to vector<64x8xf32>
    %15 = vector.shape_cast %14 : vector<64x8xf32> to vector<8x8x8xf32>
    %16 = vector.extract_strided_slice %11 {offsets = [0, 16], sizes = [64, 8], strides = [1, 1]} : vector<64x96xf32> to vector<64x8xf32>
    %17 = vector.shape_cast %16 : vector<64x8xf32> to vector<8x8x8xf32>
    %18 = vector.extract_strided_slice %11 {offsets = [0, 24], sizes = [64, 8], strides = [1, 1]} : vector<64x96xf32> to vector<64x8xf32>
    %19 = vector.shape_cast %18 : vector<64x8xf32> to vector<8x8x8xf32>
    %20 = tpu.concatenate %13, %15, %17, %19 in 0 : vector<8x8x8xf32>, vector<8x8x8xf32>, vector<8x8x8xf32>, vector<8x8x8xf32> -> vector<32x8x8xf32>
    %cst_13 = arith.constant 0.353553385 : f32
    %21 = vector.broadcast %cst_13 : f32 to vector<32x8x8xf32>
    %22 = arith.mulf %20, %21 : vector<32x8x8xf32>
    %23 = vector.extract_strided_slice %11 {offsets = [0, 32], sizes = [64, 8], strides = [1, 1]} : vector<64x96xf32> to vector<64x8xf32>
    %24 = vector.shape_cast %23 : vector<64x8xf32> to vector<8x8x8xf32>
    %25 = vector.extract_strided_slice %11 {offsets = [0, 40], sizes = [64, 8], strides = [1, 1]} : vector<64x96xf32> to vector<64x8xf32>
    %26 = vector.shape_cast %25 : vector<64x8xf32> to vector<8x8x8xf32>
    %27 = vector.extract_strided_slice %11 {offsets = [0, 48], sizes = [64, 8], strides = [1, 1]} : vector<64x96xf32> to vector<64x8xf32>
    %28 = vector.shape_cast %27 : vector<64x8xf32> to vector<8x8x8xf32>
    %29 = vector.extract_strided_slice %11 {offsets = [0, 56], sizes = [64, 8], strides = [1, 1]} : vector<64x96xf32> to vector<64x8xf32>
    %30 = vector.shape_cast %29 : vector<64x8xf32> to vector<8x8x8xf32>
    %31 = tpu.concatenate %24, %26, %28, %30 in 0 : vector<8x8x8xf32>, vector<8x8x8xf32>, vector<8x8x8xf32>, vector<8x8x8xf32> -> vector<32x8x8xf32>
    %32 = vector.extract_strided_slice %11 {offsets = [0, 64], sizes = [64, 8], strides = [1, 1]} : vector<64x96xf32> to vector<64x8xf32>
    %33 = vector.shape_cast %32 : vector<64x8xf32> to vector<8x8x8xf32>
    %34 = vector.extract_strided_slice %11 {offsets = [0, 72], sizes = [64, 8], strides = [1, 1]} : vector<64x96xf32> to vector<64x8xf32>
    %35 = vector.shape_cast %34 : vector<64x8xf32> to vector<8x8x8xf32>
    %36 = vector.extract_strided_slice %11 {offsets = [0, 80], sizes = [64, 8], strides = [1, 1]} : vector<64x96xf32> to vector<64x8xf32>
    %37 = vector.shape_cast %36 : vector<64x8xf32> to vector<8x8x8xf32>
    %38 = vector.extract_strided_slice %11 {offsets = [0, 88], sizes = [64, 8], strides = [1, 1]} : vector<64x96xf32> to vector<64x8xf32>
    %39 = vector.shape_cast %38 : vector<64x8xf32> to vector<8x8x8xf32>
    %40 = tpu.concatenate %33, %35, %37, %39 in 0 : vector<8x8x8xf32>, vector<8x8x8xf32>, vector<8x8x8xf32>, vector<8x8x8xf32> -> vector<32x8x8xf32>
    %41 = arith.truncf %22 : vector<32x8x8xf32> to vector<32x8x8xbf16>
    %42 = arith.truncf %31 : vector<32x8x8xf32> to vector<32x8x8xbf16>
    "tpu.trace_start"() <{level = 10 : i32, message = "bqd,bkd->bqk"}> : () -> ()
    %cst_14 = arith.constant dense<0.000000e+00> : vector<32x8x8xf32>
    %43 = tpu.matmul %41, %42, %cst_14 {dimension_numbers = #tpu.dot_dimension_numbers<[2], [2], [1], [1], [0, 0, 0, 1, 1, 1], [0], [0]>} : vector<32x8x8xbf16>, vector<32x8x8xbf16>, vector<32x8x8xf32> -> vector<32x8x8xf32>
    "tpu.trace_stop"() : () -> ()
    %44 = vector.shape_cast %1 : vector<8x8xf32> to vector<1x8x8xf32>
    %45 = vector.shape_cast %44 : vector<1x8x8xf32> to vector<1x8x8xf32>
    %46 = vector.broadcast %45 : vector<1x8x8xf32> to vector<4x8x8xf32>
    %47 = vector.shape_cast %46 : vector<4x8x8xf32> to vector<32x8xf32>
    %48 = vector.shape_cast %47 : vector<32x8xf32> to vector<32x1x8xf32>
    %49 = vector.broadcast %48 : vector<32x1x8xf32> to vector<32x8x8xf32>
    %50 = arith.addf %43, %49 : vector<32x8x8xf32>
    %51 = vector.shape_cast %2 : vector<8x8xf32> to vector<1x8x8xf32>
    %52 = vector.broadcast %51 : vector<1x8x8xf32> to vector<32x8x8xf32>
    %53 = arith.addf %50, %52 : vector<32x8x8xf32>
    %cst_15 = arith.constant dense<0xFF800000> : vector<32x8xf32>
    %54 = vector.multi_reduction <maximumf>, %53, %cst_15 [2] : vector<32x8x8xf32> to vector<32x8xf32>
    %55 = vector.shape_cast %54 : vector<32x8xf32> to vector<32x8x1xf32>
    %cst_16 = arith.constant 0.000000e+00 : f32
    %56 = vector.broadcast %cst_16 : f32 to vector<32x8x1xf32>
    %57 = arith.maximumf %55, %56 : vector<32x8x1xf32>
    %58 = vector.broadcast %57 : vector<32x8x1xf32> to vector<32x8x8xf32>
    %59 = arith.subf %53, %58 : vector<32x8x8xf32>
    %60 = math.exp %59 : vector<32x8x8xf32>
    %cst_17 = arith.constant dense<0.000000e+00> : vector<32x8xf32>
    %61 = vector.multi_reduction <add>, %60, %cst_17 [2] : vector<32x8x8xf32> to vector<32x8xf32>
    %62 = vector.shape_cast %61 : vector<32x8xf32> to vector<32x8x1xf32>
    %cst_18 = arith.constant 0.000000e+00 : f32
    %63 = vector.broadcast %cst_18 : f32 to vector<32x8x1xf32>
    %64 = arith.subf %63, %57 : vector<32x8x1xf32>
    %65 = math.exp %64 : vector<32x8x1xf32>
    %66 = arith.addf %62, %65 : vector<32x8x1xf32>
    %67 = arith.truncf %60 : vector<32x8x8xf32> to vector<32x8x8xbf16>
    %68 = arith.truncf %40 : vector<32x8x8xf32> to vector<32x8x8xbf16>
    "tpu.trace_start"() <{level = 10 : i32, message = "bqk,bkd->bqd"}> : () -> ()
    %cst_19 = arith.constant dense<0.000000e+00> : vector<32x8x8xf32>
    %69 = tpu.matmul %67, %68, %cst_19 {dimension_numbers = #tpu.dot_dimension_numbers<[2], [1], [1], [2], [0, 0, 0, 1, 1, 2], [0], [0]>} : vector<32x8x8xbf16>, vector<32x8x8xbf16>, vector<32x8x8xf32> -> vector<32x8x8xf32>
    "tpu.trace_stop"() : () -> ()
    %70 = vector.broadcast %66 : vector<32x8x1xf32> to vector<32x8x8xf32>
    %71 = arith.divf %69, %70 : vector<32x8x8xf32>
    %72 = vector.extract_strided_slice %71 {offsets = [0, 0, 0], sizes = [8, 8, 8], strides = [1, 1, 1]} : vector<32x8x8xf32> to vector<8x8x8xf32>
    %73 = vector.shape_cast %72 : vector<8x8x8xf32> to vector<64x8xf32>
    %74 = vector.extract_strided_slice %71 {offsets = [8, 0, 0], sizes = [8, 8, 8], strides = [1, 1, 1]} : vector<32x8x8xf32> to vector<8x8x8xf32>
    %75 = vector.shape_cast %74 : vector<8x8x8xf32> to vector<64x8xf32>
    %76 = vector.extract_strided_slice %71 {offsets = [16, 0, 0], sizes = [8, 8, 8], strides = [1, 1, 1]} : vector<32x8x8xf32> to vector<8x8x8xf32>
    %77 = vector.shape_cast %76 : vector<8x8x8xf32> to vector<64x8xf32>
    %78 = vector.extract_strided_slice %71 {offsets = [24, 0, 0], sizes = [8, 8, 8], strides = [1, 1, 1]} : vector<32x8x8xf32> to vector<8x8x8xf32>
    %79 = vector.shape_cast %78 : vector<8x8x8xf32> to vector<64x8xf32>
    %80 = tpu.concatenate %73, %75, %77, %79 in 1 : vector<64x8xf32>, vector<64x8xf32>, vector<64x8xf32>, vector<64x8xf32> -> vector<64x32xf32>
    %81 = arith.truncf %80 : vector<64x32xf32> to vector<64x32xbf16>
    %82 = arith.truncf %5 : vector<32x32xf32> to vector<32x32xbf16>
    %cst_20 = arith.constant dense<0.000000e+00> : vector<64x32xf32>
    %83 = tpu.matmul %81, %82, %cst_20 {dimension_numbers = #tpu.dot_dimension_numbers<[1], [0], [0], [1], [0, 0, 1, 1], [], []>} : vector<64x32xbf16>, vector<32x32xbf16>, vector<64x32xf32> -> vector<64x32xf32>
    %84 = vector.broadcast %6 : vector<1x32xf32> to vector<64x32xf32>
    %85 = arith.addf %83, %84 : vector<64x32xf32>
    %c0_21 = arith.constant 0 : index
    %c0_22 = arith.constant 0 : index
    %86 = vector.load %arg8[%c0_21, %c0_22] : memref<1x32xf32, #tpu.memory_space<vmem>>, vector<1x32xf32>
    %c0_23 = arith.constant 0 : index
    %c0_24 = arith.constant 0 : index
    %87 = vector.load %arg9[%c0_23, %c0_24] : memref<1x32xf32, #tpu.memory_space<vmem>>, vector<1x32xf32>
    %88 = arith.addf %0, %85 : vector<64x32xf32>
    %cst_25 = arith.constant dense<0.000000e+00> : vector<64xf32>
    %89 = vector.multi_reduction <add>, %88, %cst_25 [1] : vector<64x32xf32> to vector<64xf32>
    %90 = vector.shape_cast %89 : vector<64xf32> to vector<64x1xf32>
    %cst_26 = arith.constant 3.200000e+01 : f32
    %91 = vector.broadcast %cst_26 : f32 to vector<64x1xf32>
    %92 = arith.divf %90, %91 : vector<64x1xf32>
    %93 = vector.broadcast %92 : vector<64x1xf32> to vector<64x32xf32>
    %94 = arith.subf %88, %93 : vector<64x32xf32>
    %95 = arith.mulf %94, %94 : vector<64x32xf32>
    %cst_27 = arith.constant dense<0.000000e+00> : vector<64xf32>
    %96 = vector.multi_reduction <add>, %95, %cst_27 [1] : vector<64x32xf32> to vector<64xf32>
    %97 = vector.shape_cast %96 : vector<64xf32> to vector<64x1xf32>
    %cst_28 = arith.constant 3.200000e+01 : f32
    %98 = vector.broadcast %cst_28 : f32 to vector<64x1xf32>
    %99 = arith.divf %97, %98 : vector<64x1xf32>
    %100 = vector.broadcast %92 : vector<64x1xf32> to vector<64x32xf32>
    %101 = arith.subf %88, %100 : vector<64x32xf32>
    %cst_29 = arith.constant 9.99999974E-6 : f32
    %102 = vector.broadcast %cst_29 : f32 to vector<64x1xf32>
    %103 = arith.addf %99, %102 : vector<64x1xf32>
    %104 = math.rsqrt %103 : vector<64x1xf32>
    %105 = vector.broadcast %104 : vector<64x1xf32> to vector<64x32xf32>
    %106 = arith.mulf %101, %105 : vector<64x32xf32>
    %107 = vector.broadcast %86 : vector<1x32xf32> to vector<64x32xf32>
    %108 = arith.mulf %106, %107 : vector<64x32xf32>
    %109 = vector.broadcast %87 : vector<1x32xf32> to vector<64x32xf32>
    %110 = arith.addf %108, %109 : vector<64x32xf32>
    %c0_30 = arith.constant 0 : index
    %c0_31 = arith.constant 0 : index
    %111 = vector.load %arg10[%c0_30, %c0_31] : memref<64x32xf32, #tpu.memory_space<vmem>>, vector<64x32xf32>
    tpu.vector_store %arg10[%c0_30, %c0_31], %110 {strides = array<i32>} : memref<64x32xf32, #tpu.memory_space<vmem>>, vector<64x32xf32>,
    return
  }
  func.func @transform_0(%arg0: i32) -> (i32, i32) {
    %c0_i32 = arith.constant 0 : i32
    %c0_i32_0 = arith.constant 0 : i32
    return %arg0, %c0_i32 : i32, i32
  }
  func.func @transform_1(%arg0: i32) -> (i32, i32) {
    %c0_i32 = arith.constant 0 : i32
    %c0_i32_0 = arith.constant 0 : i32
    return %arg0, %c0_i32 : i32, i32
  }
  func.func @transform_2(%arg0: i32) -> (i32, i32) {
    %c0_i32 = arith.constant 0 : i32
    %c0_i32_0 = arith.constant 0 : i32
    %c0_i32_1 = arith.constant 0 : i32
    return %c0_i32, %c0_i32_0 : i32, i32
  }
  func.func @transform_3(%arg0: i32) -> (i32, i32) {
    %c0_i32 = arith.constant 0 : i32
    %c0_i32_0 = arith.constant 0 : i32
    %c0_i32_1 = arith.constant 0 : i32
    return %c0_i32, %c0_i32_0 : i32, i32
  }
  func.func @transform_4(%arg0: i32) -> (i32, i32) {
    %c0_i32 = arith.constant 0 : i32
    %c0_i32_0 = arith.constant 0 : i32
    %c0_i32_1 = arith.constant 0 : i32
    return %c0_i32, %c0_i32_0 : i32, i32
  }
  func.func @transform_5(%arg0: i32) -> (i32, i32) {
    %c0_i32 = arith.constant 0 : i32
    %c0_i32_0 = arith.constant 0 : i32
    %c0_i32_1 = arith.constant 0 : i32
    return %c0_i32, %c0_i32_0 : i32, i32
  }
  func.func @transform_6(%arg0: i32) -> (i32, i32) {
    %c0_i32 = arith.constant 0 : i32
    %c0_i32_0 = arith.constant 0 : i32
    %c0_i32_1 = arith.constant 0 : i32
    return %c0_i32, %c0_i32_0 : i32, i32
  }
  func.func @transform_7(%arg0: i32) -> (i32, i32) {
    %c0_i32 = arith.constant 0 : i32
    %c0_i32_0 = arith.constant 0 : i32
    %c0_i32_1 = arith.constant 0 : i32
    return %c0_i32, %c0_i32_0 : i32, i32
  }
  func.func @transform_8(%arg0: i32) -> (i32, i32) {
    %c0_i32 = arith.constant 0 : i32
    %c0_i32_0 = arith.constant 0 : i32
    %c0_i32_1 = arith.constant 0 : i32
    return %c0_i32, %c0_i32_0 : i32, i32
  }
  func.func @transform_9(%arg0: i32) -> (i32, i32) {
    %c0_i32 = arith.constant 0 : i32
    %c0_i32_0 = arith.constant 0 : i32
    return %arg0, %c0_i32 : i32, i32
  }
}

</mosaic_0001>

<llo_original>
// kernel: tpu_custom_call.1
$region0: #{tpu_custom_call.1}
  #allocation0 [shape = 'u32[]', space=smem, size = 0x4, offset = 0x4, fixed_abs, tag = 'smem constant byte address 0x4 - core index']
  #allocation1 [shape = 'u32[144,128]{1,0:T(1,128)}', space=vmem, size = 0x12000, scoped, tag = 'internal scratch']
  %s0 = inlined_call_operand.vmem [shape: f32[128,32], index: 0, kind: input, shape index: {}]
  %s1 = inlined_call_operand.vmem [shape: f32[16,8], index: 1, kind: input, shape index: {}]
  %s2 = inlined_call_operand.vmem [shape: f32[8,8], index: 2, kind: input, shape index: {}]
  %s3 = inlined_call_operand.vmem [shape: f32[32,96], index: 3, kind: input, shape index: {}]
  %s4 = inlined_call_operand.vmem [shape: f32[1,96], index: 4, kind: input, shape index: {}]
  %s5 = inlined_call_operand.vmem [shape: f32[32,32], index: 5, kind: input, shape index: {}]
  %s6 = inlined_call_operand.vmem [shape: f32[1,32], index: 6, kind: input, shape index: {}]
  %s7 = inlined_call_operand.vmem [shape: f32[1,32], index: 7, kind: input, shape index: {}]
  %s8 = inlined_call_operand.vmem [shape: f32[1,32], index: 8, kind: input, shape index: {}]
  %s9 = inlined_call_operand.vmem [shape: f32[128,32], index: 9, kind: output, shape index: {}]
  %s10 = sld [smem:[#allocation0]]
  $region69: #{tpu_custom_call.1} parent=0
    _
  %s12 = ssub.s32 1, %s10
  %s13 = scalar_select 0, %s12, %s10
  loop: start=0, step=1, limit=4
  $region2: #{tpu_custom_call.1} parent=0 // loop_pre_header
    _
  $region3: #{tpu_custom_call.1} parent=0 // loop_header
    %s15 = sphi 0, %s19
    %p16 = scmp.ge.s32.totalorder %s15, 4
    %s25 = sphi 0, %s27
    %s28 = sphi 0, %s25
    %s29 = sphi 0, %s28
    %s45 = sphi 0, %s29
    %s51 = sphi 0, %s53
    %s54 = sphi 0, %s51
    %s55 = sphi 0, %s54
    %s71 = sphi 0, %s55
    %s75 = sphi 0, %s75
    %s77 = sphi 0, %s75
    %s78 = sphi 0, %s77
    %s92 = sphi 0, %s78
    %s96 = sphi 0, %s96
    %s98 = sphi 0, %s96
    %s99 = sphi 0, %s98
    %s113 = sphi 0, %s99
    %s117 = sphi 0, %s117
    %s119 = sphi 0, %s117
    %s120 = sphi 0, %s119
    %s134 = sphi 0, %s120
    %s138 = sphi 0, %s138
    %s140 = sphi 0, %s138
    %s141 = sphi 0, %s140
    %s155 = sphi 0, %s141
    %s159 = sphi 0, %s159
    %s161 = sphi 0, %s159
    %s162 = sphi 0, %s161
    %s176 = sphi 0, %s162
    %s180 = sphi 0, %s180
    %s182 = sphi 0, %s180
    %s183 = sphi 0, %s182
    %s197 = sphi 0, %s183
    %s201 = sphi 0, %s201
    %s203 = sphi 0, %s201
    %s204 = sphi 0, %s203
    %s218 = sphi 0, %s204
    %s224 = sphi 0, %s226
    %s227 = sphi 0, %s224
    %s228 = sphi 0, %s227
    %s244 = sphi 0, %s228
  $region4: #{tpu_custom_call.1} parent=0 // loop_header_branch
    %18 = sbr.rel (%p16) target = $region8
  $region5: #{tpu_custom_call.1} parent=0 // loop_body
    %s20 = ssub.s32 %s15, 1
    %s21 = ssub.s32 %s15, 2
    %s22 = sadd.s32 %s15, 1
    %s23 = ssub.s32 %s15, %s22
    %p24 = scmp.eq.s32.totalorder %s23, 0
    %s26 = sadd.s32 %s25, 1
    %s27 = scalar_select %p24, %s25, %s26
    %p30 = pneg %p24
    %p31 = scmp.eq.s32.totalorder %s15, 1
    %p32 = por %p30, %p31
    %p33 = scmp.ne.s32.totalorder %s25, %s28
    %p34 = scmp.eq.s32.totalorder %s15, 0
    %p35 = por %p33, %p34
    %p36 = scmp.ne.s32.totalorder %s25, %s28
    %p37 = scmp.eq.s32.totalorder %s20, 1
    %p38 = por %p36, %p37
    %p39 = scmp.ne.s32.totalorder %s28, %s29
    %p40 = scmp.eq.s32.totalorder %s20, 0
    %p41 = por %p39, %p40
    %p42 = scmp.ne.s32.totalorder %s28, %s29
    %p43 = scmp.eq.s32.totalorder %s21, 1
    %p44 = por %p42, %p43
    %p46 = scmp.ne.s32.totalorder %s29, %s45
    %p47 = scmp.eq.s32.totalorder %s21, 0
    %p48 = por %p46, %p47
    %s49 = ssub.s32 %s15, %s22
    %p50 = scmp.eq.s32.totalorder %s49, 0
    %s52 = sadd.s32 %s51, 1
    %s53 = scalar_select %p50, %s51, %s52
    %p56 = pneg %p50
    %p57 = scmp.eq.s32.totalorder %s15, 1
    %p58 = por %p56, %p57
    %p59 = scmp.ne.s32.totalorder %s51, %s54
    %p60 = scmp.eq.s32.totalorder %s15, 0
    %p61 = por %p59, %p60
    %p62 = scmp.ne.s32.totalorder %s51, %s54
    %p63 = scmp.eq.s32.totalorder %s20, 1
    %p64 = por %p62, %p63
    %p65 = scmp.ne.s32.totalorder %s54, %s55
    %p66 = scmp.eq.s32.totalorder %s20, 0
    %p67 = por %p65, %p66
    %p68 = scmp.ne.s32.totalorder %s54, %s55
    %p69 = scmp.eq.s32.totalorder %s21, 1
    %p70 = por %p68, %p69
    %p72 = scmp.ne.s32.totalorder %s55, %s71
    %p73 = scmp.eq.s32.totalorder %s21, 0
    %p74 = por %p72, %p73
    %s76 = sadd.s32 %s75, 1
    %p79 = scmp.eq.s32.totalorder %s15, 1
    %p80 = scmp.ne.s32.totalorder %s75, %s77
    %p81 = scmp.eq.s32.totalorder %s15, 0
    %p82 = por %p80, %p81
    %p83 = scmp.ne.s32.totalorder %s75, %s77
    %p84 = scmp.eq.s32.totalorder %s20, 1
    %p85 = por %p83, %p84
    %p86 = scmp.ne.s32.totalorder %s77, %s78
    %p87 = scmp.eq.s32.totalorder %s20, 0
    %p88 = por %p86, %p87
    %p89 = scmp.ne.s32.totalorder %s77, %s78
    %p90 = scmp.eq.s32.totalorder %s21, 1
    %p91 = por %p89, %p90
    %p93 = scmp.ne.s32.totalorder %s78, %s92
    %p94 = scmp.eq.s32.totalorder %s21, 0
    %p95 = por %p93, %p94
    %s97 = sadd.s32 %s96, 1
    %p100 = scmp.eq.s32.totalorder %s15, 1
    %p101 = scmp.ne.s32.totalorder %s96, %s98
    %p102 = scmp.eq.s32.totalorder %s15, 0
    %p103 = por %p101, %p102
    %p104 = scmp.ne.s32.totalorder %s96, %s98
    %p105 = scmp.eq.s32.totalorder %s20, 1
    %p106 = por %p104, %p105
    %p107 = scmp.ne.s32.totalorder %s98, %s99
    %p108 = scmp.eq.s32.totalorder %s20, 0
    %p109 = por %p107, %p108
    %p110 = scmp.ne.s32.totalorder %s98, %s99
    %p111 = scmp.eq.s32.totalorder %s21, 1
    %p112 = por %p110, %p111
    %p114 = scmp.ne.s32.totalorder %s99, %s113
    %p115 = scmp.eq.s32.totalorder %s21, 0
    %p116 = por %p114, %p115
    %s118 = sadd.s32 %s117, 1
    %p121 = scmp.eq.s32.totalorder %s15, 1
    %p122 = scmp.ne.s32.totalorder %s117, %s119
    %p123 = scmp.eq.s32.totalorder %s15, 0
    %p124 = por %p122, %p123
    %p125 = scmp.ne.s32.totalorder %s117, %s119
    %p126 = scmp.eq.s32.totalorder %s20, 1
    %p127 = por %p125, %p126
    %p128 = scmp.ne.s32.totalorder %s119, %s120
    %p129 = scmp.eq.s32.totalorder %s20, 0
    %p130 = por %p128, %p129
    %p131 = scmp.ne.s32.totalorder %s119, %s120
    %p132 = scmp.eq.s32.totalorder %s21, 1
    %p133 = por %p131, %p132
    %p135 = scmp.ne.s32.totalorder %s120, %s134
    %p136 = scmp.eq.s32.totalorder %s21, 0
    %p137 = por %p135, %p136
    %s139 = sadd.s32 %s138, 1
    %p142 = scmp.eq.s32.totalorder %s15, 1
    %p143 = scmp.ne.s32.totalorder %s138, %s140
    %p144 = scmp.eq.s32.totalorder %s15, 0
    %p145 = por %p143, %p144
    %p146 = scmp.ne.s32.totalorder %s138, %s140
    %p147 = scmp.eq.s32.totalorder %s20, 1
    %p148 = por %p146, %p147
    %p149 = scmp.ne.s32.totalorder %s140, %s141
    %p150 = scmp.eq.s32.totalorder %s20, 0
    %p151 = por %p149, %p150
    %p152 = scmp.ne.s32.totalorder %s140, %s141
    %p153 = scmp.eq.s32.totalorder %s21, 1
    %p154 = por %p152, %p153
    %p156 = scmp.ne.s32.totalorder %s141, %s155
    %p157 = scmp.eq.s32.totalorder %s21, 0
    %p158 = por %p156, %p157
    %s160 = sadd.s32 %s159, 1
    %p163 = scmp.eq.s32.totalorder %s15, 1
    %p164 = scmp.ne.s32.totalorder %s159, %s161
    %p165 = scmp.eq.s32.totalorder %s15, 0
    %p166 = por %p164, %p165
    %p167 = scmp.ne.s32.totalorder %s159, %s161
    %p168 = scmp.eq.s32.totalorder %s20, 1
    %p169 = por %p167, %p168
    %p170 = scmp.ne.s32.totalorder %s161, %s162
    %p171 = scmp.eq.s32.totalorder %s20, 0
    %p172 = por %p170, %p171
    %p173 = scmp.ne.s32.totalorder %s161, %s162
    %p174 = scmp.eq.s32.totalorder %s21, 1
    %p175 = por %p173, %p174
    %p177 = scmp.ne.s32.totalorder %s162, %s176
    %p178 = scmp.eq.s32.totalorder %s21, 0
    %p179 = por %p177, %p178
    %s181 = sadd.s32 %s180, 1
    %p184 = scmp.eq.s32.totalorder %s15, 1
    %p185 = scmp.ne.s32.totalorder %s180, %s182
    %p186 = scmp.eq.s32.totalorder %s15, 0
    %p187 = por %p185, %p186
    %p188 = scmp.ne.s32.totalorder %s180, %s182
    %p189 = scmp.eq.s32.totalorder %s20, 1
    %p190 = por %p188, %p189
    %p191 = scmp.ne.s32.totalorder %s182, %s183
    %p192 = scmp.eq.s32.totalorder %s20, 0
    %p193 = por %p191, %p192
    %p194 = scmp.ne.s32.totalorder %s182, %s183
    %p195 = scmp.eq.s32.totalorder %s21, 1
    %p196 = por %p194, %p195
    %p198 = scmp.ne.s32.totalorder %s183, %s197
    %p199 = scmp.eq.s32.totalorder %s21, 0
    %p200 = por %p198, %p199
    %s202 = sadd.s32 %s201, 1
    %p205 = scmp.eq.s32.totalorder %s15, 1
    %p206 = scmp.ne.s32.totalorder %s201, %s203
    %p207 = scmp.eq.s32.totalorder %s15, 0
    %p208 = por %p206, %p207
    %p209 = scmp.ne.s32.totalorder %s201, %s203
    %p210 = scmp.eq.s32.totalorder %s20, 1
    %p211 = por %p209, %p210
    %p212 = scmp.ne.s32.totalorder %s203, %s204
    %p213 = scmp.eq.s32.totalorder %s20, 0
    %p214 = por %p212, %p213
    %p215 = scmp.ne.s32.totalorder %s203, %s204
    %p216 = scmp.eq.s32.totalorder %s21, 1
    %p217 = por %p215, %p216
    %p219 = scmp.ne.s32.totalorder %s204, %s218
    %p220 = scmp.eq.s32.totalorder %s21, 0
    %p221 = por %p219, %p220
    %s222 = ssub.s32 %s15, %s22
    %p223 = scmp.eq.s32.totalorder %s222, 0
    %s225 = sadd.s32 %s224, 1
    %s226 = scalar_select %p223, %s224, %s225
    %p229 = pneg %p223
    %p230 = scmp.eq.s32.totalorder %s15, 1
    %p231 = por %p229, %p230
    %p232 = scmp.ne.s32.totalorder %s224, %s227
    %p233 = scmp.eq.s32.totalorder %s15, 0
    %p234 = por %p232, %p233
    %p235 = scmp.ne.s32.totalorder %s224, %s227
    %p236 = scmp.eq.s32.totalorder %s20, 1
    %p237 = por %p235, %p236
    %p238 = scmp.ne.s32.totalorder %s227, %s228
    %p239 = scmp.eq.s32.totalorder %s20, 0
    %p240 = por %p238, %p239
    %p241 = scmp.ne.s32.totalorder %s227, %s228
    %p242 = scmp.eq.s32.totalorder %s21, 1
    %p243 = por %p241, %p242
    %p245 = scmp.ne.s32.totalorder %s228, %s244
    %p246 = scmp.eq.s32.totalorder %s21, 0
    %p247 = por %p245, %p246
    %p248 = scmp.le.s32.totalorder 1, %s15
    %p249 = scmp.lt.s32.totalorder %s15, 3
    %p250 = pnand %p248, %p249
    %p251 = pneg %p250
    // Predicated region
    $region9: #{tpu_custom_call.1} parent=5 // pred_check
      _
    $region10: #{tpu_custom_call.1} parent=5 // pred_check_branch
      %253 = sbr.rel (%p250) target = $region12
    $region11: #{tpu_custom_call.1} parent=5 // pred_region
      %s254 = ssub.s32 %s15, 1
      // Predicated region
      $region13: #{tpu_custom_call.1} parent=11 // pred_check
        %p255 = pneg %p88
      $region14: #{tpu_custom_call.1} parent=11 // pred_check_branch
        %257 = sbr.rel (%p255) target = $region16
      $region15: #{tpu_custom_call.1} parent=11 // pred_region
        _
      $region16: #{tpu_custom_call.1} parent=11 // pred_fallthru
        _
      // Predicated region
      $region17: #{tpu_custom_call.1} parent=11 // pred_check
        %p258 = pneg %p109
      $region18: #{tpu_custom_call.1} parent=11 // pred_check_branch
        %260 = sbr.rel (%p258) target = $region20
      $region19: #{tpu_custom_call.1} parent=11 // pred_region
        _
      $region20: #{tpu_custom_call.1} parent=11 // pred_fallthru
        _
      // Predicated region
      $region21: #{tpu_custom_call.1} parent=11 // pred_check
        %p261 = pneg %p130
      $region22: #{tpu_custom_call.1} parent=11 // pred_check_branch
        %263 = sbr.rel (%p261) target = $region24
      $region23: #{tpu_custom_call.1} parent=11 // pred_region
        _
      $region24: #{tpu_custom_call.1} parent=11 // pred_fallthru
        _
      // Predicated region
      $region25: #{tpu_custom_call.1} parent=11 // pred_check
        %p264 = pneg %p151
      $region26: #{tpu_custom_call.1} parent=11 // pred_check_branch
        %266 = sbr.rel (%p264) target = $region28
      $region27: #{tpu_custom_call.1} parent=11 // pred_region
        _
      $region28: #{tpu_custom_call.1} parent=11 // pred_fallthru
        _
      // Predicated region
      $region29: #{tpu_custom_call.1} parent=11 // pred_check
        %p267 = pneg %p172
      $region30: #{tpu_custom_call.1} parent=11 // pred_check_branch
        %269 = sbr.rel (%p267) target = $region32
      $region31: #{tpu_custom_call.1} parent=11 // pred_region
        _
      $region32: #{tpu_custom_call.1} parent=11 // pred_fallthru
        _
      // Predicated region
      $region33: #{tpu_custom_call.1} parent=11 // pred_check
        %p270 = pneg %p193
      $region34: #{tpu_custom_call.1} parent=11 // pred_check_branch
        %272 = sbr.rel (%p270) target = $region36
      $region35: #{tpu_custom_call.1} parent=11 // pred_region
        _
      $region36: #{tpu_custom_call.1} parent=11 // pred_fallthru
        _
      // Predicated region
      $region37: #{tpu_custom_call.1} parent=11 // pred_check
        %p273 = pneg %p214
      $region38: #{tpu_custom_call.1} parent=11 // pred_check_branch
        %275 = sbr.rel (%p273) target = $region40
      $region39: #{tpu_custom_call.1} parent=11 // pred_region
        _
      $region40: #{tpu_custom_call.1} parent=11 // pred_fallthru
        _
    $region12: #{tpu_custom_call.1} parent=5 // pred_fallthru
      _
    %p276 = scmp.lt.s32.totalorder %s15, 2
    // Predicated region
    $region41: #{tpu_custom_call.1} parent=5 // pred_check
      %p277 = pneg %p276
    $region42: #{tpu_custom_call.1} parent=5 // pred_check_branch
      %279 = sbr.rel (%p277) target = $region44
    $region43: #{tpu_custom_call.1} parent=5 // pred_region
      // Predicated region
      $region45: #{tpu_custom_call.1} parent=43 // pred_check
        %p280 = pneg %p35
      $region46: #{tpu_custom_call.1} parent=43 // pred_check_branch
        %282 = sbr.rel (%p280) target = $region48
      $region47: #{tpu_custom_call.1} parent=43 // pred_region
        %s283 = smul.u32 8, %s15
        %p284 = scmp.lt.s32.totalorder %s283, 15
        %s285 = scalar_select %p284, %s283, 15
        %s286 = smul.addr %s285, 8
        %s287 = scalar_lea.vmem %s0, %s286
        %s288 = smul.u32 8, %s15
      $region48: #{tpu_custom_call.1} parent=43 // pred_fallthru
        _
      // Predicated region
      $region49: #{tpu_custom_call.1} parent=43 // pred_check
        %p289 = pneg %p61
      $region50: #{tpu_custom_call.1} parent=43 // pred_check_branch
        %291 = sbr.rel (%p289) target = $region52
      $region51: #{tpu_custom_call.1} parent=43 // pred_region
        %p292 = scmp.lt.s32.totalorder %s15, 1
        %s293 = scalar_select %p292, %s15, 1
        %s294 = smul.addr %s293, 8
        %s295 = scalar_lea.vmem %s1, %s294
      $region52: #{tpu_custom_call.1} parent=43 // pred_fallthru
        _
    $region44: #{tpu_custom_call.1} parent=5 // pred_fallthru
      _
    %p296 = scmp.le.s32.totalorder 1, %s15
    %p297 = scmp.lt.s32.totalorder %s15, 3
    %p298 = pnand %p296, %p297
    %p299 = pneg %p298
    // Predicated region
    $region53: #{tpu_custom_call.1} parent=5 // pred_check
      _
    $region54: #{tpu_custom_call.1} parent=5 // pred_check_branch
      %301 = sbr.rel (%p298) target = $region56
    $region55: #{tpu_custom_call.1} parent=5 // pred_region
      %s302 = ssub.s32 %s15, 1
      %s303 = smul.u32 8, %s20
      %p304 = scmp.lt.s32.totalorder %s303, 15
      %s305 = scalar_select %p304, %s303, 15
      %s306 = smul.addr %s305, 8
      %s307 = scalar_lea.vmem %s0, %s306
      %p308 = pneg %p41
      %p309 = pneg %p38
      %p310 = scmp.lt.s32.totalorder %s20, 1
      %s311 = scalar_select %p310, %s20, 1
      %s312 = smul.addr %s311, 8
      %s313 = scalar_lea.vmem %s1, %s312
      %p314 = pneg %p67
      %p315 = pneg %p64
      %p316 = pneg %p88
      %p317 = pneg %p85
      %p318 = pneg %p109
      %p319 = pneg %p106
      %p320 = pneg %p130
      %p321 = pneg %p127
      %p322 = pneg %p151
      %p323 = pneg %p148
      %p324 = pneg %p172
      %p325 = pneg %p169
      %p326 = pneg %p193
      %p327 = pneg %p190
      %p328 = pneg %p214
      %p329 = pneg %p211
      %p330 = pneg %p240
      %p331 = pneg %p237
      %s332 = smul.u32 8, %s20
      %p333 = scmp.lt.s32.totalorder %s332, 15
      %s334 = scalar_select %p333, %s332, 15
      %s335 = smul.addr %s334, 8
      %s336 = scalar_lea.vmem %s9, %s335
      %s337 = smul.u32 8, %s20
      %p338 = scmp.lt.s32.totalorder %s337, 15
      %s339 = scalar_select %p338, %s337, 15
      %s340 = smul.addr %s339, 8
      %s341 = scalar_lea.vmem %s0, %s340
      %s342 = smul.u32 8, %s20
      %p343 = scmp.lt.s32.totalorder %s20, 1
      %s344 = scalar_select %p343, %s20, 1
      %s345 = smul.addr %s344, 8
      %s346 = scalar_lea.vmem %s1, %s345
      %s347 = smul.u32 8, %s20
      %p348 = scmp.lt.s32.totalorder %s347, 15
      %s349 = scalar_select %p348, %s347, 15
      %s350 = smul.addr %s349, 8
      %s351 = scalar_lea.vmem %s9, %s350
      %s352 = smul.u32 8, %s20
      %v354 = vld [vmem:[%s341] sm:$0xff]
      %v355 = vld [vmem:[%s341 + $0x8] sm:$0xff]
      %v356 = vld [vmem:[%s341 + $0x10] sm:$0xff]
      %v357 = vld [vmem:[%s341 + $0x18] sm:$0xff]
      %v358 = vld [vmem:[%s341 + $0x20] sm:$0xff]
      %v359 = vld [vmem:[%s341 + $0x28] sm:$0xff]
      %v360 = vld [vmem:[%s341 + $0x30] sm:$0xff]
      %v361 = vld [vmem:[%s341 + $0x38] sm:$0xff]
      %v362 = vld [vmem:[%s346] sm:$0xff]
      %v363 = vld [vmem:[%s2] sm:$0xff]
      %v364 = vld [vmem:[%s3] sm:$0xff]
      %v365 = vld [vmem:[%s3 + $0x8] sm:$0xff]
      %v366 = vld [vmem:[%s3 + $0x10] sm:$0xff]
      %v367 = vld [vmem:[%s3 + $0x18] sm:$0xff]
      %v368 = vld [vmem:[%s4] sm:$0x1]
      %v369 = vld [vmem:[%s5] sm:$0xff]
      %v370 = vld [vmem:[%s5 + $0x8] sm:$0xff]
      %v371 = vld [vmem:[%s5 + $0x10] sm:$0xff]
      %v372 = vld [vmem:[%s5 + $0x18] sm:$0xff]
      %v373 = vld [vmem:[%s6] sm:$0x1]
      %v374 = vpack.c.bf16 %v355, %v354
      %v375 = vpack.c.bf16 %v357, %v356
      %v376 = vpack.c.bf16 %v359, %v358
      %v377 = vpack.c.bf16 %v361, %v360
      %v378 = vpack.c.bf16 %v365, %v364
      %v379 = vpack.c.bf16 %v367, %v366
      %v381 = vlaneseq
      %v382 = vshrl.u32 %v381, 7
      %v383 = vsub.s32 0, %v382
      %v384 = vrot.slane %v368, %v383
      %vm386 = vcmask 261120
      %v388 = vsel %vm386, %v374, 0
      %v391 = vsel %vm386, %v375, 0
      %v394 = vsel %vm386, %v376, 0
      %v397 = vsel %vm386, %v377, 0
      %399 = vmatprep.subr.bf16.mxu0 0
      %400 = vmatpush1.bf16.msra.mxu0 %v378
      %401 = vmatprep.subr.bf16.mxu0 0
      %402 = vmatpush1.bf16.msra.mxu0 %v379
      %403 = vmatprep.subr.bf16.mxu0 0
      %404 = vmatpush1.bf16.msra.mxu0 0
      %405 = vmatprep.subr.bf16.mxu0 0
      %406 = vmatpush1.bf16.msra.mxu0 0
      %407 = vmatprep.subr.bf16.mxu0 0
      %408 = vmatpush1.bf16.msra.mxu0 0
      %409 = vmatprep.subr.bf16.mxu0 0
      %410 = vmatpush1.bf16.msra.mxu0 0
      %411 = vmatprep.subr.bf16.mxu0 0
      %412 = vmatpush1.bf16.msra.mxu0 0
      %413 = vmatprep.subr.bf16.mxu0 0
      %414 = vmatpush1.bf16.msra.mxu0 0
      %415 = vmatprep.subr.bf16.mxu0 0
      %416 = vmatpush1.bf16.msra.mxu0 0
      %417 = vmatprep.subr.bf16.mxu0 0
      %418 = vmatpush1.bf16.msra.mxu0 0
      %419 = vmatprep.subr.bf16.mxu0 0
      %420 = vmatpush1.bf16.msra.mxu0 0
      %421 = vmatprep.subr.bf16.mxu0 0
      %422 = vmatpush1.bf16.msra.mxu0 0
      %423 = vmatprep.subr.bf16.mxu0 0
      %424 = vmatpush1.bf16.msra.mxu0 0
      %425 = vmatprep.subr.bf16.mxu0 0
      %426 = vmatpush1.bf16.msra.mxu0 0
      %427 = vmatprep.subr.bf16.mxu0 0
      %428 = vmatpush1.bf16.msra.mxu0 0
      %429 = vmatprep.subr.bf16.mxu0 0
      %430 = vmatpush1.bf16.msra.mxu0 0
      %431 = vmatprep.mubr.bf16.mxu0 0
      %432 = vmatmul.mubr.bf16.gmra.mrb[0].mxu0 %v388
      %v433 = vpop.f32.mrb[0].mxu0
      %v434 = vadd.f32 %v384, %v433
      %v435 = vpop.f32.mrb[0].mxu0
      %v436 = vpop.f32.mrb[0].mxu0
      %v437 = vadd.f32 %v384, %v436
      %v438 = vpop.f32.mrb[0].mxu0
      %439 = vmatprep.mubr.bf16.mxu0 0
      %440 = vmatmul.mubr.bf16.gmra.mrb[0].mxu0 %v391
      %v441 = vpop.f32.mrb[0].mxu0
      %v442 = vadd.f32 %v384, %v441
      %v443 = vpop.f32.mrb[0].mxu0
      %v444 = vpop.f32.mrb[0].mxu0
      %v445 = vadd.f32 %v384, %v444
      %v446 = vpop.f32.mrb[0].mxu0
      %447 = vmatprep.mubr.bf16.mxu0 0
      %448 = vmatmul.mubr.bf16.gmra.mrb[0].mxu0 %v394
      %v449 = vpop.f32.mrb[0].mxu0
      %v450 = vadd.f32 %v384, %v449
      %v451 = vpop.f32.mrb[0].mxu0
      %v452 = vpop.f32.mrb[0].mxu0
      %v453 = vadd.f32 %v384, %v452
      %v454 = vpop.f32.mrb[0].mxu0
      %455 = vmatprep.mubr.bf16.mxu0 0
      %456 = vmatmul.mubr.bf16.gmra.mrb[0].mxu0 %v397
      %v457 = vpop.f32.mrb[0].mxu0
      %v458 = vadd.f32 %v384, %v457
      %v459 = vpop.f32.mrb[0].mxu0
      %v460 = vpop.f32.mrb[0].mxu0
      %v461 = vadd.f32 %v384, %v460
      %v462 = vpop.f32.mrb[0].mxu0
      %463 = vdwg.mxu0
      %472 = vrot.lane.b32.xlu0 %v434, 120
      %v473 = vpop.permute.xlu0 %472
      %474 = vrot.lane.b32.xlu0 %v437, 120
      %v475 = vpop.permute.xlu0 %474
      %476 = vrot.lane.b32.xlu0 %v442, 120
      %v477 = vpop.permute.xlu0 %476
      %478 = vrot.lane.b32.xlu0 %v445, 120
      %v479 = vpop.permute.xlu0 %478
      %480 = vrot.lane.b32.xlu0 %v450, 120
      %v481 = vpop.permute.xlu0 %480
      %482 = vrot.lane.b32.xlu0 %v453, 120
      %v483 = vpop.permute.xlu0 %482
      %484 = vrot.lane.b32.xlu0 %v458, 120
      %v485 = vpop.permute.xlu0 %484
      %486 = vrot.lane.b32.xlu0 %v461, 120
      %v487 = vpop.permute.xlu0 %486
      %496 = vrot.lane.b32.xlu0 %v434, 112
      %v497 = vpop.permute.xlu0 %496
      %498 = vrot.lane.b32.xlu0 %v437, 112
      %v499 = vpop.permute.xlu0 %498
      %500 = vrot.lane.b32.xlu0 %v442, 112
      %v501 = vpop.permute.xlu0 %500
      %502 = vrot.lane.b32.xlu0 %v445, 112
      %v503 = vpop.permute.xlu0 %502
      %504 = vrot.lane.b32.xlu0 %v450, 112
      %v505 = vpop.permute.xlu0 %504
      %506 = vrot.lane.b32.xlu0 %v453, 112
      %v507 = vpop.permute.xlu0 %506
      %508 = vrot.lane.b32.xlu0 %v458, 112
      %v509 = vpop.permute.xlu0 %508
      %510 = vrot.lane.b32.xlu0 %v461, 112
      %v511 = vpop.permute.xlu0 %510
      %520 = vrot.lane.b32.xlu0 %v434, 104
      %v521 = vpop.permute.xlu0 %520
      %522 = vrot.lane.b32.xlu0 %v437, 104
      %v523 = vpop.permute.xlu0 %522
      %524 = vrot.lane.b32.xlu0 %v442, 104
      %v525 = vpop.permute.xlu0 %524
      %526 = vrot.lane.b32.xlu0 %v445, 104
      %v527 = vpop.permute.xlu0 %526
      %528 = vrot.lane.b32.xlu0 %v450, 104
      %v529 = vpop.permute.xlu0 %528
      %530 = vrot.lane.b32.xlu0 %v453, 104
      %v531 = vpop.permute.xlu0 %530
      %532 = vrot.lane.b32.xlu0 %v458, 104
      %v533 = vpop.permute.xlu0 %532
      %534 = vrot.lane.b32.xlu0 %v461, 104
      %v535 = vpop.permute.xlu0 %534
      %v544 = vmul.f32 %v434, 0.35355338
      %v545 = vmul.f32 %v437, 0.35355338
      %v546 = vmul.f32 %v442, 0.35355338
      %v547 = vmul.f32 %v445, 0.35355338
      %v548 = vmul.f32 %v450, 0.35355338
      %v549 = vmul.f32 %v453, 0.35355338
      %v550 = vmul.f32 %v458, 0.35355338
      %v551 = vmul.f32 %v461, 0.35355338
      %v552 = vmul.f32 %v473, 0.35355338
      %v553 = vmul.f32 %v475, 0.35355338
      %v554 = vmul.f32 %v477, 0.35355338
      %v555 = vmul.f32 %v479, 0.35355338
      %v556 = vmul.f32 %v481, 0.35355338
      %v557 = vmul.f32 %v483, 0.35355338
      %v558 = vmul.f32 %v485, 0.35355338
      %v559 = vmul.f32 %v487, 0.35355338
      %v560 = vmul.f32 %v497, 0.35355338
      %v561 = vmul.f32 %v499, 0.35355338
      %v562 = vmul.f32 %v501, 0.35355338
      %v563 = vmul.f32 %v503, 0.35355338
      %v564 = vmul.f32 %v505, 0.35355338
      %v565 = vmul.f32 %v507, 0.35355338
      %v566 = vmul.f32 %v509, 0.35355338
      %v567 = vmul.f32 %v511, 0.35355338
      %v568 = vmul.f32 %v521, 0.35355338
      %v569 = vmul.f32 %v523, 0.35355338
      %v570 = vmul.f32 %v525, 0.35355338
      %v571 = vmul.f32 %v527, 0.35355338
      %v572 = vmul.f32 %v529, 0.35355338
      %v573 = vmul.f32 %v531, 0.35355338
      %v574 = vmul.f32 %v533, 0.35355338
      %v575 = vmul.f32 %v535, 0.35355338
      %v576 = vpack.c.bf16 %v544, %v544
      %v577 = vpack.c.bf16 %v545, %v545
      %v578 = vpack.c.bf16 %v546, %v546
      %v579 = vpack.c.bf16 %v547, %v547
      %v580 = vpack.c.bf16 %v548, %v548
      %v581 = vpack.c.bf16 %v549, %v549
      %v582 = vpack.c.bf16 %v550, %v550
      %v583 = vpack.c.bf16 %v551, %v551
      %v584 = vpack.c.bf16 %v552, %v552
      %v585 = vpack.c.bf16 %v553, %v553
      %v586 = vpack.c.bf16 %v554, %v554
      %v587 = vpack.c.bf16 %v555, %v555
      %v588 = vpack.c.bf16 %v556, %v556
      %v589 = vpack.c.bf16 %v557, %v557
      %v590 = vpack.c.bf16 %v558, %v558
      %v591 = vpack.c.bf16 %v559, %v559
      %v592 = vpack.c.bf16 %v560, %v560
      %v593 = vpack.c.bf16 %v561, %v561
      %v594 = vpack.c.bf16 %v562, %v562
      %v595 = vpack.c.bf16 %v563, %v563
      %v596 = vpack.c.bf16 %v564, %v564
      %v597 = vpack.c.bf16 %v565, %v565
      %v598 = vpack.c.bf16 %v566, %v566
      %v599 = vpack.c.bf16 %v567, %v567
      %v600 = vpack.c.bf16 %v568, %v568
      %v601 = vpack.c.bf16 %v569, %v569
      %v602 = vpack.c.bf16 %v570, %v570
      %v603 = vpack.c.bf16 %v571, %v571
      %v604 = vpack.c.bf16 %v572, %v572
      %v605 = vpack.c.bf16 %v573, %v573
      %v606 = vpack.c.bf16 %v574, %v574
      %v607 = vpack.c.bf16 %v575, %v575
      %v608 = vpack.c.bf16 %v434, %v434
      %v609 = vpack.c.bf16 %v437, %v437
      %v610 = vpack.c.bf16 %v442, %v442
      %v611 = vpack.c.bf16 %v445, %v445
      %v612 = vpack.c.bf16 %v450, %v450
      %v613 = vpack.c.bf16 %v453, %v453
      %v614 = vpack.c.bf16 %v458, %v458
      %v615 = vpack.c.bf16 %v461, %v461
      %v616 = vpack.c.bf16 %v473, %v473
      %v617 = vpack.c.bf16 %v475, %v475
      %v618 = vpack.c.bf16 %v477, %v477
      %v619 = vpack.c.bf16 %v479, %v479
      %v620 = vpack.c.bf16 %v481, %v481
      %v621 = vpack.c.bf16 %v483, %v483
      %v622 = vpack.c.bf16 %v485, %v485
      %v623 = vpack.c.bf16 %v487, %v487
      %v624 = vpack.c.bf16 %v497, %v497
      %v625 = vpack.c.bf16 %v499, %v499
      %v626 = vpack.c.bf16 %v501, %v501
      %v627 = vpack.c.bf16 %v503, %v503
      %v628 = vpack.c.bf16 %v505, %v505
      %v629 = vpack.c.bf16 %v507, %v507
      %v630 = vpack.c.bf16 %v509, %v509
      %v631 = vpack.c.bf16 %v511, %v511
      %v632 = vpack.c.bf16 %v521, %v521
      %v633 = vpack.c.bf16 %v523, %v523
      %v634 = vpack.c.bf16 %v525, %v525
      %v635 = vpack.c.bf16 %v527, %v527
      %v636 = vpack.c.bf16 %v529, %v529
      %v637 = vpack.c.bf16 %v531, %v531
      %v638 = vpack.c.bf16 %v533, %v533
      %v639 = vpack.c.bf16 %v535, %v535
      %v641 = vcombine.high %v362, %v362
      %v643 = vunpack.c.l.s4 1966171168
      %v644 = vunpack.c.0.s8 %v643
      %v645 = vlaneseq
      %v646 = vshrl.u32 %v645, 7
      %v647 = vsub.s32 %v644, %v646
      %v648 = vrot.slane %v362, %v647
      %v650 = vunpack.c.l.s4 1966171168
      %v651 = vunpack.c.0.s8 %v650
      %v652 = vlaneseq
      %v653 = vshrl.u32 %v652, 7
      %v654 = vsub.s32 %v651, %v653
      %v655 = vrot.slane %v641, %v654
      %v656 = vcombine.high %v648, %v648
      %v657 = vcombine.high %v655, %v655
      %v659 = vunpack.c.l.s4 1966171168
      %v660 = vunpack.c.0.s8 %v659
      %v661 = vlaneseq
      %v662 = vshrl.u32 %v661, 7
      %v663 = vsub.s32 %v660, %v662
      %v664 = vrot.slane %v648, %v663
      %v666 = vunpack.c.l.s4 1966171168
      %v667 = vunpack.c.0.s8 %v666
      %v668 = vlaneseq
      %v669 = vshrl.u32 %v668, 7
      %v670 = vsub.s32 %v667, %v669
      %v671 = vrot.slane %v655, %v670
      %v673 = vunpack.c.l.s4 1966171168
      %v674 = vunpack.c.0.s8 %v673
      %v675 = vlaneseq
      %v676 = vshrl.u32 %v675, 7
      %v677 = vsub.s32 %v674, %v676
      %v678 = vrot.slane %v656, %v677
      %v680 = vunpack.c.l.s4 1966171168
      %v681 = vunpack.c.0.s8 %v680
      %v682 = vlaneseq
      %v683 = vshrl.u32 %v682, 7
      %v684 = vsub.s32 %v681, %v683
      %v685 = vrot.slane %v657, %v684
      %v686 = vcombine.high %v664, %v664
      %v687 = vcombine.high %v671, %v671
      %v688 = vcombine.high %v678, %v678
      %v689 = vcombine.high %v685, %v685
      %v690 = vlaneseq
      %v691 = vshrl.u32 %v690, 7
      %v692 = vsub.s32 0, %v691
      %v693 = vrot.slane %v664, %v692
      %v694 = vlaneseq
      %v695 = vshrl.u32 %v694, 7
      %v696 = vsub.s32 0, %v695
      %v697 = vrot.slane %v678, %v696
      %v698 = vlaneseq
      %v699 = vshrl.u32 %v698, 7
      %v700 = vsub.s32 0, %v699
      %v701 = vrot.slane %v686, %v700
      %v702 = vlaneseq
      %v703 = vshrl.u32 %v702, 7
      %v704 = vsub.s32 0, %v703
      %v705 = vrot.slane %v688, %v704
      %v706 = vlaneseq
      %v707 = vshrl.u32 %v706, 7
      %v708 = vsub.s32 0, %v707
      %v709 = vrot.slane %v671, %v708
      %v710 = vlaneseq
      %v711 = vshrl.u32 %v710, 7
      %v712 = vsub.s32 0, %v711
      %v713 = vrot.slane %v685, %v712
      %v714 = vlaneseq
      %v715 = vshrl.u32 %v714, 7
      %v716 = vsub.s32 0, %v715
      %v717 = vrot.slane %v687, %v716
      %v718 = vlaneseq
      %v719 = vshrl.u32 %v718, 7
      %v720 = vsub.s32 0, %v719
      %v721 = vrot.slane %v689, %v720
      %731 = vrot.lane.b32.xlu0 %v608, 96
      %v732 = vpop.permute.xlu0 %731
      %vm733 = vcmask 64512
      %v735 = vsel %vm733, %v576, 0
      %v738 = vsel %vm733, %v732, 0
      %740 = vmatprep.subr.bf16.mxu0 0
      %741 = vmatpush1.bf16.xpose.msra.mxu0 %v738
      %742 = vmatprep.subr.bf16.mxu0 0
      %743 = vmatpush1.bf16.xpose.msra.mxu0 0
      %744 = vmatprep.subr.bf16.mxu0 0
      %745 = vmatpush1.bf16.xpose.msra.mxu0 0
      %746 = vmatprep.subr.bf16.mxu0 0
      %747 = vmatpush1.bf16.xpose.msra.mxu0 0
      %748 = vmatprep.subr.bf16.mxu0 0
      %749 = vmatpush1.bf16.xpose.msra.mxu0 0
      %750 = vmatprep.subr.bf16.mxu0 0
      %751 = vmatpush1.bf16.xpose.msra.mxu0 0
      %752 = vmatprep.subr.bf16.mxu0 0
      %753 = vmatpush1.bf16.xpose.msra.mxu0 0
      %754 = vmatprep.subr.bf16.mxu0 0
      %755 = vmatpush1.bf16.xpose.msra.mxu0 0
      %756 = vmatprep.subr.bf16.mxu0 0
      %757 = vmatpush1.bf16.xpose.msra.mxu0 0
      %758 = vmatprep.subr.bf16.mxu0 0
      %759 = vmatpush1.bf16.xpose.msra.mxu0 0
      %760 = vmatprep.subr.bf16.mxu0 0
      %761 = vmatpush1.bf16.xpose.msra.mxu0 0
      %762 = vmatprep.subr.bf16.mxu0 0
      %763 = vmatpush1.bf16.xpose.msra.mxu0 0
      %764 = vmatprep.subr.bf16.mxu0 0
      %765 = vmatpush1.bf16.xpose.msra.mxu0 0
      %766 = vmatprep.subr.bf16.mxu0 0
      %767 = vmatpush1.bf16.xpose.msra.mxu0 0
      %768 = vmatprep.subr.bf16.mxu0 0
      %769 = vmatpush1.bf16.xpose.msra.mxu0 0
      %770 = vmatprep.subr.bf16.mxu0 0
      %771 = vmatpush1.bf16.xpose.msra.mxu0 0
      %772 = vmatprep.mubr.bf16.mxu0 0
      %773 = vmatmul.mubr.bf16.gmra.mrb[0].mxu0 %v735
      %v774 = vpop.f32.mrb[0].mxu0
      %v775 = vadd.f32 %v693, %v774
      %v776 = vpop.f32.mrb[0].mxu0
      %v777 = vpop.f32.mrb[0].mxu0
      %v778 = vpop.f32.mrb[0].mxu0
      %779 = vdwg.mxu0
      %781 = vrot.lane.b32.xlu0 %v609, 96
      %v782 = vpop.permute.xlu0 %781
      %v784 = vsel %vm733, %v577, 0
      %v787 = vsel %vm733, %v782, 0
      %789 = vmatprep.subr.bf16.mxu0 0
      %790 = vmatpush1.bf16.xpose.msra.mxu0 %v787
      %791 = vmatprep.subr.bf16.mxu0 0
      %792 = vmatpush1.bf16.xpose.msra.mxu0 0
      %793 = vmatprep.subr.bf16.mxu0 0
      %794 = vmatpush1.bf16.xpose.msra.mxu0 0
      %795 = vmatprep.subr.bf16.mxu0 0
      %796 = vmatpush1.bf16.xpose.msra.mxu0 0
      %797 = vmatprep.subr.bf16.mxu0 0
      %798 = vmatpush1.bf16.xpose.msra.mxu0 0
      %799 = vmatprep.subr.bf16.mxu0 0
      %800 = vmatpush1.bf16.xpose.msra.mxu0 0
      %801 = vmatprep.subr.bf16.mxu0 0
      %802 = vmatpush1.bf16.xpose.msra.mxu0 0
      %803 = vmatprep.subr.bf16.mxu0 0
      %804 = vmatpush1.bf16.xpose.msra.mxu0 0
      %805 = vmatprep.subr.bf16.mxu0 0
      %806 = vmatpush1.bf16.xpose.msra.mxu0 0
      %807 = vmatprep.subr.bf16.mxu0 0
      %808 = vmatpush1.bf16.xpose.msra.mxu0 0
      %809 = vmatprep.subr.bf16.mxu0 0
      %810 = vmatpush1.bf16.xpose.msra.mxu0 0
      %811 = vmatprep.subr.bf16.mxu0 0
      %812 = vmatpush1.bf16.xpose.msra.mxu0 0
      %813 = vmatprep.subr.bf16.mxu0 0
      %814 = vmatpush1.bf16.xpose.msra.mxu0 0
      %815 = vmatprep.subr.bf16.mxu0 0
      %816 = vmatpush1.bf16.xpose.msra.mxu0 0
      %817 = vmatprep.subr.bf16.mxu0 0
      %818 = vmatpush1.bf16.xpose.msra.mxu0 0
      %819 = vmatprep.subr.bf16.mxu0 0
      %820 = vmatpush1.bf16.xpose.msra.mxu0 0
      %821 = vmatprep.mubr.bf16.mxu0 0
      %822 = vmatmul.mubr.bf16.gmra.mrb[0].mxu0 %v784
      %v823 = vpop.f32.mrb[0].mxu0
      %v824 = vadd.f32 %v697, %v823
      %v825 = vpop.f32.mrb[0].mxu0
      %v826 = vpop.f32.mrb[0].mxu0
      %v827 = vpop.f32.mrb[0].mxu0
      %828 = vdwg.mxu0
      %830 = vrot.lane.b32.xlu0 %v610, 96
      %v831 = vpop.permute.xlu0 %830
      %v833 = vsel %vm733, %v578, 0
      %v836 = vsel %vm733, %v831, 0
      %838 = vmatprep.subr.bf16.mxu0 0
      %839 = vmatpush1.bf16.xpose.msra.mxu0 %v836
      %840 = vmatprep.subr.bf16.mxu0 0
      %841 = vmatpush1.bf16.xpose.msra.mxu0 0
      %842 = vmatprep.subr.bf16.mxu0 0
      %843 = vmatpush1.bf16.xpose.msra.mxu0 0
      %844 = vmatprep.subr.bf16.mxu0 0
      %845 = vmatpush1.bf16.xpose.msra.mxu0 0
      %846 = vmatprep.subr.bf16.mxu0 0
      %847 = vmatpush1.bf16.xpose.msra.mxu0 0
      %848 = vmatprep.subr.bf16.mxu0 0
      %849 = vmatpush1.bf16.xpose.msra.mxu0 0
      %850 = vmatprep.subr.bf16.mxu0 0
      %851 = vmatpush1.bf16.xpose.msra.mxu0 0
      %852 = vmatprep.subr.bf16.mxu0 0
      %853 = vmatpush1.bf16.xpose.msra.mxu0 0
      %854 = vmatprep.subr.bf16.mxu0 0
      %855 = vmatpush1.bf16.xpose.msra.mxu0 0
      %856 = vmatprep.subr.bf16.mxu0 0
      %857 = vmatpush1.bf16.xpose.msra.mxu0 0
      %858 = vmatprep.subr.bf16.mxu0 0
      %859 = vmatpush1.bf16.xpose.msra.mxu0 0
      %860 = vmatprep.subr.bf16.mxu0 0
      %861 = vmatpush1.bf16.xpose.msra.mxu0 0
      %862 = vmatprep.subr.bf16.mxu0 0
      %863 = vmatpush1.bf16.xpose.msra.mxu0 0
      %864 = vmatprep.subr.bf16.mxu0 0
      %865 = vmatpush1.bf16.xpose.msra.mxu0 0
      %866 = vmatprep.subr.bf16.mxu0 0
      %867 = vmatpush1.bf16.xpose.msra.mxu0 0
      %868 = vmatprep.subr.bf16.mxu0 0
      %869 = vmatpush1.bf16.xpose.msra.mxu0 0
      %870 = vmatprep.mubr.bf16.mxu0 0
      %871 = vmatmul.mubr.bf16.gmra.mrb[0].mxu0 %v833
      %v872 = vpop.f32.mrb[0].mxu0
      %v873 = vadd.f32 %v701, %v872
      %v874 = vpop.f32.mrb[0].mxu0
      %v875 = vpop.f32.mrb[0].mxu0
      %v876 = vpop.f32.mrb[0].mxu0
      %877 = vdwg.mxu0
      %879 = vrot.lane.b32.xlu0 %v611, 96
      %v880 = vpop.permute.xlu0 %879
      %v882 = vsel %vm733, %v579, 0
      %v885 = vsel %vm733, %v880, 0
      %887 = vmatprep.subr.bf16.mxu0 0
      %888 = vmatpush1.bf16.xpose.msra.mxu0 %v885
      %889 = vmatprep.subr.bf16.mxu0 0
      %890 = vmatpush1.bf16.xpose.msra.mxu0 0
      %891 = vmatprep.subr.bf16.mxu0 0
      %892 = vmatpush1.bf16.xpose.msra.mxu0 0
      %893 = vmatprep.subr.bf16.mxu0 0
      %894 = vmatpush1.bf16.xpose.msra.mxu0 0
      %895 = vmatprep.subr.bf16.mxu0 0
      %896 = vmatpush1.bf16.xpose.msra.mxu0 0
      %897 = vmatprep.subr.bf16.mxu0 0
      %898 = vmatpush1.bf16.xpose.msra.mxu0 0
      %899 = vmatprep.subr.bf16.mxu0 0
      %900 = vmatpush1.bf16.xpose.msra.mxu0 0
      %901 = vmatprep.subr.bf16.mxu0 0
      %902 = vmatpush1.bf16.xpose.msra.mxu0 0
      %903 = vmatprep.subr.bf16.mxu0 0
      %904 = vmatpush1.bf16.xpose.msra.mxu0 0
      %905 = vmatprep.subr.bf16.mxu0 0
      %906 = vmatpush1.bf16.xpose.msra.mxu0 0
      %907 = vmatprep.subr.bf16.mxu0 0
      %908 = vmatpush1.bf16.xpose.msra.mxu0 0
      %909 = vmatprep.subr.bf16.mxu0 0
      %910 = vmatpush1.bf16.xpose.msra.mxu0 0
      %911 = vmatprep.subr.bf16.mxu0 0
      %912 = vmatpush1.bf16.xpose.msra.mxu0 0
      %913 = vmatprep.subr.bf16.mxu0 0
      %914 = vmatpush1.bf16.xpose.msra.mxu0 0
      %915 = vmatprep.subr.bf16.mxu0 0
      %916 = vmatpush1.bf16.xpose.msra.mxu0 0
      %917 = vmatprep.subr.bf16.mxu0 0
      %918 = vmatpush1.bf16.xpose.msra.mxu0 0
      %919 = vmatprep.mubr.bf16.mxu0 0
      %920 = vmatmul.mubr.bf16.gmra.mrb[0].mxu0 %v882
      %v921 = vpop.f32.mrb[0].mxu0
      %v922 = vadd.f32 %v705, %v921
      %v923 = vpop.f32.mrb[0].mxu0
      %v924 = vpop.f32.mrb[0].mxu0
      %v925 = vpop.f32.mrb[0].mxu0
      %926 = vdwg.mxu0
      %928 = vrot.lane.b32.xlu0 %v612, 96
      %v929 = vpop.permute.xlu0 %928
      %v931 = vsel %vm733, %v580, 0
      %v934 = vsel %vm733, %v929, 0
      %936 = vmatprep.subr.bf16.mxu0 0
      %937 = vmatpush1.bf16.xpose.msra.mxu0 %v934
      %938 = vmatprep.subr.bf16.mxu0 0
      %939 = vmatpush1.bf16.xpose.msra.mxu0 0
      %940 = vmatprep.subr.bf16.mxu0 0
      %941 = vmatpush1.bf16.xpose.msra.mxu0 0
      %942 = vmatprep.subr.bf16.mxu0 0
      %943 = vmatpush1.bf16.xpose.msra.mxu0 0
      %944 = vmatprep.subr.bf16.mxu0 0
      %945 = vmatpush1.bf16.xpose.msra.mxu0 0
      %946 = vmatprep.subr.bf16.mxu0 0
      %947 = vmatpush1.bf16.xpose.msra.mxu0 0
      %948 = vmatprep.subr.bf16.mxu0 0
      %949 = vmatpush1.bf16.xpose.msra.mxu0 0
      %950 = vmatprep.subr.bf16.mxu0 0
      %951 = vmatpush1.bf16.xpose.msra.mxu0 0
      %952 = vmatprep.subr.bf16.mxu0 0
      %953 = vmatpush1.bf16.xpose.msra.mxu0 0
      %954 = vmatprep.subr.bf16.mxu0 0
      %955 = vmatpush1.bf16.xpose.msra.mxu0 0
      %956 = vmatprep.subr.bf16.mxu0 0
      %957 = vmatpush1.bf16.xpose.msra.mxu0 0
      %958 = vmatprep.subr.bf16.mxu0 0
      %959 = vmatpush1.bf16.xpose.msra.mxu0 0
      %960 = vmatprep.subr.bf16.mxu0 0
      %961 = vmatpush1.bf16.xpose.msra.mxu0 0
      %962 = vmatprep.subr.bf16.mxu0 0
      %963 = vmatpush1.bf16.xpose.msra.mxu0 0
      %964 = vmatprep.subr.bf16.mxu0 0
      %965 = vmatpush1.bf16.xpose.msra.mxu0 0
      %966 = vmatprep.subr.bf16.mxu0 0
      %967 = vmatpush1.bf16.xpose.msra.mxu0 0
      %968 = vmatprep.mubr.bf16.mxu0 0
      %969 = vmatmul.mubr.bf16.gmra.mrb[0].mxu0 %v931
      %v970 = vpop.f32.mrb[0].mxu0
      %v971 = vadd.f32 %v709, %v970
      %v972 = vpop.f32.mrb[0].mxu0
      %v973 = vpop.f32.mrb[0].mxu0
      %v974 = vpop.f32.mrb[0].mxu0
      %975 = vdwg.mxu0
      %977 = vrot.lane.b32.xlu0 %v613, 96
      %v978 = vpop.permute.xlu0 %977
      %v980 = vsel %vm733, %v581, 0
      %v983 = vsel %vm733, %v978, 0
      %985 = vmatprep.subr.bf16.mxu0 0
      %986 = vmatpush1.bf16.xpose.msra.mxu0 %v983
      %987 = vmatprep.subr.bf16.mxu0 0
      %988 = vmatpush1.bf16.xpose.msra.mxu0 0
      %989 = vmatprep.subr.bf16.mxu0 0
      %990 = vmatpush1.bf16.xpose.msra.mxu0 0
      %991 = vmatprep.subr.bf16.mxu0 0
      %992 = vmatpush1.bf16.xpose.msra.mxu0 0
      %993 = vmatprep.subr.bf16.mxu0 0
      %994 = vmatpush1.bf16.xpose.msra.mxu0 0
      %995 = vmatprep.subr.bf16.mxu0 0
      %996 = vmatpush1.bf16.xpose.msra.mxu0 0
      %997 = vmatprep.subr.bf16.mxu0 0
      %998 = vmatpush1.bf16.xpose.msra.mxu0 0
      %999 = vmatprep.subr.bf16.mxu0 0
      %1000 = vmatpush1.bf16.xpose.msra.mxu0 0
      %1001 = vmatprep.subr.bf16.mxu0 0
      %1002 = vmatpush1.bf16.xpose.msra.mxu0 0
      %1003 = vmatprep.subr.bf16.mxu0 0
      %1004 = vmatpush1.bf16.xpose.msra.mxu0 0
      %1005 = vmatprep.subr.bf16.mxu0 0
      %1006 = vmatpush1.bf16.xpose.msra.mxu0 0
      %1007 = vmatprep.subr.bf16.mxu0 0
      %1008 = vmatpush1.bf16.xpose.msra.mxu0 0
      %1009 = vmatprep.subr.bf16.mxu0 0
      %1010 = vmatpush1.bf16.xpose.msra.mxu0 0
      %1011 = vmatprep.subr.bf16.mxu0 0
      %1012 = vmatpush1.bf16.xpose.msra.mxu0 0
      %1013 = vmatprep.subr.bf16.mxu0 0
      %1014 = vmatpush1.bf16.xpose.msra.mxu0 0
      %1015 = vmatprep.subr.bf16.mxu0 0
      %1016 = vmatpush1.bf16.xpose.msra.mxu0 0
      %1017 = vmatprep.mubr.bf16.mxu0 0
      %1018 = vmatmul.mubr.bf16.gmra.mrb[0].mxu0 %v980
      %v1019 = vpop.f32.mrb[0].mxu0
      %v1020 = vadd.f32 %v713, %v1019
      %v1021 = vpop.f32.mrb[0].mxu0
      %v1022 = vpop.f32.mrb[0].mxu0
      %v1023 = vpop.f32.mrb[0].mxu0
      %1024 = vdwg.mxu0
      %1026 = vrot.lane.b32.xlu0 %v614, 96
      %v1027 = vpop.permute.xlu0 %1026
      %v1029 = vsel %vm733, %v582, 0
      %v1032 = vsel %vm733, %v1027, 0
      %1034 = vmatprep.subr.bf16.mxu0 0
      %1035 = vmatpush1.bf16.xpose.msra.mxu0 %v1032
      %1036 = vmatprep.subr.bf16.mxu0 0
      %1037 = vmatpush1.bf16.xpose.msra.mxu0 0
      %1038 = vmatprep.subr.bf16.mxu0 0
      %1039 = vmatpush1.bf16.xpose.msra.mxu0 0
      %1040 = vmatprep.subr.bf16.mxu0 0
      %1041 = vmatpush1.bf16.xpose.msra.mxu0 0
      %1042 = vmatprep.subr.bf16.mxu0 0
      %1043 = vmatpush1.bf16.xpose.msra.mxu0 0
      %1044 = vmatprep.subr.bf16.mxu0 0
      %1045 = vmatpush1.bf16.xpose.msra.mxu0 0
      %1046 = vmatprep.subr.bf16.mxu0 0
      %1047 = vmatpush1.bf16.xpose.msra.mxu0 0
      %1048 = vmatprep.subr.bf16.mxu0 0
      %1049 = vmatpush1.bf16.xpose.msra.mxu0 0
      %1050 = vmatprep.subr.bf16.mxu0 0
      %1051 = vmatpush1.bf16.xpose.msra.mxu0 0
      %1052 = vmatprep.subr.bf16.mxu0 0
      %1053 = vmatpush1.bf16.xpose.msra.mxu0 0
      %1054 = vmatprep.subr.bf16.mxu0 0
      %1055 = vmatpush1.bf16.xpose.msra.mxu0 0
      %1056 = vmatprep.subr.bf16.mxu0 0
      %1057 = vmatpush1.bf16.xpose.msra.mxu0 0
      %1058 = vmatprep.subr.bf16.mxu0 0
      %1059 = vmatpush1.bf16.xpose.msra.mxu0 0
      %1060 = vmatprep.subr.bf16.mxu0 0
      %1061 = vmatpush1.bf16.xpose.msra.mxu0 0
      %1062 = vmatprep.subr.bf16.mxu0 0
      %1063 = vmatpush1.bf16.xpose.msra.mxu0 0
      %1064 = vmatprep.subr.bf16.mxu0 0
      %1065 = vmatpush1.bf16.xpose.msra.mxu0 0
      %1066 = vmatprep.mubr.bf16.mxu0 0
      %1067 = vmatmul.mubr.bf16.gmra.mrb[0].mxu0 %v1029
      %v1068 = vpop.f32.mrb[0].mxu0
      %v1069 = vadd.f32 %v717, %v1068
      %v1070 = vpop.f32.mrb[0].mxu0
      %v1071 = vpop.f32.mrb[0].mxu0
      %v1072 = vpop.f32.mrb[0].mxu0
      %1073 = vdwg.mxu0
      %1075 = vrot.lane.b32.xlu0 %v615, 96
      %v1076 = vpop.permute.xlu0 %1075
      %v1078 = vsel %vm733, %v583, 0
      %v1081 = vsel %vm733, %v1076, 0
      %1083 = vmatprep.subr.bf16.mxu0 0
      %1084 = vmatpush1.bf16.xpose.msra.mxu0 %v1081
      %1085 = vmatprep.subr.bf16.mxu0 0
      %1086 = vmatpush1.bf16.xpose.msra.mxu0 0
      %1087 = vmatprep.subr.bf16.mxu0 0
      %1088 = vmatpush1.bf16.xpose.msra.mxu0 0
      %1089 = vmatprep.subr.bf16.mxu0 0
      %1090 = vmatpush1.bf16.xpose.msra.mxu0 0
      %1091 = vmatprep.subr.bf16.mxu0 0
      %1092 = vmatpush1.bf16.xpose.msra.mxu0 0
      %1093 = vmatprep.subr.bf16.mxu0 0
      %1094 = vmatpush1.bf16.xpose.msra.mxu0 0
      %1095 = vmatprep.subr.bf16.mxu0 0
      %1096 = vmatpush1.bf16.xpose.msra.mxu0 0
      %1097 = vmatprep.subr.bf16.mxu0 0
      %1098 = vmatpush1.bf16.xpose.msra.mxu0 0
      %1099 = vmatprep.subr.bf16.mxu0 0
      %1100 = vmatpush1.bf16.xpose.msra.mxu0 0
      %1101 = vmatprep.subr.bf16.mxu0 0
      %1102 = vmatpush1.bf16.xpose.msra.mxu0 0
      %1103 = vmatprep.subr.bf16.mxu0 0
      %1104 = vmatpush1.bf16.xpose.msra.mxu0 0
      %1105 = vmatprep.subr.bf16.mxu0 0
      %1106 = vmatpush1.bf16.xpose.msra.mxu0 0
      %1107 = vmatprep.subr.bf16.mxu0 0
      %1108 = vmatpush1.bf16.xpose.msra.mxu0 0
      %1109 = vmatprep.subr.bf16.mxu0 0
      %1110 = vmatpush1.bf16.xpose.msra.mxu0 0
      %1111 = vmatprep.subr.bf16.mxu0 0
      %1112 = vmatpush1.bf16.xpose.msra.mxu0 0
      %1113 = vmatprep.subr.bf16.mxu0 0
      %1114 = vmatpush1.bf16.xpose.msra.mxu0 0
      %1115 = vmatprep.mubr.bf16.mxu0 0
      %1116 = vmatmul.mubr.bf16.gmra.mrb[0].mxu0 %v1078
      %v1117 = vpop.f32.mrb[0].mxu0
      %v1118 = vadd.f32 %v721, %v1117
      %v1119 = vpop.f32.mrb[0].mxu0
      %v1120 = vpop.f32.mrb[0].mxu0
      %v1121 = vpop.f32.mrb[0].mxu0
      %1122 = vdwg.mxu0
      %1124 = vrot.lane.b32.xlu0 %v616, 96
      %v1125 = vpop.permute.xlu0 %1124
      %v1127 = vsel %vm733, %v584, 0
      %v1130 = vsel %vm733, %v1125, 0
      %1132 = vmatprep.subr.bf16.mxu0 0
      %1133 = vmatpush1.bf16.xpose.msra.mxu0 %v1130
      %1134 = vmatprep.subr.bf16.mxu0 0
      %1135 = vmatpush1.bf16.xpose.msra.mxu0 0
      %1136 = vmatprep.subr.bf16.mxu0 0
      %1137 = vmatpush1.bf16.xpose.msra.mxu0 0
      %1138 = vmatprep.subr.bf16.mxu0 0
      %1139 = vmatpush1.bf16.xpose.msra.mxu0 0
      %1140 = vmatprep.subr.bf16.mxu0 0
      %1141 = vmatpush1.bf16.xpose.msra.mxu0 0
      %1142 = vmatprep.subr.bf16.mxu0 0
      %1143 = vmatpush1.bf16.xpose.msra.mxu0 0
      %1144 = vmatprep.subr.bf16.mxu0 0
      %1145 = vmatpush1.bf16.xpose.msra.mxu0 0
      %1146 = vmatprep.subr.bf16.mxu0 0
      %1147 = vmatpush1.bf16.xpose.msra.mxu0 0
      %1148 = vmatprep.subr.bf16.mxu0 0
      %1149 = vmatpush1.bf16.xpose.msra.mxu0 0
      %1150 = vmatprep.subr.bf16.mxu0 0
      %1151 = vmatpush1.bf16.xpose.msra.mxu0 0
      %1152 = vmatprep.subr.bf16.mxu0 0
      %1153 = vmatpush1.bf16.xpose.msra.mxu0 0
      %1154 = vmatprep.subr.bf16.mxu0 0
      %1155 = vmatpush1.bf16.xpose.msra.mxu0 0
      %1156 = vmatprep.subr.bf16.mxu0 0
      %1157 = vmatpush1.bf16.xpose.msra.mxu0 0
      %1158 = vmatprep.subr.bf16.mxu0 0
      %1159 = vmatpush1.bf16.xpose.msra.mxu0 0
      %1160 = vmatprep.subr.bf16.mxu0 0
      %1161 = vmatpush1.bf16.xpose.msra.mxu0 0
      %1162 = vmatprep.subr.bf16.mxu0 0
      %1163 = vmatpush1.bf16.xpose.msra.mxu0 0
      %1164 = vmatprep.mubr.bf16.mxu0 0
      %1165 = vmatmul.mubr.bf16.gmra.mrb[0].mxu0 %v1127
      %v1166 = vpop.f32.mrb[0].mxu0
      %v1167 = vadd.f32 %v693, %v1166
      %v1168 = vpop.f32.mrb[0].mxu0
      %v1169 = vpop.f32.mrb[0].mxu0
      %v1170 = vpop.f32.mrb[0].mxu0
      %1171 = vdwg.mxu0
      %1173 = vrot.lane.b32.xlu0 %v617, 96
      %v1174 = vpop.permute.xlu0 %1173
      %v1176 = vsel %vm733, %v585, 0
      %v1179 = vsel %vm733, %v1174, 0
      %1181 = vmatprep.subr.bf16.mxu0 0
      %1182 = vmatpush1.bf16.xpose.msra.mxu0 %v1179
      %1183 = vmatprep.subr.bf16.mxu0 0
      %1184 = vmatpush1.bf16.xpose.msra.mxu0 0
      %1185 = vmatprep.subr.bf16.mxu0 0
      %1186 = vmatpush1.bf16.xpose.msra.mxu0 0
      %1187 = vmatprep.subr.bf16.mxu0 0
      %1188 = vmatpush1.bf16.xpose.msra.mxu0 0
      %1189 = vmatprep.subr.bf16.mxu0 0
      %1190 = vmatpush1.bf16.xpose.msra.mxu0 0
      %1191 = vmatprep.subr.bf16.mxu0 0
      %1192 = vmatpush1.bf16.xpose.msra.mxu0 0
      %1193 = vmatprep.subr.bf16.mxu0 0
      %1194 = vmatpush1.bf16.xpose.msra.mxu0 0
      %1195 = vmatprep.subr.bf16.mxu0 0
      %1196 = vmatpush1.bf16.xpose.msra.mxu0 0
      %1197 = vmatprep.subr.bf16.mxu0 0
      %1198 = vmatpush1.bf16.xpose.msra.mxu0 0
      %1199 = vmatprep.subr.bf16.mxu0 0
      %1200 = vmatpush1.bf16.xpose.msra.mxu0 0
      %1201 = vmatprep.subr.bf16.mxu0 0
      %1202 = vmatpush1.bf16.xpose.msra.mxu0 0
      %1203 = vmatprep.subr.bf16.mxu0 0
      %1204 = vmatpush1.bf16.xpose.msra.mxu0 0
      %1205 = vmatprep.subr.bf16.mxu0 0
      %1206 = vmatpush1.bf16.xpose.msra.mxu0 0
      %1207 = vmatprep.subr.bf16.mxu0 0
      %1208 = vmatpush1.bf16.xpose.msra.mxu0 0
      %1209 = vmatprep.subr.bf16.mxu0 0
      %1210 = vmatpush1.bf16.xpose.msra.mxu0 0
      %1211 = vmatprep.subr.bf16.mxu0 0
      %1212 = vmatpush1.bf16.xpose.msra.mxu0 0
      %1213 = vmatprep.mubr.bf16.mxu0 0
      %1214 = vmatmul.mubr.bf16.gmra.mrb[0].mxu0 %v1176
      %v1215 = vpop.f32.mrb[0].mxu0
      %v1216 = vadd.f32 %v697, %v1215
      %v1217 = vpop.f32.mrb[0].mxu0
      %v1218 = vpop.f32.mrb[0].mxu0
      %v1219 = vpop.f32.mrb[0].mxu0
      %1220 = vdwg.mxu0
      %1222 = vrot.lane.b32.xlu0 %v618, 96
      %v1223 = vpop.permute.xlu0 %1222
      %v1225 = vsel %vm733, %v586, 0
      %v1228 = vsel %vm733, %v1223, 0
      %1230 = vmatprep.subr.bf16.mxu0 0
      %1231 = vmatpush1.bf16.xpose.msra.mxu0 %v1228
      %1232 = vmatprep.subr.bf16.mxu0 0
      %1233 = vmatpush1.bf16.xpose.msra.mxu0 0
      %1234 = vmatprep.subr.bf16.mxu0 0
      %1235 = vmatpush1.bf16.xpose.msra.mxu0 0
      %1236 = vmatprep.subr.bf16.mxu0 0
      %1237 = vmatpush1.bf16.xpose.msra.mxu0 0
      %1238 = vmatprep.subr.bf16.mxu0 0
      %1239 = vmatpush1.bf16.xpose.msra.mxu0 0
      %1240 = vmatprep.subr.bf16.mxu0 0
      %1241 = vmatpush1.bf16.xpose.msra.mxu0 0
      %1242 = vmatprep.subr.bf16.mxu0 0
      %1243 = vmatpush1.bf16.xpose.msra.mxu0 0
      %1244 = vmatprep.subr.bf16.mxu0 0
      %1245 = vmatpush1.bf16.xpose.msra.mxu0 0
      %1246 = vmatprep.subr.bf16.mxu0 0
      %1247 = vmatpush1.bf16.xpose.msra.mxu0 0
      %1248 = vmatprep.subr.bf16.mxu0 0
      %1249 = vmatpush1.bf16.xpose.msra.mxu0 0
      %1250 = vmatprep.subr.bf16.mxu0 0
      %1251 = vmatpush1.bf16.xpose.msra.mxu0 0
      %1252 = vmatprep.subr.bf16.mxu0 0
      %1253 = vmatpush1.bf16.xpose.msra.mxu0 0
      %1254 = vmatprep.subr.bf16.mxu0 0
      %1255 = vmatpush1.bf16.xpose.msra.mxu0 0
      %1256 = vmatprep.subr.bf16.mxu0 0
      %1257 = vmatpush1.bf16.xpose.msra.mxu0 0
      %1258 = vmatprep.subr.bf16.mxu0 0
      %1259 = vmatpush1.bf16.xpose.msra.mxu0 0
      %1260 = vmatprep.subr.bf16.mxu0 0
      %1261 = vmatpush1.bf16.xpose.msra.mxu0 0
      %1262 = vmatprep.mubr.bf16.mxu0 0
      %1263 = vmatmul.mubr.bf16.gmra.mrb[0].mxu0 %v1225
      %v1264 = vpop.f32.mrb[0].mxu0
      %v1265 = vadd.f32 %v701, %v1264
      %v1266 = vpop.f32.mrb[0].mxu0
      %v1267 = vpop.f32.mrb[0].mxu0
      %v1268 = vpop.f32.mrb[0].mxu0
      %1269 = vdwg.mxu0
      %1271 = vrot.lane.b32.xlu0 %v619, 96
      %v1272 = vpop.permute.xlu0 %1271
      %v1274 = vsel %vm733, %v587, 0
      %v1277 = vsel %vm733, %v1272, 0
      %1279 = vmatprep.subr.bf16.mxu0 0
      %1280 = vmatpush1.bf16.xpose.msra.mxu0 %v1277
      %1281 = vmatprep.subr.bf16.mxu0 0
      %1282 = vmatpush1.bf16.xpose.msra.mxu0 0
      %1283 = vmatprep.subr.bf16.mxu0 0
      %1284 = vmatpush1.bf16.xpose.msra.mxu0 0
      %1285 = vmatprep.subr.bf16.mxu0 0
      %1286 = vmatpush1.bf16.xpose.msra.mxu0 0
      %1287 = vmatprep.subr.bf16.mxu0 0
      %1288 = vmatpush1.bf16.xpose.msra.mxu0 0
      %1289 = vmatprep.subr.bf16.mxu0 0
      %1290 = vmatpush1.bf16.xpose.msra.mxu0 0
      %1291 = vmatprep.subr.bf16.mxu0 0
      %1292 = vmatpush1.bf16.xpose.msra.mxu0 0
      %1293 = vmatprep.subr.bf16.mxu0 0
      %1294 = vmatpush1.bf16.xpose.msra.mxu0 0
      %1295 = vmatprep.subr.bf16.mxu0 0
      %1296 = vmatpush1.bf16.xpose.msra.mxu0 0
      %1297 = vmatprep.subr.bf16.mxu0 0
      %1298 = vmatpush1.bf16.xpose.msra.mxu0 0
      %1299 = vmatprep.subr.bf16.mxu0 0
      %1300 = vmatpush1.bf16.xpose.msra.mxu0 0
      %1301 = vmatprep.subr.bf16.mxu0 0
      %1302 = vmatpush1.bf16.xpose.msra.mxu0 0
      %1303 = vmatprep.subr.bf16.mxu0 0
      %1304 = vmatpush1.bf16.xpose.msra.mxu0 0
      %1305 = vmatprep.subr.bf16.mxu0 0
      %1306 = vmatpush1.bf16.xpose.msra.mxu0 0
      %1307 = vmatprep.subr.bf16.mxu0 0
      %1308 = vmatpush1.bf16.xpose.msra.mxu0 0
      %1309 = vmatprep.subr.bf16.mxu0 0
      %1310 = vmatpush1.bf16.xpose.msra.mxu0 0
      %1311 = vmatprep.mubr.bf16.mxu0 0
      %1312 = vmatmul.mubr.bf16.gmra.mrb[0].mxu0 %v1274
      %v1313 = vpop.f32.mrb[0].mxu0
      %v1314 = vadd.f32 %v705, %v1313
      %v1315 = vpop.f32.mrb[0].mxu0
      %v1316 = vpop.f32.mrb[0].mxu0
      %v1317 = vpop.f32.mrb[0].mxu0
      %1318 = vdwg.mxu0
      %1320 = vrot.lane.b32.xlu0 %v620, 96
      %v1321 = vpop.permute.xlu0 %1320
      %v1323 = vsel %vm733, %v588, 0
      %v1326 = vsel %vm733, %v1321, 0
      %1328 = vmatprep.subr.bf16.mxu0 0
      %1329 = vmatpush1.bf16.xpose.msra.mxu0 %v1326
      %1330 = vmatprep.subr.bf16.mxu0 0
      %1331 = vmatpush1.bf16.xpose.msra.mxu0 0
      %1332 = vmatprep.subr.bf16.mxu0 0
      %1333 = vmatpush1.bf16.xpose.msra.mxu0 0
      %1334 = vmatprep.subr.bf16.mxu0 0
      %1335 = vmatpush1.bf16.xpose.msra.mxu0 0
      %1336 = vmatprep.subr.bf16.mxu0 0
      %1337 = vmatpush1.bf16.xpose.msra.mxu0 0
      %1338 = vmatprep.subr.bf16.mxu0 0
      %1339 = vmatpush1.bf16.xpose.msra.mxu0 0
      %1340 = vmatprep.subr.bf16.mxu0 0
      %1341 = vmatpush1.bf16.xpose.msra.mxu0 0
      %1342 = vmatprep.subr.bf16.mxu0 0
      %1343 = vmatpush1.bf16.xpose.msra.mxu0 0
      %1344 = vmatprep.subr.bf16.mxu0 0
      %1345 = vmatpush1.bf16.xpose.msra.mxu0 0
      %1346 = vmatprep.subr.bf16.mxu0 0
      %1347 = vmatpush1.bf16.xpose.msra.mxu0 0
      %1348 = vmatprep.subr.bf16.mxu0 0
      %1349 = vmatpush1.bf16.xpose.msra.mxu0 0
      %1350 = vmatprep.subr.bf16.mxu0 0
      %1351 = vmatpush1.bf16.xpose.msra.mxu0 0
      %1352 = vmatprep.subr.bf16.mxu0 0
      %1353 = vmatpush1.bf16.xpose.msra.mxu0 0
      %1354 = vmatprep.subr.bf16.mxu0 0
      %1355 = vmatpush1.bf16.xpose.msra.mxu0 0
      %1356 = vmatprep.subr.bf16.mxu0 0
      %1357 = vmatpush1.bf16.xpose.msra.mxu0 0
      %1358 = vmatprep.subr.bf16.mxu0 0
      %1359 = vmatpush1.bf16.xpose.msra.mxu0 0
      %1360 = vmatprep.mubr.bf16.mxu0 0
      %1361 = vmatmul.mubr.bf16.gmra.mrb[0].mxu0 %v1323
      %v1362 = vpop.f32.mrb[0].mxu0
      %v1363 = vadd.f32 %v709, %v1362
      %v1364 = vpop.f32.mrb[0].mxu0
      %v1365 = vpop.f32.mrb[0].mxu0
      %v1366 = vpop.f32.mrb[0].mxu0
      %1367 = vdwg.mxu0
      %1369 = vrot.lane.b32.xlu0 %v621, 96
      %v1370 = vpop.permute.xlu0 %1369
      %v1372 = vsel %vm733, %v589, 0
      %v1375 = vsel %vm733, %v1370, 0
      %1377 = vmatprep.subr.bf16.mxu0 0
      %1378 = vmatpush1.bf16.xpose.msra.mxu0 %v1375
      %1379 = vmatprep.subr.bf16.mxu0 0
      %1380 = vmatpush1.bf16.xpose.msra.mxu0 0
      %1381 = vmatprep.subr.bf16.mxu0 0
      %1382 = vmatpush1.bf16.xpose.msra.mxu0 0
      %1383 = vmatprep.subr.bf16.mxu0 0
      %1384 = vmatpush1.bf16.xpose.msra.mxu0 0
      %1385 = vmatprep.subr.bf16.mxu0 0
      %1386 = vmatpush1.bf16.xpose.msra.mxu0 0
      %1387 = vmatprep.subr.bf16.mxu0 0
      %1388 = vmatpush1.bf16.xpose.msra.mxu0 0
      %1389 = vmatprep.subr.bf16.mxu0 0
      %1390 = vmatpush1.bf16.xpose.msra.mxu0 0
      %1391 = vmatprep.subr.bf16.mxu0 0
      %1392 = vmatpush1.bf16.xpose.msra.mxu0 0
      %1393 = vmatprep.subr.bf16.mxu0 0
      %1394 = vmatpush1.bf16.xpose.msra.mxu0 0
      %1395 = vmatprep.subr.bf16.mxu0 0
      %1396 = vmatpush1.bf16.xpose.msra.mxu0 0
      %1397 = vmatprep.subr.bf16.mxu0 0
      %1398 = vmatpush1.bf16.xpose.msra.mxu0 0
      %1399 = vmatprep.subr.bf16.mxu0 0
      %1400 = vmatpush1.bf16.xpose.msra.mxu0 0
      %1401 = vmatprep.subr.bf16.mxu0 0
      %1402 = vmatpush1.bf16.xpose.msra.mxu0 0
      %1403 = vmatprep.subr.bf16.mxu0 0
      %1404 = vmatpush1.bf16.xpose.msra.mxu0 0
      %1405 = vmatprep.subr.bf16.mxu0 0
      %1406 = vmatpush1.bf16.xpose.msra.mxu0 0
      %1407 = vmatprep.subr.bf16.mxu0 0
      %1408 = vmatpush1.bf16.xpose.msra.mxu0 0
      %1409 = vmatprep.mubr.bf16.mxu0 0
      %1410 = vmatmul.mubr.bf16.gmra.mrb[0].mxu0 %v1372
      %v1411 = vpop.f32.mrb[0].mxu0
      %v1412 = vadd.f32 %v713, %v1411
      %v1413 = vpop.f32.mrb[0].mxu0
      %v1414 = vpop.f32.mrb[0].mxu0
      %v1415 = vpop.f32.mrb[0].mxu0
      %1416 = vdwg.mxu0
      %1418 = vrot.lane.b32.xlu0 %v622, 96
      %v1419 = vpop.permute.xlu0 %1418
      %v1421 = vsel %vm733, %v590, 0
      %v1424 = vsel %vm733, %v1419, 0
      %1426 = vmatprep.subr.bf16.mxu0 0
      %1427 = vmatpush1.bf16.xpose.msra.mxu0 %v1424
      %1428 = vmatprep.subr.bf16.mxu0 0
      %1429 = vmatpush1.bf16.xpose.msra.mxu0 0
      %1430 = vmatprep.subr.bf16.mxu0 0
      %1431 = vmatpush1.bf16.xpose.msra.mxu0 0
      %1432 = vmatprep.subr.bf16.mxu0 0
      %1433 = vmatpush1.bf16.xpose.msra.mxu0 0
      %1434 = vmatprep.subr.bf16.mxu0 0
      %1435 = vmatpush1.bf16.xpose.msra.mxu0 0
      %1436 = vmatprep.subr.bf16.mxu0 0
      %1437 = vmatpush1.bf16.xpose.msra.mxu0 0
      %1438 = vmatprep.subr.bf16.mxu0 0
      %1439 = vmatpush1.bf16.xpose.msra.mxu0 0
      %1440 = vmatprep.subr.bf16.mxu0 0
      %1441 = vmatpush1.bf16.xpose.msra.mxu0 0
      %1442 = vmatprep.subr.bf16.mxu0 0
      %1443 = vmatpush1.bf16.xpose.msra.mxu0 0
      %1444 = vmatprep.subr.bf16.mxu0 0
      %1445 = vmatpush1.bf16.xpose.msra.mxu0 0
      %1446 = vmatprep.subr.bf16.mxu0 0
      %1447 = vmatpush1.bf16.xpose.msra.mxu0 0
      %1448 = vmatprep.subr.bf16.mxu0 0
      %1449 = vmatpush1.bf16.xpose.msra.mxu0 0
      %1450 = vmatprep.subr.bf16.mxu0 0
      %1451 = vmatpush1.bf16.xpose.msra.mxu0 0
      %1452 = vmatprep.subr.bf16.mxu0 0
      %1453 = vmatpush1.bf16.xpose.msra.mxu0 0
      %1454 = vmatprep.subr.bf16.mxu0 0
      %1455 = vmatpush1.bf16.xpose.msra.mxu0 0
      %1456 = vmatprep.subr.bf16.mxu0 0
      %1457 = vmatpush1.bf16.xpose.msra.mxu0 0
      %1458 = vmatprep.mubr.bf16.mxu0 0
      %1459 = vmatmul.mubr.bf16.gmra.mrb[0].mxu0 %v1421
      %v1460 = vpop.f32.mrb[0].mxu0
      %v1461 = vadd.f32 %v717, %v1460
      %v1462 = vpop.f32.mrb[0].mxu0
      %v1463 = vpop.f32.mrb[0].mxu0
      %v1464 = vpop.f32.mrb[0].mxu0
      %1465 = vdwg.mxu0
      %1467 = vrot.lane.b32.xlu0 %v623, 96
      %v1468 = vpop.permute.xlu0 %1467
      %v1470 = vsel %vm733, %v591, 0
      %v1473 = vsel %vm733, %v1468, 0
      %1475 = vmatprep.subr.bf16.mxu0 0
      %1476 = vmatpush1.bf16.xpose.msra.mxu0 %v1473
      %1477 = vmatprep.subr.bf16.mxu0 0
      %1478 = vmatpush1.bf16.xpose.msra.mxu0 0
      %1479 = vmatprep.subr.bf16.mxu0 0
      %1480 = vmatpush1.bf16.xpose.msra.mxu0 0
      %1481 = vmatprep.subr.bf16.mxu0 0
      %1482 = vmatpush1.bf16.xpose.msra.mxu0 0
      %1483 = vmatprep.subr.bf16.mxu0 0
      %1484 = vmatpush1.bf16.xpose.msra.mxu0 0
      %1485 = vmatprep.subr.bf16.mxu0 0
      %1486 = vmatpush1.bf16.xpose.msra.mxu0 0
      %1487 = vmatprep.subr.bf16.mxu0 0
      %1488 = vmatpush1.bf16.xpose.msra.mxu0 0
      %1489 = vmatprep.subr.bf16.mxu0 0
      %1490 = vmatpush1.bf16.xpose.msra.mxu0 0
      %1491 = vmatprep.subr.bf16.mxu0 0
      %1492 = vmatpush1.bf16.xpose.msra.mxu0 0
      %1493 = vmatprep.subr.bf16.mxu0 0
      %1494 = vmatpush1.bf16.xpose.msra.mxu0 0
      %1495 = vmatprep.subr.bf16.mxu0 0
      %1496 = vmatpush1.bf16.xpose.msra.mxu0 0
      %1497 = vmatprep.subr.bf16.mxu0 0
      %1498 = vmatpush1.bf16.xpose.msra.mxu0 0
      %1499 = vmatprep.subr.bf16.mxu0 0
      %1500 = vmatpush1.bf16.xpose.msra.mxu0 0
      %1501 = vmatprep.subr.bf16.mxu0 0
      %1502 = vmatpush1.bf16.xpose.msra.mxu0 0
      %1503 = vmatprep.subr.bf16.mxu0 0
      %1504 = vmatpush1.bf16.xpose.msra.mxu0 0
      %1505 = vmatprep.subr.bf16.mxu0 0
      %1506 = vmatpush1.bf16.xpose.msra.mxu0 0
      %1507 = vmatprep.mubr.bf16.mxu0 0
      %1508 = vmatmul.mubr.bf16.gmra.mrb[0].mxu0 %v1470
      %v1509 = vpop.f32.mrb[0].mxu0
      %v1510 = vadd.f32 %v721, %v1509
      %v1511 = vpop.f32.mrb[0].mxu0
      %v1512 = vpop.f32.mrb[0].mxu0
      %v1513 = vpop.f32.mrb[0].mxu0
      %1514 = vdwg.mxu0
      %1516 = vrot.lane.b32.xlu0 %v624, 96
      %v1517 = vpop.permute.xlu0 %1516
      %v1519 = vsel %vm733, %v592, 0
      %v1522 = vsel %vm733, %v1517, 0
      %1524 = vmatprep.subr.bf16.mxu0 0
      %1525 = vmatpush1.bf16.xpose.msra.mxu0 %v1522
      %1526 = vmatprep.subr.bf16.mxu0 0
      %1527 = vmatpush1.bf16.xpose.msra.mxu0 0
      %1528 = vmatprep.subr.bf16.mxu0 0
      %1529 = vmatpush1.bf16.xpose.msra.mxu0 0
      %1530 = vmatprep.subr.bf16.mxu0 0
      %1531 = vmatpush1.bf16.xpose.msra.mxu0 0
      %1532 = vmatprep.subr.bf16.mxu0 0
      %1533 = vmatpush1.bf16.xpose.msra.mxu0 0
      %1534 = vmatprep.subr.bf16.mxu0 0
      %1535 = vmatpush1.bf16.xpose.msra.mxu0 0
      %1536 = vmatprep.subr.bf16.mxu0 0
      %1537 = vmatpush1.bf16.xpose.msra.mxu0 0
      %1538 = vmatprep.subr.bf16.mxu0 0
      %1539 = vmatpush1.bf16.xpose.msra.mxu0 0
      %1540 = vmatprep.subr.bf16.mxu0 0
      %1541 = vmatpush1.bf16.xpose.msra.mxu0 0
      %1542 = vmatprep.subr.bf16.mxu0 0
      %1543 = vmatpush1.bf16.xpose.msra.mxu0 0
      %1544 = vmatprep.subr.bf16.mxu0 0
      %1545 = vmatpush1.bf16.xpose.msra.mxu0 0
      %1546 = vmatprep.subr.bf16.mxu0 0
      %1547 = vmatpush1.bf16.xpose.msra.mxu0 0
      %1548 = vmatprep.subr.bf16.mxu0 0
      %1549 = vmatpush1.bf16.xpose.msra.mxu0 0
      %1550 = vmatprep.subr.bf16.mxu0 0
      %1551 = vmatpush1.bf16.xpose.msra.mxu0 0
      %1552 = vmatprep.subr.bf16.mxu0 0
      %1553 = vmatpush1.bf16.xpose.msra.mxu0 0
      %1554 = vmatprep.subr.bf16.mxu0 0
      %1555 = vmatpush1.bf16.xpose.msra.mxu0 0
      %1556 = vmatprep.mubr.bf16.mxu0 0
      %1557 = vmatmul.mubr.bf16.gmra.mrb[0].mxu0 %v1519
      %v1558 = vpop.f32.mrb[0].mxu0
      %v1559 = vadd.f32 %v693, %v1558
      %v1560 = vpop.f32.mrb[0].mxu0
      %v1561 = vpop.f32.mrb[0].mxu0
      %v1562 = vpop.f32.mrb[0].mxu0
      %1563 = vdwg.mxu0
      %1565 = vrot.lane.b32.xlu0 %v625, 96
      %v1566 = vpop.permute.xlu0 %1565
      %v1568 = vsel %vm733, %v593, 0
      %v1571 = vsel %vm733, %v1566, 0
      %1573 = vmatprep.subr.bf16.mxu0 0
      %1574 = vmatpush1.bf16.xpose.msra.mxu0 %v1571
      %1575 = vmatprep.subr.bf16.mxu0 0
      %1576 = vmatpush1.bf16.xpose.msra.mxu0 0
      %1577 = vmatprep.subr.bf16.mxu0 0
      %1578 = vmatpush1.bf16.xpose.msra.mxu0 0
      %1579 = vmatprep.subr.bf16.mxu0 0
      %1580 = vmatpush1.bf16.xpose.msra.mxu0 0
      %1581 = vmatprep.subr.bf16.mxu0 0
      %1582 = vmatpush1.bf16.xpose.msra.mxu0 0
      %1583 = vmatprep.subr.bf16.mxu0 0
      %1584 = vmatpush1.bf16.xpose.msra.mxu0 0
      %1585 = vmatprep.subr.bf16.mxu0 0
      %1586 = vmatpush1.bf16.xpose.msra.mxu0 0
      %1587 = vmatprep.subr.bf16.mxu0 0
      %1588 = vmatpush1.bf16.xpose.msra.mxu0 0
      %1589 = vmatprep.subr.bf16.mxu0 0
      %1590 = vmatpush1.bf16.xpose.msra.mxu0 0
      %1591 = vmatprep.subr.bf16.mxu0 0
      %1592 = vmatpush1.bf16.xpose.msra.mxu0 0
      %1593 = vmatprep.subr.bf16.mxu0 0
      %1594 = vmatpush1.bf16.xpose.msra.mxu0 0
      %1595 = vmatprep.subr.bf16.mxu0 0
      %1596 = vmatpush1.bf16.xpose.msra.mxu0 0
      %1597 = vmatprep.subr.bf16.mxu0 0
      %1598 = vmatpush1.bf16.xpose.msra.mxu0 0
      %1599 = vmatprep.subr.bf16.mxu0 0
      %1600 = vmatpush1.bf16.xpose.msra.mxu0 0
      %1601 = vmatprep.subr.bf16.mxu0 0
      %1602 = vmatpush1.bf16.xpose.msra.mxu0 0
      %1603 = vmatprep.subr.bf16.mxu0 0
      %1604 = vmatpush1.bf16.xpose.msra.mxu0 0
      %1605 = vmatprep.mubr.bf16.mxu0 0
      %1606 = vmatmul.mubr.bf16.gmra.mrb[0].mxu0 %v1568
      %v1607 = vpop.f32.mrb[0].mxu0
      %v1608 = vadd.f32 %v697, %v1607
      %v1609 = vpop.f32.mrb[0].mxu0
      %v1610 = vpop.f32.mrb[0].mxu0
      %v1611 = vpop.f32.mrb[0].mxu0
      %1612 = vdwg.mxu0
      %1614 = vrot.lane.b32.xlu0 %v626, 96
      %v1615 = vpop.permute.xlu0 %1614
      %v1617 = vsel %vm733, %v594, 0
      %v1620 = vsel %vm733, %v1615, 0
      %1622 = vmatprep.subr.bf16.mxu0 0
      %1623 = vmatpush1.bf16.xpose.msra.mxu0 %v1620
      %1624 = vmatprep.subr.bf16.mxu0 0
      %1625 = vmatpush1.bf16.xpose.msra.mxu0 0
      %1626 = vmatprep.subr.bf16.mxu0 0
      %1627 = vmatpush1.bf16.xpose.msra.mxu0 0
      %1628 = vmatprep.subr.bf16.mxu0 0
      %1629 = vmatpush1.bf16.xpose.msra.mxu0 0
      %1630 = vmatprep.subr.bf16.mxu0 0
      %1631 = vmatpush1.bf16.xpose.msra.mxu0 0
      %1632 = vmatprep.subr.bf16.mxu0 0
      %1633 = vmatpush1.bf16.xpose.msra.mxu0 0
      %1634 = vmatprep.subr.bf16.mxu0 0
      %1635 = vmatpush1.bf16.xpose.msra.mxu0 0
      %1636 = vmatprep.subr.bf16.mxu0 0
      %1637 = vmatpush1.bf16.xpose.msra.mxu0 0
      %1638 = vmatprep.subr.bf16.mxu0 0
      %1639 = vmatpush1.bf16.xpose.msra.mxu0 0
      %1640 = vmatprep.subr.bf16.mxu0 0
      %1641 = vmatpush1.bf16.xpose.msra.mxu0 0
      %1642 = vmatprep.subr.bf16.mxu0 0
      %1643 = vmatpush1.bf16.xpose.msra.mxu0 0
      %1644 = vmatprep.subr.bf16.mxu0 0
      %1645 = vmatpush1.bf16.xpose.msra.mxu0 0
      %1646 = vmatprep.subr.bf16.mxu0 0
      %1647 = vmatpush1.bf16.xpose.msra.mxu0 0
      %1648 = vmatprep.subr.bf16.mxu0 0
      %1649 = vmatpush1.bf16.xpose.msra.mxu0 0
      %1650 = vmatprep.subr.bf16.mxu0 0
      %1651 = vmatpush1.bf16.xpose.msra.mxu0 0
      %1652 = vmatprep.subr.bf16.mxu0 0
      %1653 = vmatpush1.bf16.xpose.msra.mxu0 0
      %1654 = vmatprep.mubr.bf16.mxu0 0
      %1655 = vmatmul.mubr.bf16.gmra.mrb[0].mxu0 %v1617
      %v1656 = vpop.f32.mrb[0].mxu0
      %v1657 = vadd.f32 %v701, %v1656
      %v1658 = vpop.f32.mrb[0].mxu0
      %v1659 = vpop.f32.mrb[0].mxu0
      %v1660 = vpop.f32.mrb[0].mxu0
      %1661 = vdwg.mxu0
      %1663 = vrot.lane.b32.xlu0 %v627, 96
      %v1664 = vpop.permute.xlu0 %1663
      %v1666 = vsel %vm733, %v595, 0
      %v1669 = vsel %vm733, %v1664, 0
      %1671 = vmatprep.subr.bf16.mxu0 0
      %1672 = vmatpush1.bf16.xpose.msra.mxu0 %v1669
      %1673 = vmatprep.subr.bf16.mxu0 0
      %1674 = vmatpush1.bf16.xpose.msra.mxu0 0
      %1675 = vmatprep.subr.bf16.mxu0 0
      %1676 = vmatpush1.bf16.xpose.msra.mxu0 0
      %1677 = vmatprep.subr.bf16.mxu0 0
      %1678 = vmatpush1.bf16.xpose.msra.mxu0 0
      %1679 = vmatprep.subr.bf16.mxu0 0
      %1680 = vmatpush1.bf16.xpose.msra.mxu0 0
      %1681 = vmatprep.subr.bf16.mxu0 0
      %1682 = vmatpush1.bf16.xpose.msra.mxu0 0
      %1683 = vmatprep.subr.bf16.mxu0 0
      %1684 = vmatpush1.bf16.xpose.msra.mxu0 0
      %1685 = vmatprep.subr.bf16.mxu0 0
      %1686 = vmatpush1.bf16.xpose.msra.mxu0 0
      %1687 = vmatprep.subr.bf16.mxu0 0
      %1688 = vmatpush1.bf16.xpose.msra.mxu0 0
      %1689 = vmatprep.subr.bf16.mxu0 0
      %1690 = vmatpush1.bf16.xpose.msra.mxu0 0
      %1691 = vmatprep.subr.bf16.mxu0 0
      %1692 = vmatpush1.bf16.xpose.msra.mxu0 0
      %1693 = vmatprep.subr.bf16.mxu0 0
      %1694 = vmatpush1.bf16.xpose.msra.mxu0 0
      %1695 = vmatprep.subr.bf16.mxu0 0
      %1696 = vmatpush1.bf16.xpose.msra.mxu0 0
      %1697 = vmatprep.subr.bf16.mxu0 0
      %1698 = vmatpush1.bf16.xpose.msra.mxu0 0
      %1699 = vmatprep.subr.bf16.mxu0 0
      %1700 = vmatpush1.bf16.xpose.msra.mxu0 0
      %1701 = vmatprep.subr.bf16.mxu0 0
      %1702 = vmatpush1.bf16.xpose.msra.mxu0 0
      %1703 = vmatprep.mubr.bf16.mxu0 0
      %1704 = vmatmul.mubr.bf16.gmra.mrb[0].mxu0 %v1666
      %v1705 = vpop.f32.mrb[0].mxu0
      %v1706 = vadd.f32 %v705, %v1705
      %v1707 = vpop.f32.mrb[0].mxu0
      %v1708 = vpop.f32.mrb[0].mxu0
      %v1709 = vpop.f32.mrb[0].mxu0
      %1710 = vdwg.mxu0
      %1712 = vrot.lane.b32.xlu0 %v628, 96
      %v1713 = vpop.permute.xlu0 %1712
      %v1715 = vsel %vm733, %v596, 0
      %v1718 = vsel %vm733, %v1713, 0
      %1720 = vmatprep.subr.bf16.mxu0 0
      %1721 = vmatpush1.bf16.xpose.msra.mxu0 %v1718
      %1722 = vmatprep.subr.bf16.mxu0 0
      %1723 = vmatpush1.bf16.xpose.msra.mxu0 0
      %1724 = vmatprep.subr.bf16.mxu0 0
      %1725 = vmatpush1.bf16.xpose.msra.mxu0 0
      %1726 = vmatprep.subr.bf16.mxu0 0
      %1727 = vmatpush1.bf16.xpose.msra.mxu0 0
      %1728 = vmatprep.subr.bf16.mxu0 0
      %1729 = vmatpush1.bf16.xpose.msra.mxu0 0
      %1730 = vmatprep.subr.bf16.mxu0 0
      %1731 = vmatpush1.bf16.xpose.msra.mxu0 0
      %1732 = vmatprep.subr.bf16.mxu0 0
      %1733 = vmatpush1.bf16.xpose.msra.mxu0 0
      %1734 = vmatprep.subr.bf16.mxu0 0
      %1735 = vmatpush1.bf16.xpose.msra.mxu0 0
      %1736 = vmatprep.subr.bf16.mxu0 0
      %1737 = vmatpush1.bf16.xpose.msra.mxu0 0
      %1738 = vmatprep.subr.bf16.mxu0 0
      %1739 = vmatpush1.bf16.xpose.msra.mxu0 0
      %1740 = vmatprep.subr.bf16.mxu0 0
      %1741 = vmatpush1.bf16.xpose.msra.mxu0 0
      %1742 = vmatprep.subr.bf16.mxu0 0
      %1743 = vmatpush1.bf16.xpose.msra.mxu0 0
      %1744 = vmatprep.subr.bf16.mxu0 0
      %1745 = vmatpush1.bf16.xpose.msra.mxu0 0
      %1746 = vmatprep.subr.bf16.mxu0 0
      %1747 = vmatpush1.bf16.xpose.msra.mxu0 0
      %1748 = vmatprep.subr.bf16.mxu0 0
      %1749 = vmatpush1.bf16.xpose.msra.mxu0 0
      %1750 = vmatprep.subr.bf16.mxu0 0
      %1751 = vmatpush1.bf16.xpose.msra.mxu0 0
      %1752 = vmatprep.mubr.bf16.mxu0 0
      %1753 = vmatmul.mubr.bf16.gmra.mrb[0].mxu0 %v1715
      %v1754 = vpop.f32.mrb[0].mxu0
      %v1755 = vadd.f32 %v709, %v1754
      %v1756 = vpop.f32.mrb[0].mxu0
      %v1757 = vpop.f32.mrb[0].mxu0
      %v1758 = vpop.f32.mrb[0].mxu0
      %1759 = vdwg.mxu0
      %1761 = vrot.lane.b32.xlu0 %v629, 96
      %v1762 = vpop.permute.xlu0 %1761
      %v1764 = vsel %vm733, %v597, 0
      %v1767 = vsel %vm733, %v1762, 0
      %1769 = vmatprep.subr.bf16.mxu0 0
      %1770 = vmatpush1.bf16.xpose.msra.mxu0 %v1767
      %1771 = vmatprep.subr.bf16.mxu0 0
      %1772 = vmatpush1.bf16.xpose.msra.mxu0 0
      %1773 = vmatprep.subr.bf16.mxu0 0
      %1774 = vmatpush1.bf16.xpose.msra.mxu0 0
      %1775 = vmatprep.subr.bf16.mxu0 0
      %1776 = vmatpush1.bf16.xpose.msra.mxu0 0
      %1777 = vmatprep.subr.bf16.mxu0 0
      %1778 = vmatpush1.bf16.xpose.msra.mxu0 0
      %1779 = vmatprep.subr.bf16.mxu0 0
      %1780 = vmatpush1.bf16.xpose.msra.mxu0 0
      %1781 = vmatprep.subr.bf16.mxu0 0
      %1782 = vmatpush1.bf16.xpose.msra.mxu0 0
      %1783 = vmatprep.subr.bf16.mxu0 0
      %1784 = vmatpush1.bf16.xpose.msra.mxu0 0
      %1785 = vmatprep.subr.bf16.mxu0 0
      %1786 = vmatpush1.bf16.xpose.msra.mxu0 0
      %1787 = vmatprep.subr.bf16.mxu0 0
      %1788 = vmatpush1.bf16.xpose.msra.mxu0 0
      %1789 = vmatprep.subr.bf16.mxu0 0
      %1790 = vmatpush1.bf16.xpose.msra.mxu0 0
      %1791 = vmatprep.subr.bf16.mxu0 0
      %1792 = vmatpush1.bf16.xpose.msra.mxu0 0
      %1793 = vmatprep.subr.bf16.mxu0 0
      %1794 = vmatpush1.bf16.xpose.msra.mxu0 0
      %1795 = vmatprep.subr.bf16.mxu0 0
      %1796 = vmatpush1.bf16.xpose.msra.mxu0 0
      %1797 = vmatprep.subr.bf16.mxu0 0
      %1798 = vmatpush1.bf16.xpose.msra.mxu0 0
      %1799 = vmatprep.subr.bf16.mxu0 0
      %1800 = vmatpush1.bf16.xpose.msra.mxu0 0
      %1801 = vmatprep.mubr.bf16.mxu0 0
      %1802 = vmatmul.mubr.bf16.gmra.mrb[0].mxu0 %v1764
      %v1803 = vpop.f32.mrb[0].mxu0
      %v1804 = vadd.f32 %v713, %v1803
      %v1805 = vpop.f32.mrb[0].mxu0
      %v1806 = vpop.f32.mrb[0].mxu0
      %v1807 = vpop.f32.mrb[0].mxu0
      %1808 = vdwg.mxu0
      %1810 = vrot.lane.b32.xlu0 %v630, 96
      %v1811 = vpop.permute.xlu0 %1810
      %v1813 = vsel %vm733, %v598, 0
      %v1816 = vsel %vm733, %v1811, 0
      %1818 = vmatprep.subr.bf16.mxu0 0
      %1819 = vmatpush1.bf16.xpose.msra.mxu0 %v1816
      %1820 = vmatprep.subr.bf16.mxu0 0
      %1821 = vmatpush1.bf16.xpose.msra.mxu0 0
      %1822 = vmatprep.subr.bf16.mxu0 0
      %1823 = vmatpush1.bf16.xpose.msra.mxu0 0
      %1824 = vmatprep.subr.bf16.mxu0 0
      %1825 = vmatpush1.bf16.xpose.msra.mxu0 0
      %1826 = vmatprep.subr.bf16.mxu0 0
      %1827 = vmatpush1.bf16.xpose.msra.mxu0 0
      %1828 = vmatprep.subr.bf16.mxu0 0
      %1829 = vmatpush1.bf16.xpose.msra.mxu0 0
      %1830 = vmatprep.subr.bf16.mxu0 0
      %1831 = vmatpush1.bf16.xpose.msra.mxu0 0
      %1832 = vmatprep.subr.bf16.mxu0 0
      %1833 = vmatpush1.bf16.xpose.msra.mxu0 0
      %1834 = vmatprep.subr.bf16.mxu0 0
      %1835 = vmatpush1.bf16.xpose.msra.mxu0 0
      %1836 = vmatprep.subr.bf16.mxu0 0
      %1837 = vmatpush1.bf16.xpose.msra.mxu0 0
      %1838 = vmatprep.subr.bf16.mxu0 0
      %1839 = vmatpush1.bf16.xpose.msra.mxu0 0
      %1840 = vmatprep.subr.bf16.mxu0 0
      %1841 = vmatpush1.bf16.xpose.msra.mxu0 0
      %1842 = vmatprep.subr.bf16.mxu0 0
      %1843 = vmatpush1.bf16.xpose.msra.mxu0 0
      %1844 = vmatprep.subr.bf16.mxu0 0
      %1845 = vmatpush1.bf16.xpose.msra.mxu0 0
      %1846 = vmatprep.subr.bf16.mxu0 0
      %1847 = vmatpush1.bf16.xpose.msra.mxu0 0
      %1848 = vmatprep.subr.bf16.mxu0 0
      %1849 = vmatpush1.bf16.xpose.msra.mxu0 0
      %1850 = vmatprep.mubr.bf16.mxu0 0
      %1851 = vmatmul.mubr.bf16.gmra.mrb[0].mxu0 %v1813
      %v1852 = vpop.f32.mrb[0].mxu0
      %v1853 = vadd.f32 %v717, %v1852
      %v1854 = vpop.f32.mrb[0].mxu0
      %v1855 = vpop.f32.mrb[0].mxu0
      %v1856 = vpop.f32.mrb[0].mxu0
      %1857 = vdwg.mxu0
      %1859 = vrot.lane.b32.xlu0 %v631, 96
      %v1860 = vpop.permute.xlu0 %1859
      %v1862 = vsel %vm733, %v599, 0
      %v1865 = vsel %vm733, %v1860, 0
      %1867 = vmatprep.subr.bf16.mxu0 0
      %1868 = vmatpush1.bf16.xpose.msra.mxu0 %v1865
      %1869 = vmatprep.subr.bf16.mxu0 0
      %1870 = vmatpush1.bf16.xpose.msra.mxu0 0
      %1871 = vmatprep.subr.bf16.mxu0 0
      %1872 = vmatpush1.bf16.xpose.msra.mxu0 0
      %1873 = vmatprep.subr.bf16.mxu0 0
      %1874 = vmatpush1.bf16.xpose.msra.mxu0 0
      %1875 = vmatprep.subr.bf16.mxu0 0
      %1876 = vmatpush1.bf16.xpose.msra.mxu0 0
      %1877 = vmatprep.subr.bf16.mxu0 0
      %1878 = vmatpush1.bf16.xpose.msra.mxu0 0
      %1879 = vmatprep.subr.bf16.mxu0 0
      %1880 = vmatpush1.bf16.xpose.msra.mxu0 0
      %1881 = vmatprep.subr.bf16.mxu0 0
      %1882 = vmatpush1.bf16.xpose.msra.mxu0 0
      %1883 = vmatprep.subr.bf16.mxu0 0
      %1884 = vmatpush1.bf16.xpose.msra.mxu0 0
      %1885 = vmatprep.subr.bf16.mxu0 0
      %1886 = vmatpush1.bf16.xpose.msra.mxu0 0
      %1887 = vmatprep.subr.bf16.mxu0 0
      %1888 = vmatpush1.bf16.xpose.msra.mxu0 0
      %1889 = vmatprep.subr.bf16.mxu0 0
      %1890 = vmatpush1.bf16.xpose.msra.mxu0 0
      %1891 = vmatprep.subr.bf16.mxu0 0
      %1892 = vmatpush1.bf16.xpose.msra.mxu0 0
      %1893 = vmatprep.subr.bf16.mxu0 0
      %1894 = vmatpush1.bf16.xpose.msra.mxu0 0
      %1895 = vmatprep.subr.bf16.mxu0 0
      %1896 = vmatpush1.bf16.xpose.msra.mxu0 0
      %1897 = vmatprep.subr.bf16.mxu0 0
      %1898 = vmatpush1.bf16.xpose.msra.mxu0 0
      %1899 = vmatprep.mubr.bf16.mxu0 0
      %1900 = vmatmul.mubr.bf16.gmra.mrb[0].mxu0 %v1862
      %v1901 = vpop.f32.mrb[0].mxu0
      %v1902 = vadd.f32 %v721, %v1901
      %v1903 = vpop.f32.mrb[0].mxu0
      %v1904 = vpop.f32.mrb[0].mxu0
      %v1905 = vpop.f32.mrb[0].mxu0
      %1906 = vdwg.mxu0
      %1908 = vrot.lane.b32.xlu0 %v632, 96
      %v1909 = vpop.permute.xlu0 %1908
      %v1911 = vsel %vm733, %v600, 0
      %v1914 = vsel %vm733, %v1909, 0
      %1916 = vmatprep.subr.bf16.mxu0 0
      %1917 = vmatpush1.bf16.xpose.msra.mxu0 %v1914
      %1918 = vmatprep.subr.bf16.mxu0 0
      %1919 = vmatpush1.bf16.xpose.msra.mxu0 0
      %1920 = vmatprep.subr.bf16.mxu0 0
      %1921 = vmatpush1.bf16.xpose.msra.mxu0 0
      %1922 = vmatprep.subr.bf16.mxu0 0
      %1923 = vmatpush1.bf16.xpose.msra.mxu0 0
      %1924 = vmatprep.subr.bf16.mxu0 0
      %1925 = vmatpush1.bf16.xpose.msra.mxu0 0
      %1926 = vmatprep.subr.bf16.mxu0 0
      %1927 = vmatpush1.bf16.xpose.msra.mxu0 0
      %1928 = vmatprep.subr.bf16.mxu0 0
      %1929 = vmatpush1.bf16.xpose.msra.mxu0 0
      %1930 = vmatprep.subr.bf16.mxu0 0
      %1931 = vmatpush1.bf16.xpose.msra.mxu0 0
      %1932 = vmatprep.subr.bf16.mxu0 0
      %1933 = vmatpush1.bf16.xpose.msra.mxu0 0
      %1934 = vmatprep.subr.bf16.mxu0 0
      %1935 = vmatpush1.bf16.xpose.msra.mxu0 0
      %1936 = vmatprep.subr.bf16.mxu0 0
      %1937 = vmatpush1.bf16.xpose.msra.mxu0 0
      %1938 = vmatprep.subr.bf16.mxu0 0
      %1939 = vmatpush1.bf16.xpose.msra.mxu0 0
      %1940 = vmatprep.subr.bf16.mxu0 0
      %1941 = vmatpush1.bf16.xpose.msra.mxu0 0
      %1942 = vmatprep.subr.bf16.mxu0 0
      %1943 = vmatpush1.bf16.xpose.msra.mxu0 0
      %1944 = vmatprep.subr.bf16.mxu0 0
      %1945 = vmatpush1.bf16.xpose.msra.mxu0 0
      %1946 = vmatprep.subr.bf16.mxu0 0
      %1947 = vmatpush1.bf16.xpose.msra.mxu0 0
      %1948 = vmatprep.mubr.bf16.mxu0 0
      %1949 = vmatmul.mubr.bf16.gmra.mrb[0].mxu0 %v1911
      %v1950 = vpop.f32.mrb[0].mxu0
      %v1951 = vadd.f32 %v693, %v1950
      %v1952 = vpop.f32.mrb[0].mxu0
      %v1953 = vpop.f32.mrb[0].mxu0
      %v1954 = vpop.f32.mrb[0].mxu0
      %1955 = vdwg.mxu0
      %1957 = vrot.lane.b32.xlu0 %v633, 96
      %v1958 = vpop.permute.xlu0 %1957
      %v1960 = vsel %vm733, %v601, 0
      %v1963 = vsel %vm733, %v1958, 0
      %1965 = vmatprep.subr.bf16.mxu0 0
      %1966 = vmatpush1.bf16.xpose.msra.mxu0 %v1963
      %1967 = vmatprep.subr.bf16.mxu0 0
      %1968 = vmatpush1.bf16.xpose.msra.mxu0 0
      %1969 = vmatprep.subr.bf16.mxu0 0
      %1970 = vmatpush1.bf16.xpose.msra.mxu0 0
      %1971 = vmatprep.subr.bf16.mxu0 0
      %1972 = vmatpush1.bf16.xpose.msra.mxu0 0
      %1973 = vmatprep.subr.bf16.mxu0 0
      %1974 = vmatpush1.bf16.xpose.msra.mxu0 0
      %1975 = vmatprep.subr.bf16.mxu0 0
      %1976 = vmatpush1.bf16.xpose.msra.mxu0 0
      %1977 = vmatprep.subr.bf16.mxu0 0
      %1978 = vmatpush1.bf16.xpose.msra.mxu0 0
      %1979 = vmatprep.subr.bf16.mxu0 0
      %1980 = vmatpush1.bf16.xpose.msra.mxu0 0
      %1981 = vmatprep.subr.bf16.mxu0 0
      %1982 = vmatpush1.bf16.xpose.msra.mxu0 0
      %1983 = vmatprep.subr.bf16.mxu0 0
      %1984 = vmatpush1.bf16.xpose.msra.mxu0 0
      %1985 = vmatprep.subr.bf16.mxu0 0
      %1986 = vmatpush1.bf16.xpose.msra.mxu0 0
      %1987 = vmatprep.subr.bf16.mxu0 0
      %1988 = vmatpush1.bf16.xpose.msra.mxu0 0
      %1989 = vmatprep.subr.bf16.mxu0 0
      %1990 = vmatpush1.bf16.xpose.msra.mxu0 0
      %1991 = vmatprep.subr.bf16.mxu0 0
      %1992 = vmatpush1.bf16.xpose.msra.mxu0 0
      %1993 = vmatprep.subr.bf16.mxu0 0
      %1994 = vmatpush1.bf16.xpose.msra.mxu0 0
      %1995 = vmatprep.subr.bf16.mxu0 0
      %1996 = vmatpush1.bf16.xpose.msra.mxu0 0
      %1997 = vmatprep.mubr.bf16.mxu0 0
      %1998 = vmatmul.mubr.bf16.gmra.mrb[0].mxu0 %v1960
      %v1999 = vpop.f32.mrb[0].mxu0
      %v2000 = vadd.f32 %v697, %v1999
      %v2001 = vpop.f32.mrb[0].mxu0
      %v2002 = vpop.f32.mrb[0].mxu0
      %v2003 = vpop.f32.mrb[0].mxu0
      %2004 = vdwg.mxu0
      %2006 = vrot.lane.b32.xlu0 %v634, 96
      %v2007 = vpop.permute.xlu0 %2006
      %v2009 = vsel %vm733, %v602, 0
      %v2012 = vsel %vm733, %v2007, 0
      %2014 = vmatprep.subr.bf16.mxu0 0
      %2015 = vmatpush1.bf16.xpose.msra.mxu0 %v2012
      %2016 = vmatprep.subr.bf16.mxu0 0
      %2017 = vmatpush1.bf16.xpose.msra.mxu0 0
      %2018 = vmatprep.subr.bf16.mxu0 0
      %2019 = vmatpush1.bf16.xpose.msra.mxu0 0
      %2020 = vmatprep.subr.bf16.mxu0 0
      %2021 = vmatpush1.bf16.xpose.msra.mxu0 0
      %2022 = vmatprep.subr.bf16.mxu0 0
      %2023 = vmatpush1.bf16.xpose.msra.mxu0 0
      %2024 = vmatprep.subr.bf16.mxu0 0
      %2025 = vmatpush1.bf16.xpose.msra.mxu0 0
      %2026 = vmatprep.subr.bf16.mxu0 0
      %2027 = vmatpush1.bf16.xpose.msra.mxu0 0
      %2028 = vmatprep.subr.bf16.mxu0 0
      %2029 = vmatpush1.bf16.xpose.msra.mxu0 0
      %2030 = vmatprep.subr.bf16.mxu0 0
      %2031 = vmatpush1.bf16.xpose.msra.mxu0 0
      %2032 = vmatprep.subr.bf16.mxu0 0
      %2033 = vmatpush1.bf16.xpose.msra.mxu0 0
      %2034 = vmatprep.subr.bf16.mxu0 0
      %2035 = vmatpush1.bf16.xpose.msra.mxu0 0
      %2036 = vmatprep.subr.bf16.mxu0 0
      %2037 = vmatpush1.bf16.xpose.msra.mxu0 0
      %2038 = vmatprep.subr.bf16.mxu0 0
      %2039 = vmatpush1.bf16.xpose.msra.mxu0 0
      %2040 = vmatprep.subr.bf16.mxu0 0
      %2041 = vmatpush1.bf16.xpose.msra.mxu0 0
      %2042 = vmatprep.subr.bf16.mxu0 0
      %2043 = vmatpush1.bf16.xpose.msra.mxu0 0
      %2044 = vmatprep.subr.bf16.mxu0 0
      %2045 = vmatpush1.bf16.xpose.msra.mxu0 0
      %2046 = vmatprep.mubr.bf16.mxu0 0
      %2047 = vmatmul.mubr.bf16.gmra.mrb[0].mxu0 %v2009
      %v2048 = vpop.f32.mrb[0].mxu0
      %v2049 = vadd.f32 %v701, %v2048
      %v2050 = vpop.f32.mrb[0].mxu0
      %v2051 = vpop.f32.mrb[0].mxu0
      %v2052 = vpop.f32.mrb[0].mxu0
      %2053 = vdwg.mxu0
      %2055 = vrot.lane.b32.xlu0 %v635, 96
      %v2056 = vpop.permute.xlu0 %2055
      %v2058 = vsel %vm733, %v603, 0
      %v2061 = vsel %vm733, %v2056, 0
      %2063 = vmatprep.subr.bf16.mxu0 0
      %2064 = vmatpush1.bf16.xpose.msra.mxu0 %v2061
      %2065 = vmatprep.subr.bf16.mxu0 0
      %2066 = vmatpush1.bf16.xpose.msra.mxu0 0
      %2067 = vmatprep.subr.bf16.mxu0 0
      %2068 = vmatpush1.bf16.xpose.msra.mxu0 0
      %2069 = vmatprep.subr.bf16.mxu0 0
      %2070 = vmatpush1.bf16.xpose.msra.mxu0 0
      %2071 = vmatprep.subr.bf16.mxu0 0
      %2072 = vmatpush1.bf16.xpose.msra.mxu0 0
      %2073 = vmatprep.subr.bf16.mxu0 0
      %2074 = vmatpush1.bf16.xpose.msra.mxu0 0
      %2075 = vmatprep.subr.bf16.mxu0 0
      %2076 = vmatpush1.bf16.xpose.msra.mxu0 0
      %2077 = vmatprep.subr.bf16.mxu0 0
      %2078 = vmatpush1.bf16.xpose.msra.mxu0 0
      %2079 = vmatprep.subr.bf16.mxu0 0
      %2080 = vmatpush1.bf16.xpose.msra.mxu0 0
      %2081 = vmatprep.subr.bf16.mxu0 0
      %2082 = vmatpush1.bf16.xpose.msra.mxu0 0
      %2083 = vmatprep.subr.bf16.mxu0 0
      %2084 = vmatpush1.bf16.xpose.msra.mxu0 0
      %2085 = vmatprep.subr.bf16.mxu0 0
      %2086 = vmatpush1.bf16.xpose.msra.mxu0 0
      %2087 = vmatprep.subr.bf16.mxu0 0
      %2088 = vmatpush1.bf16.xpose.msra.mxu0 0
      %2089 = vmatprep.subr.bf16.mxu0 0
      %2090 = vmatpush1.bf16.xpose.msra.mxu0 0
      %2091 = vmatprep.subr.bf16.mxu0 0
      %2092 = vmatpush1.bf16.xpose.msra.mxu0 0
      %2093 = vmatprep.subr.bf16.mxu0 0
      %2094 = vmatpush1.bf16.xpose.msra.mxu0 0
      %2095 = vmatprep.mubr.bf16.mxu0 0
      %2096 = vmatmul.mubr.bf16.gmra.mrb[0].mxu0 %v2058
      %v2097 = vpop.f32.mrb[0].mxu0
      %v2098 = vadd.f32 %v705, %v2097
      %v2099 = vpop.f32.mrb[0].mxu0
      %v2100 = vpop.f32.mrb[0].mxu0
      %v2101 = vpop.f32.mrb[0].mxu0
      %2102 = vdwg.mxu0
      %2104 = vrot.lane.b32.xlu0 %v636, 96
      %v2105 = vpop.permute.xlu0 %2104
      %v2107 = vsel %vm733, %v604, 0
      %v2110 = vsel %vm733, %v2105, 0
      %2112 = vmatprep.subr.bf16.mxu0 0
      %2113 = vmatpush1.bf16.xpose.msra.mxu0 %v2110
      %2114 = vmatprep.subr.bf16.mxu0 0
      %2115 = vmatpush1.bf16.xpose.msra.mxu0 0
      %2116 = vmatprep.subr.bf16.mxu0 0
      %2117 = vmatpush1.bf16.xpose.msra.mxu0 0
      %2118 = vmatprep.subr.bf16.mxu0 0
      %2119 = vmatpush1.bf16.xpose.msra.mxu0 0
      %2120 = vmatprep.subr.bf16.mxu0 0
      %2121 = vmatpush1.bf16.xpose.msra.mxu0 0
      %2122 = vmatprep.subr.bf16.mxu0 0
      %2123 = vmatpush1.bf16.xpose.msra.mxu0 0
      %2124 = vmatprep.subr.bf16.mxu0 0
      %2125 = vmatpush1.bf16.xpose.msra.mxu0 0
      %2126 = vmatprep.subr.bf16.mxu0 0
      %2127 = vmatpush1.bf16.xpose.msra.mxu0 0
      %2128 = vmatprep.subr.bf16.mxu0 0
      %2129 = vmatpush1.bf16.xpose.msra.mxu0 0
      %2130 = vmatprep.subr.bf16.mxu0 0
      %2131 = vmatpush1.bf16.xpose.msra.mxu0 0
      %2132 = vmatprep.subr.bf16.mxu0 0
      %2133 = vmatpush1.bf16.xpose.msra.mxu0 0
      %2134 = vmatprep.subr.bf16.mxu0 0
      %2135 = vmatpush1.bf16.xpose.msra.mxu0 0
      %2136 = vmatprep.subr.bf16.mxu0 0
      %2137 = vmatpush1.bf16.xpose.msra.mxu0 0
      %2138 = vmatprep.subr.bf16.mxu0 0
      %2139 = vmatpush1.bf16.xpose.msra.mxu0 0
      %2140 = vmatprep.subr.bf16.mxu0 0
      %2141 = vmatpush1.bf16.xpose.msra.mxu0 0
      %2142 = vmatprep.subr.bf16.mxu0 0
      %2143 = vmatpush1.bf16.xpose.msra.mxu0 0
      %2144 = vmatprep.mubr.bf16.mxu0 0
      %2145 = vmatmul.mubr.bf16.gmra.mrb[0].mxu0 %v2107
      %v2146 = vpop.f32.mrb[0].mxu0
      %v2147 = vadd.f32 %v709, %v2146
      %v2148 = vpop.f32.mrb[0].mxu0
      %v2149 = vpop.f32.mrb[0].mxu0
      %v2150 = vpop.f32.mrb[0].mxu0
      %2151 = vdwg.mxu0
      %2153 = vrot.lane.b32.xlu0 %v637, 96
      %v2154 = vpop.permute.xlu0 %2153
      %v2156 = vsel %vm733, %v605, 0
      %v2159 = vsel %vm733, %v2154, 0
      %2161 = vmatprep.subr.bf16.mxu0 0
      %2162 = vmatpush1.bf16.xpose.msra.mxu0 %v2159
      %2163 = vmatprep.subr.bf16.mxu0 0
      %2164 = vmatpush1.bf16.xpose.msra.mxu0 0
      %2165 = vmatprep.subr.bf16.mxu0 0
      %2166 = vmatpush1.bf16.xpose.msra.mxu0 0
      %2167 = vmatprep.subr.bf16.mxu0 0
      %2168 = vmatpush1.bf16.xpose.msra.mxu0 0
      %2169 = vmatprep.subr.bf16.mxu0 0
      %2170 = vmatpush1.bf16.xpose.msra.mxu0 0
      %2171 = vmatprep.subr.bf16.mxu0 0
      %2172 = vmatpush1.bf16.xpose.msra.mxu0 0
      %2173 = vmatprep.subr.bf16.mxu0 0
      %2174 = vmatpush1.bf16.xpose.msra.mxu0 0
      %2175 = vmatprep.subr.bf16.mxu0 0
      %2176 = vmatpush1.bf16.xpose.msra.mxu0 0
      %2177 = vmatprep.subr.bf16.mxu0 0
      %2178 = vmatpush1.bf16.xpose.msra.mxu0 0
      %2179 = vmatprep.subr.bf16.mxu0 0
      %2180 = vmatpush1.bf16.xpose.msra.mxu0 0
      %2181 = vmatprep.subr.bf16.mxu0 0
      %2182 = vmatpush1.bf16.xpose.msra.mxu0 0
      %2183 = vmatprep.subr.bf16.mxu0 0
      %2184 = vmatpush1.bf16.xpose.msra.mxu0 0
      %2185 = vmatprep.subr.bf16.mxu0 0
      %2186 = vmatpush1.bf16.xpose.msra.mxu0 0
      %2187 = vmatprep.subr.bf16.mxu0 0
      %2188 = vmatpush1.bf16.xpose.msra.mxu0 0
      %2189 = vmatprep.subr.bf16.mxu0 0
      %2190 = vmatpush1.bf16.xpose.msra.mxu0 0
      %2191 = vmatprep.subr.bf16.mxu0 0
      %2192 = vmatpush1.bf16.xpose.msra.mxu0 0
      %2193 = vmatprep.mubr.bf16.mxu0 0
      %2194 = vmatmul.mubr.bf16.gmra.mrb[0].mxu0 %v2156
      %v2195 = vpop.f32.mrb[0].mxu0
      %v2196 = vadd.f32 %v713, %v2195
      %v2197 = vpop.f32.mrb[0].mxu0
      %v2198 = vpop.f32.mrb[0].mxu0
      %v2199 = vpop.f32.mrb[0].mxu0
      %2200 = vdwg.mxu0
      %2202 = vrot.lane.b32.xlu0 %v638, 96
      %v2203 = vpop.permute.xlu0 %2202
      %v2205 = vsel %vm733, %v606, 0
      %v2208 = vsel %vm733, %v2203, 0
      %2210 = vmatprep.subr.bf16.mxu0 0
      %2211 = vmatpush1.bf16.xpose.msra.mxu0 %v2208
      %2212 = vmatprep.subr.bf16.mxu0 0
      %2213 = vmatpush1.bf16.xpose.msra.mxu0 0
      %2214 = vmatprep.subr.bf16.mxu0 0
      %2215 = vmatpush1.bf16.xpose.msra.mxu0 0
      %2216 = vmatprep.subr.bf16.mxu0 0
      %2217 = vmatpush1.bf16.xpose.msra.mxu0 0
      %2218 = vmatprep.subr.bf16.mxu0 0
      %2219 = vmatpush1.bf16.xpose.msra.mxu0 0
      %2220 = vmatprep.subr.bf16.mxu0 0
      %2221 = vmatpush1.bf16.xpose.msra.mxu0 0
      %2222 = vmatprep.subr.bf16.mxu0 0
      %2223 = vmatpush1.bf16.xpose.msra.mxu0 0
      %2224 = vmatprep.subr.bf16.mxu0 0
      %2225 = vmatpush1.bf16.xpose.msra.mxu0 0
      %2226 = vmatprep.subr.bf16.mxu0 0
      %2227 = vmatpush1.bf16.xpose.msra.mxu0 0
      %2228 = vmatprep.subr.bf16.mxu0 0
      %2229 = vmatpush1.bf16.xpose.msra.mxu0 0
      %2230 = vmatprep.subr.bf16.mxu0 0
      %2231 = vmatpush1.bf16.xpose.msra.mxu0 0
      %2232 = vmatprep.subr.bf16.mxu0 0
      %2233 = vmatpush1.bf16.xpose.msra.mxu0 0
      %2234 = vmatprep.subr.bf16.mxu0 0
      %2235 = vmatpush1.bf16.xpose.msra.mxu0 0
      %2236 = vmatprep.subr.bf16.mxu0 0
      %2237 = vmatpush1.bf16.xpose.msra.mxu0 0
      %2238 = vmatprep.subr.bf16.mxu0 0
      %2239 = vmatpush1.bf16.xpose.msra.mxu0 0
      %2240 = vmatprep.subr.bf16.mxu0 0
      %2241 = vmatpush1.bf16.xpose.msra.mxu0 0
      %2242 = vmatprep.mubr.bf16.mxu0 0
      %2243 = vmatmul.mubr.bf16.gmra.mrb[0].mxu0 %v2205
      %v2244 = vpop.f32.mrb[0].mxu0
      %v2245 = vadd.f32 %v717, %v2244
      %v2246 = vpop.f32.mrb[0].mxu0
      %v2247 = vpop.f32.mrb[0].mxu0
      %v2248 = vpop.f32.mrb[0].mxu0
      %2249 = vdwg.mxu0
      %2251 = vrot.lane.b32.xlu0 %v639, 96
      %v2252 = vpop.permute.xlu0 %2251
      %v2254 = vsel %vm733, %v607, 0
      %v2257 = vsel %vm733, %v2252, 0
      %2259 = vmatprep.subr.bf16.mxu0 0
      %2260 = vmatpush1.bf16.xpose.msra.mxu0 %v2257
      %2261 = vmatprep.subr.bf16.mxu0 0
      %2262 = vmatpush1.bf16.xpose.msra.mxu0 0
      %2263 = vmatprep.subr.bf16.mxu0 0
      %2264 = vmatpush1.bf16.xpose.msra.mxu0 0
      %2265 = vmatprep.subr.bf16.mxu0 0
      %2266 = vmatpush1.bf16.xpose.msra.mxu0 0
      %2267 = vmatprep.subr.bf16.mxu0 0
      %2268 = vmatpush1.bf16.xpose.msra.mxu0 0
      %2269 = vmatprep.subr.bf16.mxu0 0
      %2270 = vmatpush1.bf16.xpose.msra.mxu0 0
      %2271 = vmatprep.subr.bf16.mxu0 0
      %2272 = vmatpush1.bf16.xpose.msra.mxu0 0
      %2273 = vmatprep.subr.bf16.mxu0 0
      %2274 = vmatpush1.bf16.xpose.msra.mxu0 0
      %2275 = vmatprep.subr.bf16.mxu0 0
      %2276 = vmatpush1.bf16.xpose.msra.mxu0 0
      %2277 = vmatprep.subr.bf16.mxu0 0
      %2278 = vmatpush1.bf16.xpose.msra.mxu0 0
      %2279 = vmatprep.subr.bf16.mxu0 0
      %2280 = vmatpush1.bf16.xpose.msra.mxu0 0
      %2281 = vmatprep.subr.bf16.mxu0 0
      %2282 = vmatpush1.bf16.xpose.msra.mxu0 0
      %2283 = vmatprep.subr.bf16.mxu0 0
      %2284 = vmatpush1.bf16.xpose.msra.mxu0 0
      %2285 = vmatprep.subr.bf16.mxu0 0
      %2286 = vmatpush1.bf16.xpose.msra.mxu0 0
      %2287 = vmatprep.subr.bf16.mxu0 0
      %2288 = vmatpush1.bf16.xpose.msra.mxu0 0
      %2289 = vmatprep.subr.bf16.mxu0 0
      %2290 = vmatpush1.bf16.xpose.msra.mxu0 0
      %2291 = vmatprep.mubr.bf16.mxu0 0
      %2292 = vmatmul.mubr.bf16.gmra.mrb[0].mxu0 %v2254
      %v2293 = vpop.f32.mrb[0].mxu0
      %v2294 = vadd.f32 %v721, %v2293
      %v2295 = vpop.f32.mrb[0].mxu0
      %v2296 = vpop.f32.mrb[0].mxu0
      %v2297 = vpop.f32.mrb[0].mxu0
      %2298 = vdwg.mxu0
      %v2299 = vadd.f32 %v775, %v363
      %v2300 = vadd.f32 %v824, %v363
      %v2301 = vadd.f32 %v873, %v363
      %v2302 = vadd.f32 %v922, %v363
      %v2303 = vadd.f32 %v971, %v363
      %v2304 = vadd.f32 %v1020, %v363
      %v2305 = vadd.f32 %v1069, %v363
      %v2306 = vadd.f32 %v1118, %v363
      %v2307 = vadd.f32 %v1167, %v363
      %v2308 = vadd.f32 %v1216, %v363
      %v2309 = vadd.f32 %v1265, %v363
      %v2310 = vadd.f32 %v1314, %v363
      %v2311 = vadd.f32 %v1363, %v363
      %v2312 = vadd.f32 %v1412, %v363
      %v2313 = vadd.f32 %v1461, %v363
      %v2314 = vadd.f32 %v1510, %v363
      %v2315 = vadd.f32 %v1559, %v363
      %v2316 = vadd.f32 %v1608, %v363
      %v2317 = vadd.f32 %v1657, %v363
      %v2318 = vadd.f32 %v1706, %v363
      %v2319 = vadd.f32 %v1755, %v363
      %v2320 = vadd.f32 %v1804, %v363
      %v2321 = vadd.f32 %v1853, %v363
      %v2322 = vadd.f32 %v1902, %v363
      %v2323 = vadd.f32 %v1951, %v363
      %v2324 = vadd.f32 %v2000, %v363
      %v2325 = vadd.f32 %v2049, %v363
      %v2326 = vadd.f32 %v2098, %v363
      %v2327 = vadd.f32 %v2147, %v363
      %v2328 = vadd.f32 %v2196, %v363
      %v2329 = vadd.f32 %v2245, %v363
      %v2330 = vadd.f32 %v2294, %v363
      %v2331 = vsel %vm733, %v2299, -inf
      %2332 = vmax.xlane.f32.xlu0 %v2331
      %v2333 = vpop.xlane.xlu0 %2332
      %v2334 = vsel %vm733, %v2300, -inf
      %2335 = vmax.xlane.f32.xlu0 %v2334
      %v2336 = vpop.xlane.xlu0 %2335
      %v2337 = vsel %vm733, %v2301, -inf
      %2338 = vmax.xlane.f32.xlu0 %v2337
      %v2339 = vpop.xlane.xlu0 %2338
      %v2340 = vsel %vm733, %v2302, -inf
      %2341 = vmax.xlane.f32.xlu0 %v2340
      %v2342 = vpop.xlane.xlu0 %2341
      %v2343 = vsel %vm733, %v2303, -inf
      %2344 = vmax.xlane.f32.xlu0 %v2343
      %v2345 = vpop.xlane.xlu0 %2344
      %v2346 = vsel %vm733, %v2304, -inf
      %2347 = vmax.xlane.f32.xlu0 %v2346
      %v2348 = vpop.xlane.xlu0 %2347
      %v2349 = vsel %vm733, %v2305, -inf
      %2350 = vmax.xlane.f32.xlu0 %v2349
      %v2351 = vpop.xlane.xlu0 %2350
      %v2352 = vsel %vm733, %v2306, -inf
      %2353 = vmax.xlane.f32.xlu0 %v2352
      %v2354 = vpop.xlane.xlu0 %2353
      %v2355 = vsel %vm733, %v2307, -inf
      %2356 = vmax.xlane.f32.xlu0 %v2355
      %v2357 = vpop.xlane.xlu0 %2356
      %v2358 = vsel %vm733, %v2308, -inf
      %2359 = vmax.xlane.f32.xlu0 %v2358
      %v2360 = vpop.xlane.xlu0 %2359
      %v2361 = vsel %vm733, %v2309, -inf
      %2362 = vmax.xlane.f32.xlu0 %v2361
      %v2363 = vpop.xlane.xlu0 %2362
      %v2364 = vsel %vm733, %v2310, -inf
      %2365 = vmax.xlane.f32.xlu0 %v2364
      %v2366 = vpop.xlane.xlu0 %2365
      %v2367 = vsel %vm733, %v2311, -inf
      %2368 = vmax.xlane.f32.xlu0 %v2367
      %v2369 = vpop.xlane.xlu0 %2368
      %v2370 = vsel %vm733, %v2312, -inf
      %2371 = vmax.xlane.f32.xlu0 %v2370
      %v2372 = vpop.xlane.xlu0 %2371
      %v2373 = vsel %vm733, %v2313, -inf
      %2374 = vmax.xlane.f32.xlu0 %v2373
      %v2375 = vpop.xlane.xlu0 %2374
      %v2376 = vsel %vm733, %v2314, -inf
      %2377 = vmax.xlane.f32.xlu0 %v2376
      %v2378 = vpop.xlane.xlu0 %2377
      %v2379 = vsel %vm733, %v2315, -inf
      %2380 = vmax.xlane.f32.xlu0 %v2379
      %v2381 = vpop.xlane.xlu0 %2380
      %v2382 = vsel %vm733, %v2316, -inf
      %2383 = vmax.xlane.f32.xlu0 %v2382
      %v2384 = vpop.xlane.xlu0 %2383
      %v2385 = vsel %vm733, %v2317, -inf
      %2386 = vmax.xlane.f32.xlu0 %v2385
      %v2387 = vpop.xlane.xlu0 %2386
      %v2388 = vsel %vm733, %v2318, -inf
      %2389 = vmax.xlane.f32.xlu0 %v2388
      %v2390 = vpop.xlane.xlu0 %2389
      %v2391 = vsel %vm733, %v2319, -inf
      %2392 = vmax.xlane.f32.xlu0 %v2391
      %v2393 = vpop.xlane.xlu0 %2392
      %v2394 = vsel %vm733, %v2320, -inf
      %2395 = vmax.xlane.f32.xlu0 %v2394
      %v2396 = vpop.xlane.xlu0 %2395
      %v2397 = vsel %vm733, %v2321, -inf
      %2398 = vmax.xlane.f32.xlu0 %v2397
      %v2399 = vpop.xlane.xlu0 %2398
      %v2400 = vsel %vm733, %v2322, -inf
      %2401 = vmax.xlane.f32.xlu0 %v2400
      %v2402 = vpop.xlane.xlu0 %2401
      %v2403 = vsel %vm733, %v2323, -inf
      %2404 = vmax.xlane.f32.xlu0 %v2403
      %v2405 = vpop.xlane.xlu0 %2404
      %v2406 = vsel %vm733, %v2324, -inf
      %2407 = vmax.xlane.f32.xlu0 %v2406
      %v2408 = vpop.xlane.xlu0 %2407
      %v2409 = vsel %vm733, %v2325, -inf
      %2410 = vmax.xlane.f32.xlu0 %v2409
      %v2411 = vpop.xlane.xlu0 %2410
      %v2412 = vsel %vm733, %v2326, -inf
      %2413 = vmax.xlane.f32.xlu0 %v2412
      %v2414 = vpop.xlane.xlu0 %2413
      %v2415 = vsel %vm733, %v2327, -inf
      %2416 = vmax.xlane.f32.xlu0 %v2415
      %v2417 = vpop.xlane.xlu0 %2416
      %v2418 = vsel %vm733, %v2328, -inf
      %2419 = vmax.xlane.f32.xlu0 %v2418
      %v2420 = vpop.xlane.xlu0 %2419
      %v2421 = vsel %vm733, %v2329, -inf
      %2422 = vmax.xlane.f32.xlu0 %v2421
      %v2423 = vpop.xlane.xlu0 %2422
      %v2424 = vsel %vm733, %v2330, -inf
      %2425 = vmax.xlane.f32.xlu0 %v2424
      %v2426 = vpop.xlane.xlu0 %2425
      %v2427 = vmax.f32 %v2333, 0.0
      %v2428 = vmax.f32 %v2336, 0.0
      %v2429 = vmax.f32 %v2339, 0.0
      %v2430 = vmax.f32 %v2342, 0.0
      %v2431 = vmax.f32 %v2345, 0.0
      %v2432 = vmax.f32 %v2348, 0.0
      %v2433 = vmax.f32 %v2351, 0.0
      %v2434 = vmax.f32 %v2354, 0.0
      %v2435 = vmax.f32 %v2357, 0.0
      %v2436 = vmax.f32 %v2360, 0.0
      %v2437 = vmax.f32 %v2363, 0.0
      %v2438 = vmax.f32 %v2366, 0.0
      %v2439 = vmax.f32 %v2369, 0.0
      %v2440 = vmax.f32 %v2372, 0.0
      %v2441 = vmax.f32 %v2375, 0.0
      %v2442 = vmax.f32 %v2378, 0.0
      %v2443 = vmax.f32 %v2381, 0.0
      %v2444 = vmax.f32 %v2384, 0.0
      %v2445 = vmax.f32 %v2387, 0.0
      %v2446 = vmax.f32 %v2390, 0.0
      %v2447 = vmax.f32 %v2393, 0.0
      %v2448 = vmax.f32 %v2396, 0.0
      %v2449 = vmax.f32 %v2399, 0.0
      %v2450 = vmax.f32 %v2402, 0.0
      %v2451 = vmax.f32 %v2405, 0.0
      %v2452 = vmax.f32 %v2408, 0.0
      %v2453 = vmax.f32 %v2411, 0.0
      %v2454 = vmax.f32 %v2414, 0.0
      %v2455 = vmax.f32 %v2417, 0.0
      %v2456 = vmax.f32 %v2420, 0.0
      %v2457 = vmax.f32 %v2423, 0.0
      %v2458 = vmax.f32 %v2426, 0.0
      %v2459 = vsub.f32 %v2299, %v2427
      %v2460 = vsub.f32 %v2300, %v2428
      %v2461 = vsub.f32 %v2301, %v2429
      %v2462 = vsub.f32 %v2302, %v2430
      %v2463 = vsub.f32 %v2303, %v2431
      %v2464 = vsub.f32 %v2304, %v2432
      %v2465 = vsub.f32 %v2305, %v2433
      %v2466 = vsub.f32 %v2306, %v2434
      %v2467 = vsub.f32 %v2307, %v2435
      %v2468 = vsub.f32 %v2308, %v2436
      %v2469 = vsub.f32 %v2309, %v2437
      %v2470 = vsub.f32 %v2310, %v2438
      %v2471 = vsub.f32 %v2311, %v2439
      %v2472 = vsub.f32 %v2312, %v2440
      %v2473 = vsub.f32 %v2313, %v2441
      %v2474 = vsub.f32 %v2314, %v2442
      %v2475 = vsub.f32 %v2315, %v2443
      %v2476 = vsub.f32 %v2316, %v2444
      %v2477 = vsub.f32 %v2317, %v2445
      %v2478 = vsub.f32 %v2318, %v2446
      %v2479 = vsub.f32 %v2319, %v2447
      %v2480 = vsub.f32 %v2320, %v2448
      %v2481 = vsub.f32 %v2321, %v2449
      %v2482 = vsub.f32 %v2322, %v2450
      %v2483 = vsub.f32 %v2323, %v2451
      %v2484 = vsub.f32 %v2324, %v2452
      %v2485 = vsub.f32 %v2325, %v2453
      %v2486 = vsub.f32 %v2326, %v2454
      %v2487 = vsub.f32 %v2327, %v2455
      %v2488 = vsub.f32 %v2328, %v2456
      %v2489 = vsub.f32 %v2329, %v2457
      %v2490 = vsub.f32 %v2330, %v2458
      %v2491 = vmul.f32 %v2459, 1.442695
      %v2492 = vpow.pop %v2491
      %v2493 = vmul.f32 %v2460, 1.442695
      %v2494 = vpow.pop %v2493
      %v2495 = vmul.f32 %v2461, 1.442695
      %v2496 = vpow.pop %v2495
      %v2497 = vmul.f32 %v2462, 1.442695
      %v2498 = vpow.pop %v2497
      %v2499 = vmul.f32 %v2463, 1.442695
      %v2500 = vpow.pop %v2499
      %v2501 = vmul.f32 %v2464, 1.442695
      %v2502 = vpow.pop %v2501
      %v2503 = vmul.f32 %v2465, 1.442695
      %v2504 = vpow.pop %v2503
      %v2505 = vmul.f32 %v2466, 1.442695
      %v2506 = vpow.pop %v2505
      %v2507 = vmul.f32 %v2467, 1.442695
      %v2508 = vpow.pop %v2507
      %v2509 = vmul.f32 %v2468, 1.442695
      %v2510 = vpow.pop %v2509
      %v2511 = vmul.f32 %v2469, 1.442695
      %v2512 = vpow.pop %v2511
      %v2513 = vmul.f32 %v2470, 1.442695
      %v2514 = vpow.pop %v2513
      %v2515 = vmul.f32 %v2471, 1.442695
      %v2516 = vpow.pop %v2515
      %v2517 = vmul.f32 %v2472, 1.442695
      %v2518 = vpow.pop %v2517
      %v2519 = vmul.f32 %v2473, 1.442695
      %v2520 = vpow.pop %v2519
      %v2521 = vmul.f32 %v2474, 1.442695
      %v2522 = vpow.pop %v2521
      %v2523 = vmul.f32 %v2475, 1.442695
      %v2524 = vpow.pop %v2523
      %v2525 = vmul.f32 %v2476, 1.442695
      %v2526 = vpow.pop %v2525
      %v2527 = vmul.f32 %v2477, 1.442695
      %v2528 = vpow.pop %v2527
      %v2529 = vmul.f32 %v2478, 1.442695
      %v2530 = vpow.pop %v2529
      %v2531 = vmul.f32 %v2479, 1.442695
      %v2532 = vpow.pop %v2531
      %v2533 = vmul.f32 %v2480, 1.442695
      %v2534 = vpow.pop %v2533
      %v2535 = vmul.f32 %v2481, 1.442695
      %v2536 = vpow.pop %v2535
      %v2537 = vmul.f32 %v2482, 1.442695
      %v2538 = vpow.pop %v2537
      %v2539 = vmul.f32 %v2483, 1.442695
      %v2540 = vpow.pop %v2539
      %v2541 = vmul.f32 %v2484, 1.442695
      %v2542 = vpow.pop %v2541
      %v2543 = vmul.f32 %v2485, 1.442695
      %v2544 = vpow.pop %v2543
      %v2545 = vmul.f32 %v2486, 1.442695
      %v2546 = vpow.pop %v2545
      %v2547 = vmul.f32 %v2487, 1.442695
      %v2548 = vpow.pop %v2547
      %v2549 = vmul.f32 %v2488, 1.442695
      %v2550 = vpow.pop %v2549
      %v2551 = vmul.f32 %v2489, 1.442695
      %v2552 = vpow.pop %v2551
      %v2553 = vmul.f32 %v2490, 1.442695
      %v2554 = vpow.pop %v2553
      %v2555 = vsel %vm733, %v2492, 0.0
      %2556 = vadd.xlane.f32.xlu0 %v2555
      %v2557 = vpop.xlane.xlu0 %2556
      %v2558 = vsel %vm733, %v2494, 0.0
      %2559 = vadd.xlane.f32.xlu0 %v2558
      %v2560 = vpop.xlane.xlu0 %2559
      %v2561 = vsel %vm733, %v2496, 0.0
      %2562 = vadd.xlane.f32.xlu0 %v2561
      %v2563 = vpop.xlane.xlu0 %2562
      %v2564 = vsel %vm733, %v2498, 0.0
      %2565 = vadd.xlane.f32.xlu0 %v2564
      %v2566 = vpop.xlane.xlu0 %2565
      %v2567 = vsel %vm733, %v2500, 0.0
      %2568 = vadd.xlane.f32.xlu0 %v2567
      %v2569 = vpop.xlane.xlu0 %2568
      %v2570 = vsel %vm733, %v2502, 0.0
      %2571 = vadd.xlane.f32.xlu0 %v2570
      %v2572 = vpop.xlane.xlu0 %2571
      %v2573 = vsel %vm733, %v2504, 0.0
      %2574 = vadd.xlane.f32.xlu0 %v2573
      %v2575 = vpop.xlane.xlu0 %2574
      %v2576 = vsel %vm733, %v2506, 0.0
      %2577 = vadd.xlane.f32.xlu0 %v2576
      %v2578 = vpop.xlane.xlu0 %2577
      %v2579 = vsel %vm733, %v2508, 0.0
      %2580 = vadd.xlane.f32.xlu0 %v2579
      %v2581 = vpop.xlane.xlu0 %2580
      %v2582 = vsel %vm733, %v2510, 0.0
      %2583 = vadd.xlane.f32.xlu0 %v2582
      %v2584 = vpop.xlane.xlu0 %2583
      %v2585 = vsel %vm733, %v2512, 0.0
      %2586 = vadd.xlane.f32.xlu0 %v2585
      %v2587 = vpop.xlane.xlu0 %2586
      %v2588 = vsel %vm733, %v2514, 0.0
      %2589 = vadd.xlane.f32.xlu0 %v2588
      %v2590 = vpop.xlane.xlu0 %2589
      %v2591 = vsel %vm733, %v2516, 0.0
      %2592 = vadd.xlane.f32.xlu0 %v2591
      %v2593 = vpop.xlane.xlu0 %2592
      %v2594 = vsel %vm733, %v2518, 0.0
      %2595 = vadd.xlane.f32.xlu0 %v2594
      %v2596 = vpop.xlane.xlu0 %2595
      %v2597 = vsel %vm733, %v2520, 0.0
      %2598 = vadd.xlane.f32.xlu0 %v2597
      %v2599 = vpop.xlane.xlu0 %2598
      %v2600 = vsel %vm733, %v2522, 0.0
      %2601 = vadd.xlane.f32.xlu0 %v2600
      %v2602 = vpop.xlane.xlu0 %2601
      %v2603 = vsel %vm733, %v2524, 0.0
      %2604 = vadd.xlane.f32.xlu0 %v2603
      %v2605 = vpop.xlane.xlu0 %2604
      %v2606 = vsel %vm733, %v2526, 0.0
      %2607 = vadd.xlane.f32.xlu0 %v2606
      %v2608 = vpop.xlane.xlu0 %2607
      %v2609 = vsel %vm733, %v2528, 0.0
      %2610 = vadd.xlane.f32.xlu0 %v2609
      %v2611 = vpop.xlane.xlu0 %2610
      %v2612 = vsel %vm733, %v2530, 0.0
      %2613 = vadd.xlane.f32.xlu0 %v2612
      %v2614 = vpop.xlane.xlu0 %2613
      %v2615 = vsel %vm733, %v2532, 0.0
      %2616 = vadd.xlane.f32.xlu0 %v2615
      %v2617 = vpop.xlane.xlu0 %2616
      %v2618 = vsel %vm733, %v2534, 0.0
      %2619 = vadd.xlane.f32.xlu0 %v2618
      %v2620 = vpop.xlane.xlu0 %2619
      %v2621 = vsel %vm733, %v2536, 0.0
      %2622 = vadd.xlane.f32.xlu0 %v2621
      %v2623 = vpop.xlane.xlu0 %2622
      %v2624 = vsel %vm733, %v2538, 0.0
      %2625 = vadd.xlane.f32.xlu0 %v2624
      %v2626 = vpop.xlane.xlu0 %2625
      %v2627 = vsel %vm733, %v2540, 0.0
      %2628 = vadd.xlane.f32.xlu0 %v2627
      %v2629 = vpop.xlane.xlu0 %2628
      %v2630 = vsel %vm733, %v2542, 0.0
      %2631 = vadd.xlane.f32.xlu0 %v2630
      %v2632 = vpop.xlane.xlu0 %2631
      %v2633 = vsel %vm733, %v2544, 0.0
      %2634 = vadd.xlane.f32.xlu0 %v2633
      %v2635 = vpop.xlane.xlu0 %2634
      %v2636 = vsel %vm733, %v2546, 0.0
      %2637 = vadd.xlane.f32.xlu0 %v2636
      %v2638 = vpop.xlane.xlu0 %2637
      %v2639 = vsel %vm733, %v2548, 0.0
      %2640 = vadd.xlane.f32.xlu0 %v2639
      %v2641 = vpop.xlane.xlu0 %2640
      %v2642 = vsel %vm733, %v2550, 0.0
      %2643 = vadd.xlane.f32.xlu0 %v2642
      %v2644 = vpop.xlane.xlu0 %2643
      %v2645 = vsel %vm733, %v2552, 0.0
      %2646 = vadd.xlane.f32.xlu0 %v2645
      %v2647 = vpop.xlane.xlu0 %2646
      %v2648 = vsel %vm733, %v2554, 0.0
      %2649 = vadd.xlane.f32.xlu0 %v2648
      %v2650 = vpop.xlane.xlu0 %2649
      %v2651 = vsub.f32 0.0, %v2427
      %v2652 = vsub.f32 0.0, %v2428
      %v2653 = vsub.f32 0.0, %v2429
      %v2654 = vsub.f32 0.0, %v2430
      %v2655 = vsub.f32 0.0, %v2431
      %v2656 = vsub.f32 0.0, %v2432
      %v2657 = vsub.f32 0.0, %v2433
      %v2658 = vsub.f32 0.0, %v2434
      %v2659 = vsub.f32 0.0, %v2435
      %v2660 = vsub.f32 0.0, %v2436
      %v2661 = vsub.f32 0.0, %v2437
      %v2662 = vsub.f32 0.0, %v2438
      %v2663 = vsub.f32 0.0, %v2439
      %v2664 = vsub.f32 0.0, %v2440
      %v2665 = vsub.f32 0.0, %v2441
      %v2666 = vsub.f32 0.0, %v2442
      %v2667 = vsub.f32 0.0, %v2443
      %v2668 = vsub.f32 0.0, %v2444
      %v2669 = vsub.f32 0.0, %v2445
      %v2670 = vsub.f32 0.0, %v2446
      %v2671 = vsub.f32 0.0, %v2447
      %v2672 = vsub.f32 0.0, %v2448
      %v2673 = vsub.f32 0.0, %v2449
      %v2674 = vsub.f32 0.0, %v2450
      %v2675 = vsub.f32 0.0, %v2451
      %v2676 = vsub.f32 0.0, %v2452
      %v2677 = vsub.f32 0.0, %v2453
      %v2678 = vsub.f32 0.0, %v2454
      %v2679 = vsub.f32 0.0, %v2455
      %v2680 = vsub.f32 0.0, %v2456
      %v2681 = vsub.f32 0.0, %v2457
      %v2682 = vsub.f32 0.0, %v2458
      %v2683 = vmul.f32 %v2651, 1.442695
      %v2684 = vpow.pop %v2683
      %v2685 = vmul.f32 %v2652, 1.442695
      %v2686 = vpow.pop %v2685
      %v2687 = vmul.f32 %v2653, 1.442695
      %v2688 = vpow.pop %v2687
      %v2689 = vmul.f32 %v2654, 1.442695
      %v2690 = vpow.pop %v2689
      %v2691 = vmul.f32 %v2655, 1.442695
      %v2692 = vpow.pop %v2691
      %v2693 = vmul.f32 %v2656, 1.442695
      %v2694 = vpow.pop %v2693
      %v2695 = vmul.f32 %v2657, 1.442695
      %v2696 = vpow.pop %v2695
      %v2697 = vmul.f32 %v2658, 1.442695
      %v2698 = vpow.pop %v2697
      %v2699 = vmul.f32 %v2659, 1.442695
      %v2700 = vpow.pop %v2699
      %v2701 = vmul.f32 %v2660, 1.442695
      %v2702 = vpow.pop %v2701
      %v2703 = vmul.f32 %v2661, 1.442695
      %v2704 = vpow.pop %v2703
      %v2705 = vmul.f32 %v2662, 1.442695
      %v2706 = vpow.pop %v2705
      %v2707 = vmul.f32 %v2663, 1.442695
      %v2708 = vpow.pop %v2707
      %v2709 = vmul.f32 %v2664, 1.442695
      %v2710 = vpow.pop %v2709
      %v2711 = vmul.f32 %v2665, 1.442695
      %v2712 = vpow.pop %v2711
      %v2713 = vmul.f32 %v2666, 1.442695
      %v2714 = vpow.pop %v2713
      %v2715 = vmul.f32 %v2667, 1.442695
      %v2716 = vpow.pop %v2715
      %v2717 = vmul.f32 %v2668, 1.442695
      %v2718 = vpow.pop %v2717
      %v2719 = vmul.f32 %v2669, 1.442695
      %v2720 = vpow.pop %v2719
      %v2721 = vmul.f32 %v2670, 1.442695
      %v2722 = vpow.pop %v2721
      %v2723 = vmul.f32 %v2671, 1.442695
      %v2724 = vpow.pop %v2723
      %v2725 = vmul.f32 %v2672, 1.442695
      %v2726 = vpow.pop %v2725
      %v2727 = vmul.f32 %v2673, 1.442695
      %v2728 = vpow.pop %v2727
      %v2729 = vmul.f32 %v2674, 1.442695
      %v2730 = vpow.pop %v2729
      %v2731 = vmul.f32 %v2675, 1.442695
      %v2732 = vpow.pop %v2731
      %v2733 = vmul.f32 %v2676, 1.442695
      %v2734 = vpow.pop %v2733
      %v2735 = vmul.f32 %v2677, 1.442695
      %v2736 = vpow.pop %v2735
      %v2737 = vmul.f32 %v2678, 1.442695
      %v2738 = vpow.pop %v2737
      %v2739 = vmul.f32 %v2679, 1.442695
      %v2740 = vpow.pop %v2739
      %v2741 = vmul.f32 %v2680, 1.442695
      %v2742 = vpow.pop %v2741
      %v2743 = vmul.f32 %v2681, 1.442695
      %v2744 = vpow.pop %v2743
      %v2745 = vmul.f32 %v2682, 1.442695
      %v2746 = vpow.pop %v2745
      %v2747 = vadd.f32 %v2557, %v2684
      %v2748 = vadd.f32 %v2560, %v2686
      %v2749 = vadd.f32 %v2563, %v2688
      %v2750 = vadd.f32 %v2566, %v2690
      %v2751 = vadd.f32 %v2569, %v2692
      %v2752 = vadd.f32 %v2572, %v2694
      %v2753 = vadd.f32 %v2575, %v2696
      %v2754 = vadd.f32 %v2578, %v2698
      %v2755 = vadd.f32 %v2581, %v2700
      %v2756 = vadd.f32 %v2584, %v2702
      %v2757 = vadd.f32 %v2587, %v2704
      %v2758 = vadd.f32 %v2590, %v2706
      %v2759 = vadd.f32 %v2593, %v2708
      %v2760 = vadd.f32 %v2596, %v2710
      %v2761 = vadd.f32 %v2599, %v2712
      %v2762 = vadd.f32 %v2602, %v2714
      %v2763 = vadd.f32 %v2605, %v2716
      %v2764 = vadd.f32 %v2608, %v2718
      %v2765 = vadd.f32 %v2611, %v2720
      %v2766 = vadd.f32 %v2614, %v2722
      %v2767 = vadd.f32 %v2617, %v2724
      %v2768 = vadd.f32 %v2620, %v2726
      %v2769 = vadd.f32 %v2623, %v2728
      %v2770 = vadd.f32 %v2626, %v2730
      %v2771 = vadd.f32 %v2629, %v2732
      %v2772 = vadd.f32 %v2632, %v2734
      %v2773 = vadd.f32 %v2635, %v2736
      %v2774 = vadd.f32 %v2638, %v2738
      %v2775 = vadd.f32 %v2641, %v2740
      %v2776 = vadd.f32 %v2644, %v2742
      %v2777 = vadd.f32 %v2647, %v2744
      %v2778 = vadd.f32 %v2650, %v2746
      %v2779 = vpack.c.bf16 %v2492, %v2492
      %v2780 = vpack.c.bf16 %v2494, %v2494
      %v2781 = vpack.c.bf16 %v2496, %v2496
      %v2782 = vpack.c.bf16 %v2498, %v2498
      %v2783 = vpack.c.bf16 %v2500, %v2500
      %v2784 = vpack.c.bf16 %v2502, %v2502
      %v2785 = vpack.c.bf16 %v2504, %v2504
      %v2786 = vpack.c.bf16 %v2506, %v2506
      %v2787 = vpack.c.bf16 %v2508, %v2508
      %v2788 = vpack.c.bf16 %v2510, %v2510
      %v2789 = vpack.c.bf16 %v2512, %v2512
      %v2790 = vpack.c.bf16 %v2514, %v2514
      %v2791 = vpack.c.bf16 %v2516, %v2516
      %v2792 = vpack.c.bf16 %v2518, %v2518
      %v2793 = vpack.c.bf16 %v2520, %v2520
      %v2794 = vpack.c.bf16 %v2522, %v2522
      %v2795 = vpack.c.bf16 %v2524, %v2524
      %v2796 = vpack.c.bf16 %v2526, %v2526
      %v2797 = vpack.c.bf16 %v2528, %v2528
      %v2798 = vpack.c.bf16 %v2530, %v2530
      %v2799 = vpack.c.bf16 %v2532, %v2532
      %v2800 = vpack.c.bf16 %v2534, %v2534
      %v2801 = vpack.c.bf16 %v2536, %v2536
      %v2802 = vpack.c.bf16 %v2538, %v2538
      %v2803 = vpack.c.bf16 %v2540, %v2540
      %v2804 = vpack.c.bf16 %v2542, %v2542
      %v2805 = vpack.c.bf16 %v2544, %v2544
      %v2806 = vpack.c.bf16 %v2546, %v2546
      %v2807 = vpack.c.bf16 %v2548, %v2548
      %v2808 = vpack.c.bf16 %v2550, %v2550
      %v2809 = vpack.c.bf16 %v2552, %v2552
      %v2810 = vpack.c.bf16 %v2554, %v2554
      %2811 = vrot.lane.b32.xlu0 %v608, 64
      %v2812 = vpop.permute.xlu0 %2811
      %v2814 = vsel %vm733, %v2779, 0
      %vm2816 = vcmask 1043456
      %v2818 = vsel %vm2816, %v2812, 0
      %2820 = vmatprep.subr.bf16.mxu0 0
      %2821 = vmatpush1.bf16.msra.mxu0 %v2818
      %2822 = vmatprep.subr.bf16.mxu0 0
      %2823 = vmatpush1.bf16.msra.mxu0 0
      %2824 = vmatprep.subr.bf16.mxu0 0
      %2825 = vmatpush1.bf16.msra.mxu0 0
      %2826 = vmatprep.subr.bf16.mxu0 0
      %2827 = vmatpush1.bf16.msra.mxu0 0
      %2828 = vmatprep.subr.bf16.mxu0 0
      %2829 = vmatpush1.bf16.msra.mxu0 0
      %2830 = vmatprep.subr.bf16.mxu0 0
      %2831 = vmatpush1.bf16.msra.mxu0 0
      %2832 = vmatprep.subr.bf16.mxu0 0
      %2833 = vmatpush1.bf16.msra.mxu0 0
      %2834 = vmatprep.subr.bf16.mxu0 0
      %2835 = vmatpush1.bf16.msra.mxu0 0
      %2836 = vmatprep.subr.bf16.mxu0 0
      %2837 = vmatpush1.bf16.msra.mxu0 0
      %2838 = vmatprep.subr.bf16.mxu0 0
      %2839 = vmatpush1.bf16.msra.mxu0 0
      %2840 = vmatprep.subr.bf16.mxu0 0
      %2841 = vmatpush1.bf16.msra.mxu0 0
      %2842 = vmatprep.subr.bf16.mxu0 0
      %2843 = vmatpush1.bf16.msra.mxu0 0
      %2844 = vmatprep.subr.bf16.mxu0 0
      %2845 = vmatpush1.bf16.msra.mxu0 0
      %2846 = vmatprep.subr.bf16.mxu0 0
      %2847 = vmatpush1.bf16.msra.mxu0 0
      %2848 = vmatprep.subr.bf16.mxu0 0
      %2849 = vmatpush1.bf16.msra.mxu0 0
      %2850 = vmatprep.subr.bf16.mxu0 0
      %2851 = vmatpush1.bf16.msra.mxu0 0
      %2852 = vmatprep.mubr.bf16.mxu0 0
      %2853 = vmatmul.mubr.bf16.gmra.mrb[0].mxu0 %v2814
      %v2854 = vpop.f32.mrb[0].mxu0
      %v2855 = vadd.f32 0.0, %v2854
      %v2856 = vpop.f32.mrb[0].mxu0
      %v2857 = vpop.f32.mrb[0].mxu0
      %v2858 = vpop.f32.mrb[0].mxu0
      %2859 = vdwg.mxu0
      %2860 = vrot.lane.b32.xlu0 %v609, 64
      %v2861 = vpop.permute.xlu0 %2860
      %v2863 = vsel %vm733, %v2780, 0
      %v2866 = vsel %vm2816, %v2861, 0
      %2868 = vmatprep.subr.bf16.mxu0 0
      %2869 = vmatpush1.bf16.msra.mxu0 %v2866
      %2870 = vmatprep.subr.bf16.mxu0 0
      %2871 = vmatpush1.bf16.msra.mxu0 0
      %2872 = vmatprep.subr.bf16.mxu0 0
      %2873 = vmatpush1.bf16.msra.mxu0 0
      %2874 = vmatprep.subr.bf16.mxu0 0
      %2875 = vmatpush1.bf16.msra.mxu0 0
      %2876 = vmatprep.subr.bf16.mxu0 0
      %2877 = vmatpush1.bf16.msra.mxu0 0
      %2878 = vmatprep.subr.bf16.mxu0 0
      %2879 = vmatpush1.bf16.msra.mxu0 0
      %2880 = vmatprep.subr.bf16.mxu0 0
      %2881 = vmatpush1.bf16.msra.mxu0 0
      %2882 = vmatprep.subr.bf16.mxu0 0
      %2883 = vmatpush1.bf16.msra.mxu0 0
      %2884 = vmatprep.subr.bf16.mxu0 0
      %2885 = vmatpush1.bf16.msra.mxu0 0
      %2886 = vmatprep.subr.bf16.mxu0 0
      %2887 = vmatpush1.bf16.msra.mxu0 0
      %2888 = vmatprep.subr.bf16.mxu0 0
      %2889 = vmatpush1.bf16.msra.mxu0 0
      %2890 = vmatprep.subr.bf16.mxu0 0
      %2891 = vmatpush1.bf16.msra.mxu0 0
      %2892 = vmatprep.subr.bf16.mxu0 0
      %2893 = vmatpush1.bf16.msra.mxu0 0
      %2894 = vmatprep.subr.bf16.mxu0 0
      %2895 = vmatpush1.bf16.msra.mxu0 0
      %2896 = vmatprep.subr.bf16.mxu0 0
      %2897 = vmatpush1.bf16.msra.mxu0 0
      %2898 = vmatprep.subr.bf16.mxu0 0
      %2899 = vmatpush1.bf16.msra.mxu0 0
      %2900 = vmatprep.mubr.bf16.mxu0 0
      %2901 = vmatmul.mubr.bf16.gmra.mrb[0].mxu0 %v2863
      %v2902 = vpop.f32.mrb[0].mxu0
      %v2903 = vadd.f32 0.0, %v2902
      %v2904 = vpop.f32.mrb[0].mxu0
      %v2905 = vpop.f32.mrb[0].mxu0
      %v2906 = vpop.f32.mrb[0].mxu0
      %2907 = vdwg.mxu0
      %2908 = vrot.lane.b32.xlu0 %v610, 64
      %v2909 = vpop.permute.xlu0 %2908
      %v2911 = vsel %vm733, %v2781, 0
      %v2914 = vsel %vm2816, %v2909, 0
      %2916 = vmatprep.subr.bf16.mxu0 0
      %2917 = vmatpush1.bf16.msra.mxu0 %v2914
      %2918 = vmatprep.subr.bf16.mxu0 0
      %2919 = vmatpush1.bf16.msra.mxu0 0
      %2920 = vmatprep.subr.bf16.mxu0 0
      %2921 = vmatpush1.bf16.msra.mxu0 0
      %2922 = vmatprep.subr.bf16.mxu0 0
      %2923 = vmatpush1.bf16.msra.mxu0 0
      %2924 = vmatprep.subr.bf16.mxu0 0
      %2925 = vmatpush1.bf16.msra.mxu0 0
      %2926 = vmatprep.subr.bf16.mxu0 0
      %2927 = vmatpush1.bf16.msra.mxu0 0
      %2928 = vmatprep.subr.bf16.mxu0 0
      %2929 = vmatpush1.bf16.msra.mxu0 0
      %2930 = vmatprep.subr.bf16.mxu0 0
      %2931 = vmatpush1.bf16.msra.mxu0 0
      %2932 = vmatprep.subr.bf16.mxu0 0
      %2933 = vmatpush1.bf16.msra.mxu0 0
      %2934 = vmatprep.subr.bf16.mxu0 0
      %2935 = vmatpush1.bf16.msra.mxu0 0
      %2936 = vmatprep.subr.bf16.mxu0 0
      %2937 = vmatpush1.bf16.msra.mxu0 0
      %2938 = vmatprep.subr.bf16.mxu0 0
      %2939 = vmatpush1.bf16.msra.mxu0 0
      %2940 = vmatprep.subr.bf16.mxu0 0
      %2941 = vmatpush1.bf16.msra.mxu0 0
      %2942 = vmatprep.subr.bf16.mxu0 0
      %2943 = vmatpush1.bf16.msra.mxu0 0
      %2944 = vmatprep.subr.bf16.mxu0 0
      %2945 = vmatpush1.bf16.msra.mxu0 0
      %2946 = vmatprep.subr.bf16.mxu0 0
      %2947 = vmatpush1.bf16.msra.mxu0 0
      %2948 = vmatprep.mubr.bf16.mxu0 0
      %2949 = vmatmul.mubr.bf16.gmra.mrb[0].mxu0 %v2911
      %v2950 = vpop.f32.mrb[0].mxu0
      %v2951 = vadd.f32 0.0, %v2950
      %v2952 = vpop.f32.mrb[0].mxu0
      %v2953 = vpop.f32.mrb[0].mxu0
      %v2954 = vpop.f32.mrb[0].mxu0
      %2955 = vdwg.mxu0
      %2956 = vrot.lane.b32.xlu0 %v611, 64
      %v2957 = vpop.permute.xlu0 %2956
      %v2959 = vsel %vm733, %v2782, 0
      %v2962 = vsel %vm2816, %v2957, 0
      %2964 = vmatprep.subr.bf16.mxu0 0
      %2965 = vmatpush1.bf16.msra.mxu0 %v2962
      %2966 = vmatprep.subr.bf16.mxu0 0
      %2967 = vmatpush1.bf16.msra.mxu0 0
      %2968 = vmatprep.subr.bf16.mxu0 0
      %2969 = vmatpush1.bf16.msra.mxu0 0
      %2970 = vmatprep.subr.bf16.mxu0 0
      %2971 = vmatpush1.bf16.msra.mxu0 0
      %2972 = vmatprep.subr.bf16.mxu0 0
      %2973 = vmatpush1.bf16.msra.mxu0 0
      %2974 = vmatprep.subr.bf16.mxu0 0
      %2975 = vmatpush1.bf16.msra.mxu0 0
      %2976 = vmatprep.subr.bf16.mxu0 0
      %2977 = vmatpush1.bf16.msra.mxu0 0
      %2978 = vmatprep.subr.bf16.mxu0 0
      %2979 = vmatpush1.bf16.msra.mxu0 0
      %2980 = vmatprep.subr.bf16.mxu0 0
      %2981 = vmatpush1.bf16.msra.mxu0 0
      %2982 = vmatprep.subr.bf16.mxu0 0
      %2983 = vmatpush1.bf16.msra.mxu0 0
      %2984 = vmatprep.subr.bf16.mxu0 0
      %2985 = vmatpush1.bf16.msra.mxu0 0
      %2986 = vmatprep.subr.bf16.mxu0 0
      %2987 = vmatpush1.bf16.msra.mxu0 0
      %2988 = vmatprep.subr.bf16.mxu0 0
      %2989 = vmatpush1.bf16.msra.mxu0 0
      %2990 = vmatprep.subr.bf16.mxu0 0
      %2991 = vmatpush1.bf16.msra.mxu0 0
      %2992 = vmatprep.subr.bf16.mxu0 0
      %2993 = vmatpush1.bf16.msra.mxu0 0
      %2994 = vmatprep.subr.bf16.mxu0 0
      %2995 = vmatpush1.bf16.msra.mxu0 0
      %2996 = vmatprep.mubr.bf16.mxu0 0
      %2997 = vmatmul.mubr.bf16.gmra.mrb[0].mxu0 %v2959
      %v2998 = vpop.f32.mrb[0].mxu0
      %v2999 = vadd.f32 0.0, %v2998
      %v3000 = vpop.f32.mrb[0].mxu0
      %v3001 = vpop.f32.mrb[0].mxu0
      %v3002 = vpop.f32.mrb[0].mxu0
      %3003 = vdwg.mxu0
      %3004 = vrot.lane.b32.xlu0 %v612, 64
      %v3005 = vpop.permute.xlu0 %3004
      %v3007 = vsel %vm733, %v2783, 0
      %v3010 = vsel %vm2816, %v3005, 0
      %3012 = vmatprep.subr.bf16.mxu0 0
      %3013 = vmatpush1.bf16.msra.mxu0 %v3010
      %3014 = vmatprep.subr.bf16.mxu0 0
      %3015 = vmatpush1.bf16.msra.mxu0 0
      %3016 = vmatprep.subr.bf16.mxu0 0
      %3017 = vmatpush1.bf16.msra.mxu0 0
      %3018 = vmatprep.subr.bf16.mxu0 0
      %3019 = vmatpush1.bf16.msra.mxu0 0
      %3020 = vmatprep.subr.bf16.mxu0 0
      %3021 = vmatpush1.bf16.msra.mxu0 0
      %3022 = vmatprep.subr.bf16.mxu0 0
      %3023 = vmatpush1.bf16.msra.mxu0 0
      %3024 = vmatprep.subr.bf16.mxu0 0
      %3025 = vmatpush1.bf16.msra.mxu0 0
      %3026 = vmatprep.subr.bf16.mxu0 0
      %3027 = vmatpush1.bf16.msra.mxu0 0
      %3028 = vmatprep.subr.bf16.mxu0 0
      %3029 = vmatpush1.bf16.msra.mxu0 0
      %3030 = vmatprep.subr.bf16.mxu0 0
      %3031 = vmatpush1.bf16.msra.mxu0 0
      %3032 = vmatprep.subr.bf16.mxu0 0
      %3033 = vmatpush1.bf16.msra.mxu0 0
      %3034 = vmatprep.subr.bf16.mxu0 0
      %3035 = vmatpush1.bf16.msra.mxu0 0
      %3036 = vmatprep.subr.bf16.mxu0 0
      %3037 = vmatpush1.bf16.msra.mxu0 0
      %3038 = vmatprep.subr.bf16.mxu0 0
      %3039 = vmatpush1.bf16.msra.mxu0 0
      %3040 = vmatprep.subr.bf16.mxu0 0
      %3041 = vmatpush1.bf16.msra.mxu0 0
      %3042 = vmatprep.subr.bf16.mxu0 0
      %3043 = vmatpush1.bf16.msra.mxu0 0
      %3044 = vmatprep.mubr.bf16.mxu0 0
      %3045 = vmatmul.mubr.bf16.gmra.mrb[0].mxu0 %v3007
      %v3046 = vpop.f32.mrb[0].mxu0
      %v3047 = vadd.f32 0.0, %v3046
      %v3048 = vpop.f32.mrb[0].mxu0
      %v3049 = vpop.f32.mrb[0].mxu0
      %v3050 = vpop.f32.mrb[0].mxu0
      %3051 = vdwg.mxu0
      %3052 = vrot.lane.b32.xlu0 %v613, 64
      %v3053 = vpop.permute.xlu0 %3052
      %v3055 = vsel %vm733, %v2784, 0
      %v3058 = vsel %vm2816, %v3053, 0
      %3060 = vmatprep.subr.bf16.mxu0 0
      %3061 = vmatpush1.bf16.msra.mxu0 %v3058
      %3062 = vmatprep.subr.bf16.mxu0 0
      %3063 = vmatpush1.bf16.msra.mxu0 0
      %3064 = vmatprep.subr.bf16.mxu0 0
      %3065 = vmatpush1.bf16.msra.mxu0 0
      %3066 = vmatprep.subr.bf16.mxu0 0
      %3067 = vmatpush1.bf16.msra.mxu0 0
      %3068 = vmatprep.subr.bf16.mxu0 0
      %3069 = vmatpush1.bf16.msra.mxu0 0
      %3070 = vmatprep.subr.bf16.mxu0 0
      %3071 = vmatpush1.bf16.msra.mxu0 0
      %3072 = vmatprep.subr.bf16.mxu0 0
      %3073 = vmatpush1.bf16.msra.mxu0 0
      %3074 = vmatprep.subr.bf16.mxu0 0
      %3075 = vmatpush1.bf16.msra.mxu0 0
      %3076 = vmatprep.subr.bf16.mxu0 0
      %3077 = vmatpush1.bf16.msra.mxu0 0
      %3078 = vmatprep.subr.bf16.mxu0 0
      %3079 = vmatpush1.bf16.msra.mxu0 0
      %3080 = vmatprep.subr.bf16.mxu0 0
      %3081 = vmatpush1.bf16.msra.mxu0 0
      %3082 = vmatprep.subr.bf16.mxu0 0
      %3083 = vmatpush1.bf16.msra.mxu0 0
      %3084 = vmatprep.subr.bf16.mxu0 0
      %3085 = vmatpush1.bf16.msra.mxu0 0
      %3086 = vmatprep.subr.bf16.mxu0 0
      %3087 = vmatpush1.bf16.msra.mxu0 0
      %3088 = vmatprep.subr.bf16.mxu0 0
      %3089 = vmatpush1.bf16.msra.mxu0 0
      %3090 = vmatprep.subr.bf16.mxu0 0
      %3091 = vmatpush1.bf16.msra.mxu0 0
      %3092 = vmatprep.mubr.bf16.mxu0 0
      %3093 = vmatmul.mubr.bf16.gmra.mrb[0].mxu0 %v3055
      %v3094 = vpop.f32.mrb[0].mxu0
      %v3095 = vadd.f32 0.0, %v3094
      %v3096 = vpop.f32.mrb[0].mxu0
      %v3097 = vpop.f32.mrb[0].mxu0
      %v3098 = vpop.f32.mrb[0].mxu0
      %3099 = vdwg.mxu0
      %3100 = vrot.lane.b32.xlu0 %v614, 64
      %v3101 = vpop.permute.xlu0 %3100
      %v3103 = vsel %vm733, %v2785, 0
      %v3106 = vsel %vm2816, %v3101, 0
      %3108 = vmatprep.subr.bf16.mxu0 0
      %3109 = vmatpush1.bf16.msra.mxu0 %v3106
      %3110 = vmatprep.subr.bf16.mxu0 0
      %3111 = vmatpush1.bf16.msra.mxu0 0
      %3112 = vmatprep.subr.bf16.mxu0 0
      %3113 = vmatpush1.bf16.msra.mxu0 0
      %3114 = vmatprep.subr.bf16.mxu0 0
      %3115 = vmatpush1.bf16.msra.mxu0 0
      %3116 = vmatprep.subr.bf16.mxu0 0
      %3117 = vmatpush1.bf16.msra.mxu0 0
      %3118 = vmatprep.subr.bf16.mxu0 0
      %3119 = vmatpush1.bf16.msra.mxu0 0
      %3120 = vmatprep.subr.bf16.mxu0 0
      %3121 = vmatpush1.bf16.msra.mxu0 0
      %3122 = vmatprep.subr.bf16.mxu0 0
      %3123 = vmatpush1.bf16.msra.mxu0 0
      %3124 = vmatprep.subr.bf16.mxu0 0
      %3125 = vmatpush1.bf16.msra.mxu0 0
      %3126 = vmatprep.subr.bf16.mxu0 0
      %3127 = vmatpush1.bf16.msra.mxu0 0
      %3128 = vmatprep.subr.bf16.mxu0 0
      %3129 = vmatpush1.bf16.msra.mxu0 0
      %3130 = vmatprep.subr.bf16.mxu0 0
      %3131 = vmatpush1.bf16.msra.mxu0 0
      %3132 = vmatprep.subr.bf16.mxu0 0
      %3133 = vmatpush1.bf16.msra.mxu0 0
      %3134 = vmatprep.subr.bf16.mxu0 0
      %3135 = vmatpush1.bf16.msra.mxu0 0
      %3136 = vmatprep.subr.bf16.mxu0 0
      %3137 = vmatpush1.bf16.msra.mxu0 0
      %3138 = vmatprep.subr.bf16.mxu0 0
      %3139 = vmatpush1.bf16.msra.mxu0 0
      %3140 = vmatprep.mubr.bf16.mxu0 0
      %3141 = vmatmul.mubr.bf16.gmra.mrb[0].mxu0 %v3103
      %v3142 = vpop.f32.mrb[0].mxu0
      %v3143 = vadd.f32 0.0, %v3142
      %v3144 = vpop.f32.mrb[0].mxu0
      %v3145 = vpop.f32.mrb[0].mxu0
      %v3146 = vpop.f32.mrb[0].mxu0
      %3147 = vdwg.mxu0
      %3148 = vrot.lane.b32.xlu0 %v615, 64
      %v3149 = vpop.permute.xlu0 %3148
      %v3151 = vsel %vm733, %v2786, 0
      %v3154 = vsel %vm2816, %v3149, 0
      %3156 = vmatprep.subr.bf16.mxu0 0
      %3157 = vmatpush1.bf16.msra.mxu0 %v3154
      %3158 = vmatprep.subr.bf16.mxu0 0
      %3159 = vmatpush1.bf16.msra.mxu0 0
      %3160 = vmatprep.subr.bf16.mxu0 0
      %3161 = vmatpush1.bf16.msra.mxu0 0
      %3162 = vmatprep.subr.bf16.mxu0 0
      %3163 = vmatpush1.bf16.msra.mxu0 0
      %3164 = vmatprep.subr.bf16.mxu0 0
      %3165 = vmatpush1.bf16.msra.mxu0 0
      %3166 = vmatprep.subr.bf16.mxu0 0
      %3167 = vmatpush1.bf16.msra.mxu0 0
      %3168 = vmatprep.subr.bf16.mxu0 0
      %3169 = vmatpush1.bf16.msra.mxu0 0
      %3170 = vmatprep.subr.bf16.mxu0 0
      %3171 = vmatpush1.bf16.msra.mxu0 0
      %3172 = vmatprep.subr.bf16.mxu0 0
      %3173 = vmatpush1.bf16.msra.mxu0 0
      %3174 = vmatprep.subr.bf16.mxu0 0
      %3175 = vmatpush1.bf16.msra.mxu0 0
      %3176 = vmatprep.subr.bf16.mxu0 0
      %3177 = vmatpush1.bf16.msra.mxu0 0
      %3178 = vmatprep.subr.bf16.mxu0 0
      %3179 = vmatpush1.bf16.msra.mxu0 0
      %3180 = vmatprep.subr.bf16.mxu0 0
      %3181 = vmatpush1.bf16.msra.mxu0 0
      %3182 = vmatprep.subr.bf16.mxu0 0
      %3183 = vmatpush1.bf16.msra.mxu0 0
      %3184 = vmatprep.subr.bf16.mxu0 0
      %3185 = vmatpush1.bf16.msra.mxu0 0
      %3186 = vmatprep.subr.bf16.mxu0 0
      %3187 = vmatpush1.bf16.msra.mxu0 0
      %3188 = vmatprep.mubr.bf16.mxu0 0
      %3189 = vmatmul.mubr.bf16.gmra.mrb[0].mxu0 %v3151
      %v3190 = vpop.f32.mrb[0].mxu0
      %v3191 = vadd.f32 0.0, %v3190
      %v3192 = vpop.f32.mrb[0].mxu0
      %v3193 = vpop.f32.mrb[0].mxu0
      %v3194 = vpop.f32.mrb[0].mxu0
      %3195 = vdwg.mxu0
      %3196 = vrot.lane.b32.xlu0 %v616, 64
      %v3197 = vpop.permute.xlu0 %3196
      %v3199 = vsel %vm733, %v2787, 0
      %v3202 = vsel %vm2816, %v3197, 0
      %3204 = vmatprep.subr.bf16.mxu0 0
      %3205 = vmatpush1.bf16.msra.mxu0 %v3202
      %3206 = vmatprep.subr.bf16.mxu0 0
      %3207 = vmatpush1.bf16.msra.mxu0 0
      %3208 = vmatprep.subr.bf16.mxu0 0
      %3209 = vmatpush1.bf16.msra.mxu0 0
      %3210 = vmatprep.subr.bf16.mxu0 0
      %3211 = vmatpush1.bf16.msra.mxu0 0
      %3212 = vmatprep.subr.bf16.mxu0 0
      %3213 = vmatpush1.bf16.msra.mxu0 0
      %3214 = vmatprep.subr.bf16.mxu0 0
      %3215 = vmatpush1.bf16.msra.mxu0 0
      %3216 = vmatprep.subr.bf16.mxu0 0
      %3217 = vmatpush1.bf16.msra.mxu0 0
      %3218 = vmatprep.subr.bf16.mxu0 0
      %3219 = vmatpush1.bf16.msra.mxu0 0
      %3220 = vmatprep.subr.bf16.mxu0 0
      %3221 = vmatpush1.bf16.msra.mxu0 0
      %3222 = vmatprep.subr.bf16.mxu0 0
      %3223 = vmatpush1.bf16.msra.mxu0 0
      %3224 = vmatprep.subr.bf16.mxu0 0
      %3225 = vmatpush1.bf16.msra.mxu0 0
      %3226 = vmatprep.subr.bf16.mxu0 0
      %3227 = vmatpush1.bf16.msra.mxu0 0
      %3228 = vmatprep.subr.bf16.mxu0 0
      %3229 = vmatpush1.bf16.msra.mxu0 0
      %3230 = vmatprep.subr.bf16.mxu0 0
      %3231 = vmatpush1.bf16.msra.mxu0 0
      %3232 = vmatprep.subr.bf16.mxu0 0
      %3233 = vmatpush1.bf16.msra.mxu0 0
      %3234 = vmatprep.subr.bf16.mxu0 0
      %3235 = vmatpush1.bf16.msra.mxu0 0
      %3236 = vmatprep.mubr.bf16.mxu0 0
      %3237 = vmatmul.mubr.bf16.gmra.mrb[0].mxu0 %v3199
      %v3238 = vpop.f32.mrb[0].mxu0
      %v3239 = vadd.f32 0.0, %v3238
      %v3240 = vpop.f32.mrb[0].mxu0
      %v3241 = vpop.f32.mrb[0].mxu0
      %v3242 = vpop.f32.mrb[0].mxu0
      %3243 = vdwg.mxu0
      %3244 = vrot.lane.b32.xlu0 %v617, 64
      %v3245 = vpop.permute.xlu0 %3244
      %v3247 = vsel %vm733, %v2788, 0
      %v3250 = vsel %vm2816, %v3245, 0
      %3252 = vmatprep.subr.bf16.mxu0 0
      %3253 = vmatpush1.bf16.msra.mxu0 %v3250
      %3254 = vmatprep.subr.bf16.mxu0 0
      %3255 = vmatpush1.bf16.msra.mxu0 0
      %3256 = vmatprep.subr.bf16.mxu0 0
      %3257 = vmatpush1.bf16.msra.mxu0 0
      %3258 = vmatprep.subr.bf16.mxu0 0
      %3259 = vmatpush1.bf16.msra.mxu0 0
      %3260 = vmatprep.subr.bf16.mxu0 0
      %3261 = vmatpush1.bf16.msra.mxu0 0
      %3262 = vmatprep.subr.bf16.mxu0 0
      %3263 = vmatpush1.bf16.msra.mxu0 0
      %3264 = vmatprep.subr.bf16.mxu0 0
      %3265 = vmatpush1.bf16.msra.mxu0 0
      %3266 = vmatprep.subr.bf16.mxu0 0
      %3267 = vmatpush1.bf16.msra.mxu0 0
      %3268 = vmatprep.subr.bf16.mxu0 0
      %3269 = vmatpush1.bf16.msra.mxu0 0
      %3270 = vmatprep.subr.bf16.mxu0 0
      %3271 = vmatpush1.bf16.msra.mxu0 0
      %3272 = vmatprep.subr.bf16.mxu0 0
      %3273 = vmatpush1.bf16.msra.mxu0 0
      %3274 = vmatprep.subr.bf16.mxu0 0
      %3275 = vmatpush1.bf16.msra.mxu0 0
      %3276 = vmatprep.subr.bf16.mxu0 0
      %3277 = vmatpush1.bf16.msra.mxu0 0
      %3278 = vmatprep.subr.bf16.mxu0 0
      %3279 = vmatpush1.bf16.msra.mxu0 0
      %3280 = vmatprep.subr.bf16.mxu0 0
      %3281 = vmatpush1.bf16.msra.mxu0 0
      %3282 = vmatprep.subr.bf16.mxu0 0
      %3283 = vmatpush1.bf16.msra.mxu0 0
      %3284 = vmatprep.mubr.bf16.mxu0 0
      %3285 = vmatmul.mubr.bf16.gmra.mrb[0].mxu0 %v3247
      %v3286 = vpop.f32.mrb[0].mxu0
      %v3287 = vadd.f32 0.0, %v3286
      %v3288 = vpop.f32.mrb[0].mxu0
      %v3289 = vpop.f32.mrb[0].mxu0
      %v3290 = vpop.f32.mrb[0].mxu0
      %3291 = vdwg.mxu0
      %3292 = vrot.lane.b32.xlu0 %v618, 64
      %v3293 = vpop.permute.xlu0 %3292
      %v3295 = vsel %vm733, %v2789, 0
      %v3298 = vsel %vm2816, %v3293, 0
      %3300 = vmatprep.subr.bf16.mxu0 0
      %3301 = vmatpush1.bf16.msra.mxu0 %v3298
      %3302 = vmatprep.subr.bf16.mxu0 0
      %3303 = vmatpush1.bf16.msra.mxu0 0
      %3304 = vmatprep.subr.bf16.mxu0 0
      %3305 = vmatpush1.bf16.msra.mxu0 0
      %3306 = vmatprep.subr.bf16.mxu0 0
      %3307 = vmatpush1.bf16.msra.mxu0 0
      %3308 = vmatprep.subr.bf16.mxu0 0
      %3309 = vmatpush1.bf16.msra.mxu0 0
      %3310 = vmatprep.subr.bf16.mxu0 0
      %3311 = vmatpush1.bf16.msra.mxu0 0
      %3312 = vmatprep.subr.bf16.mxu0 0
      %3313 = vmatpush1.bf16.msra.mxu0 0
      %3314 = vmatprep.subr.bf16.mxu0 0
      %3315 = vmatpush1.bf16.msra.mxu0 0
      %3316 = vmatprep.subr.bf16.mxu0 0
      %3317 = vmatpush1.bf16.msra.mxu0 0
      %3318 = vmatprep.subr.bf16.mxu0 0
      %3319 = vmatpush1.bf16.msra.mxu0 0
      %3320 = vmatprep.subr.bf16.mxu0 0
      %3321 = vmatpush1.bf16.msra.mxu0 0
      %3322 = vmatprep.subr.bf16.mxu0 0
      %3323 = vmatpush1.bf16.msra.mxu0 0
      %3324 = vmatprep.subr.bf16.mxu0 0
      %3325 = vmatpush1.bf16.msra.mxu0 0
      %3326 = vmatprep.subr.bf16.mxu0 0
      %3327 = vmatpush1.bf16.msra.mxu0 0
      %3328 = vmatprep.subr.bf16.mxu0 0
      %3329 = vmatpush1.bf16.msra.mxu0 0
      %3330 = vmatprep.subr.bf16.mxu0 0
      %3331 = vmatpush1.bf16.msra.mxu0 0
      %3332 = vmatprep.mubr.bf16.mxu0 0
      %3333 = vmatmul.mubr.bf16.gmra.mrb[0].mxu0 %v3295
      %v3334 = vpop.f32.mrb[0].mxu0
      %v3335 = vadd.f32 0.0, %v3334
      %v3336 = vpop.f32.mrb[0].mxu0
      %v3337 = vpop.f32.mrb[0].mxu0
      %v3338 = vpop.f32.mrb[0].mxu0
      %3339 = vdwg.mxu0
      %3340 = vrot.lane.b32.xlu0 %v619, 64
      %v3341 = vpop.permute.xlu0 %3340
      %v3343 = vsel %vm733, %v2790, 0
      %v3346 = vsel %vm2816, %v3341, 0
      %3348 = vmatprep.subr.bf16.mxu0 0
      %3349 = vmatpush1.bf16.msra.mxu0 %v3346
      %3350 = vmatprep.subr.bf16.mxu0 0
      %3351 = vmatpush1.bf16.msra.mxu0 0
      %3352 = vmatprep.subr.bf16.mxu0 0
      %3353 = vmatpush1.bf16.msra.mxu0 0
      %3354 = vmatprep.subr.bf16.mxu0 0
      %3355 = vmatpush1.bf16.msra.mxu0 0
      %3356 = vmatprep.subr.bf16.mxu0 0
      %3357 = vmatpush1.bf16.msra.mxu0 0
      %3358 = vmatprep.subr.bf16.mxu0 0
      %3359 = vmatpush1.bf16.msra.mxu0 0
      %3360 = vmatprep.subr.bf16.mxu0 0
      %3361 = vmatpush1.bf16.msra.mxu0 0
      %3362 = vmatprep.subr.bf16.mxu0 0
      %3363 = vmatpush1.bf16.msra.mxu0 0
      %3364 = vmatprep.subr.bf16.mxu0 0
      %3365 = vmatpush1.bf16.msra.mxu0 0
      %3366 = vmatprep.subr.bf16.mxu0 0
      %3367 = vmatpush1.bf16.msra.mxu0 0
      %3368 = vmatprep.subr.bf16.mxu0 0
      %3369 = vmatpush1.bf16.msra.mxu0 0
      %3370 = vmatprep.subr.bf16.mxu0 0
      %3371 = vmatpush1.bf16.msra.mxu0 0
      %3372 = vmatprep.subr.bf16.mxu0 0
      %3373 = vmatpush1.bf16.msra.mxu0 0
      %3374 = vmatprep.subr.bf16.mxu0 0
      %3375 = vmatpush1.bf16.msra.mxu0 0
      %3376 = vmatprep.subr.bf16.mxu0 0
      %3377 = vmatpush1.bf16.msra.mxu0 0
      %3378 = vmatprep.subr.bf16.mxu0 0
      %3379 = vmatpush1.bf16.msra.mxu0 0
      %3380 = vmatprep.mubr.bf16.mxu0 0
      %3381 = vmatmul.mubr.bf16.gmra.mrb[0].mxu0 %v3343
      %v3382 = vpop.f32.mrb[0].mxu0
      %v3383 = vadd.f32 0.0, %v3382
      %v3384 = vpop.f32.mrb[0].mxu0
      %v3385 = vpop.f32.mrb[0].mxu0
      %v3386 = vpop.f32.mrb[0].mxu0
      %3387 = vdwg.mxu0
      %3388 = vrot.lane.b32.xlu0 %v620, 64
      %v3389 = vpop.permute.xlu0 %3388
      %v3391 = vsel %vm733, %v2791, 0
      %v3394 = vsel %vm2816, %v3389, 0
      %3396 = vmatprep.subr.bf16.mxu0 0
      %3397 = vmatpush1.bf16.msra.mxu0 %v3394
      %3398 = vmatprep.subr.bf16.mxu0 0
      %3399 = vmatpush1.bf16.msra.mxu0 0
      %3400 = vmatprep.subr.bf16.mxu0 0
      %3401 = vmatpush1.bf16.msra.mxu0 0
      %3402 = vmatprep.subr.bf16.mxu0 0
      %3403 = vmatpush1.bf16.msra.mxu0 0
      %3404 = vmatprep.subr.bf16.mxu0 0
      %3405 = vmatpush1.bf16.msra.mxu0 0
      %3406 = vmatprep.subr.bf16.mxu0 0
      %3407 = vmatpush1.bf16.msra.mxu0 0
      %3408 = vmatprep.subr.bf16.mxu0 0
      %3409 = vmatpush1.bf16.msra.mxu0 0
      %3410 = vmatprep.subr.bf16.mxu0 0
      %3411 = vmatpush1.bf16.msra.mxu0 0
      %3412 = vmatprep.subr.bf16.mxu0 0
      %3413 = vmatpush1.bf16.msra.mxu0 0
      %3414 = vmatprep.subr.bf16.mxu0 0
      %3415 = vmatpush1.bf16.msra.mxu0 0
      %3416 = vmatprep.subr.bf16.mxu0 0
      %3417 = vmatpush1.bf16.msra.mxu0 0
      %3418 = vmatprep.subr.bf16.mxu0 0
      %3419 = vmatpush1.bf16.msra.mxu0 0
      %3420 = vmatprep.subr.bf16.mxu0 0
      %3421 = vmatpush1.bf16.msra.mxu0 0
      %3422 = vmatprep.subr.bf16.mxu0 0
      %3423 = vmatpush1.bf16.msra.mxu0 0
      %3424 = vmatprep.subr.bf16.mxu0 0
      %3425 = vmatpush1.bf16.msra.mxu0 0
      %3426 = vmatprep.subr.bf16.mxu0 0
      %3427 = vmatpush1.bf16.msra.mxu0 0
      %3428 = vmatprep.mubr.bf16.mxu0 0
      %3429 = vmatmul.mubr.bf16.gmra.mrb[0].mxu0 %v3391
      %v3430 = vpop.f32.mrb[0].mxu0
      %v3431 = vadd.f32 0.0, %v3430
      %v3432 = vpop.f32.mrb[0].mxu0
      %v3433 = vpop.f32.mrb[0].mxu0
      %v3434 = vpop.f32.mrb[0].mxu0
      %3435 = vdwg.mxu0
      %3436 = vrot.lane.b32.xlu0 %v621, 64
      %v3437 = vpop.permute.xlu0 %3436
      %v3439 = vsel %vm733, %v2792, 0
      %v3442 = vsel %vm2816, %v3437, 0
      %3444 = vmatprep.subr.bf16.mxu0 0
      %3445 = vmatpush1.bf16.msra.mxu0 %v3442
      %3446 = vmatprep.subr.bf16.mxu0 0
      %3447 = vmatpush1.bf16.msra.mxu0 0
      %3448 = vmatprep.subr.bf16.mxu0 0
      %3449 = vmatpush1.bf16.msra.mxu0 0
      %3450 = vmatprep.subr.bf16.mxu0 0
      %3451 = vmatpush1.bf16.msra.mxu0 0
      %3452 = vmatprep.subr.bf16.mxu0 0
      %3453 = vmatpush1.bf16.msra.mxu0 0
      %3454 = vmatprep.subr.bf16.mxu0 0
      %3455 = vmatpush1.bf16.msra.mxu0 0
      %3456 = vmatprep.subr.bf16.mxu0 0
      %3457 = vmatpush1.bf16.msra.mxu0 0
      %3458 = vmatprep.subr.bf16.mxu0 0
      %3459 = vmatpush1.bf16.msra.mxu0 0
      %3460 = vmatprep.subr.bf16.mxu0 0
      %3461 = vmatpush1.bf16.msra.mxu0 0
      %3462 = vmatprep.subr.bf16.mxu0 0
      %3463 = vmatpush1.bf16.msra.mxu0 0
      %3464 = vmatprep.subr.bf16.mxu0 0
      %3465 = vmatpush1.bf16.msra.mxu0 0
      %3466 = vmatprep.subr.bf16.mxu0 0
      %3467 = vmatpush1.bf16.msra.mxu0 0
      %3468 = vmatprep.subr.bf16.mxu0 0
      %3469 = vmatpush1.bf16.msra.mxu0 0
      %3470 = vmatprep.subr.bf16.mxu0 0
      %3471 = vmatpush1.bf16.msra.mxu0 0
      %3472 = vmatprep.subr.bf16.mxu0 0
      %3473 = vmatpush1.bf16.msra.mxu0 0
      %3474 = vmatprep.subr.bf16.mxu0 0
      %3475 = vmatpush1.bf16.msra.mxu0 0
      %3476 = vmatprep.mubr.bf16.mxu0 0
      %3477 = vmatmul.mubr.bf16.gmra.mrb[0].mxu0 %v3439
      %v3478 = vpop.f32.mrb[0].mxu0
      %v3479 = vadd.f32 0.0, %v3478
      %v3480 = vpop.f32.mrb[0].mxu0
      %v3481 = vpop.f32.mrb[0].mxu0
      %v3482 = vpop.f32.mrb[0].mxu0
      %3483 = vdwg.mxu0
      %3484 = vrot.lane.b32.xlu0 %v622, 64
      %v3485 = vpop.permute.xlu0 %3484
      %v3487 = vsel %vm733, %v2793, 0
      %v3490 = vsel %vm2816, %v3485, 0
      %3492 = vmatprep.subr.bf16.mxu0 0
      %3493 = vmatpush1.bf16.msra.mxu0 %v3490
      %3494 = vmatprep.subr.bf16.mxu0 0
      %3495 = vmatpush1.bf16.msra.mxu0 0
      %3496 = vmatprep.subr.bf16.mxu0 0
      %3497 = vmatpush1.bf16.msra.mxu0 0
      %3498 = vmatprep.subr.bf16.mxu0 0
      %3499 = vmatpush1.bf16.msra.mxu0 0
      %3500 = vmatprep.subr.bf16.mxu0 0
      %3501 = vmatpush1.bf16.msra.mxu0 0
      %3502 = vmatprep.subr.bf16.mxu0 0
      %3503 = vmatpush1.bf16.msra.mxu0 0
      %3504 = vmatprep.subr.bf16.mxu0 0
      %3505 = vmatpush1.bf16.msra.mxu0 0
      %3506 = vmatprep.subr.bf16.mxu0 0
      %3507 = vmatpush1.bf16.msra.mxu0 0
      %3508 = vmatprep.subr.bf16.mxu0 0
      %3509 = vmatpush1.bf16.msra.mxu0 0
      %3510 = vmatprep.subr.bf16.mxu0 0
      %3511 = vmatpush1.bf16.msra.mxu0 0
      %3512 = vmatprep.subr.bf16.mxu0 0
      %3513 = vmatpush1.bf16.msra.mxu0 0
      %3514 = vmatprep.subr.bf16.mxu0 0
      %3515 = vmatpush1.bf16.msra.mxu0 0
      %3516 = vmatprep.subr.bf16.mxu0 0
      %3517 = vmatpush1.bf16.msra.mxu0 0
      %3518 = vmatprep.subr.bf16.mxu0 0
      %3519 = vmatpush1.bf16.msra.mxu0 0
      %3520 = vmatprep.subr.bf16.mxu0 0
      %3521 = vmatpush1.bf16.msra.mxu0 0
      %3522 = vmatprep.subr.bf16.mxu0 0
      %3523 = vmatpush1.bf16.msra.mxu0 0
      %3524 = vmatprep.mubr.bf16.mxu0 0
      %3525 = vmatmul.mubr.bf16.gmra.mrb[0].mxu0 %v3487
      %v3526 = vpop.f32.mrb[0].mxu0
      %v3527 = vadd.f32 0.0, %v3526
      %v3528 = vpop.f32.mrb[0].mxu0
      %v3529 = vpop.f32.mrb[0].mxu0
      %v3530 = vpop.f32.mrb[0].mxu0
      %3531 = vdwg.mxu0
      %3532 = vrot.lane.b32.xlu0 %v623, 64
      %v3533 = vpop.permute.xlu0 %3532
      %v3535 = vsel %vm733, %v2794, 0
      %v3538 = vsel %vm2816, %v3533, 0
      %3540 = vmatprep.subr.bf16.mxu0 0
      %3541 = vmatpush1.bf16.msra.mxu0 %v3538
      %3542 = vmatprep.subr.bf16.mxu0 0
      %3543 = vmatpush1.bf16.msra.mxu0 0
      %3544 = vmatprep.subr.bf16.mxu0 0
      %3545 = vmatpush1.bf16.msra.mxu0 0
      %3546 = vmatprep.subr.bf16.mxu0 0
      %3547 = vmatpush1.bf16.msra.mxu0 0
      %3548 = vmatprep.subr.bf16.mxu0 0
      %3549 = vmatpush1.bf16.msra.mxu0 0
      %3550 = vmatprep.subr.bf16.mxu0 0
      %3551 = vmatpush1.bf16.msra.mxu0 0
      %3552 = vmatprep.subr.bf16.mxu0 0
      %3553 = vmatpush1.bf16.msra.mxu0 0
      %3554 = vmatprep.subr.bf16.mxu0 0
      %3555 = vmatpush1.bf16.msra.mxu0 0
      %3556 = vmatprep.subr.bf16.mxu0 0
      %3557 = vmatpush1.bf16.msra.mxu0 0
      %3558 = vmatprep.subr.bf16.mxu0 0
      %3559 = vmatpush1.bf16.msra.mxu0 0
      %3560 = vmatprep.subr.bf16.mxu0 0
      %3561 = vmatpush1.bf16.msra.mxu0 0
      %3562 = vmatprep.subr.bf16.mxu0 0
      %3563 = vmatpush1.bf16.msra.mxu0 0
      %3564 = vmatprep.subr.bf16.mxu0 0
      %3565 = vmatpush1.bf16.msra.mxu0 0
      %3566 = vmatprep.subr.bf16.mxu0 0
      %3567 = vmatpush1.bf16.msra.mxu0 0
      %3568 = vmatprep.subr.bf16.mxu0 0
      %3569 = vmatpush1.bf16.msra.mxu0 0
      %3570 = vmatprep.subr.bf16.mxu0 0
      %3571 = vmatpush1.bf16.msra.mxu0 0
      %3572 = vmatprep.mubr.bf16.mxu0 0
      %3573 = vmatmul.mubr.bf16.gmra.mrb[0].mxu0 %v3535
      %v3574 = vpop.f32.mrb[0].mxu0
      %v3575 = vadd.f32 0.0, %v3574
      %v3576 = vpop.f32.mrb[0].mxu0
      %v3577 = vpop.f32.mrb[0].mxu0
      %v3578 = vpop.f32.mrb[0].mxu0
      %3579 = vdwg.mxu0
      %3580 = vrot.lane.b32.xlu0 %v624, 64
      %v3581 = vpop.permute.xlu0 %3580
      %v3583 = vsel %vm733, %v2795, 0
      %v3586 = vsel %vm2816, %v3581, 0
      %3588 = vmatprep.subr.bf16.mxu0 0
      %3589 = vmatpush1.bf16.msra.mxu0 %v3586
      %3590 = vmatprep.subr.bf16.mxu0 0
      %3591 = vmatpush1.bf16.msra.mxu0 0
      %3592 = vmatprep.subr.bf16.mxu0 0
      %3593 = vmatpush1.bf16.msra.mxu0 0
      %3594 = vmatprep.subr.bf16.mxu0 0
      %3595 = vmatpush1.bf16.msra.mxu0 0
      %3596 = vmatprep.subr.bf16.mxu0 0
      %3597 = vmatpush1.bf16.msra.mxu0 0
      %3598 = vmatprep.subr.bf16.mxu0 0
      %3599 = vmatpush1.bf16.msra.mxu0 0
      %3600 = vmatprep.subr.bf16.mxu0 0
      %3601 = vmatpush1.bf16.msra.mxu0 0
      %3602 = vmatprep.subr.bf16.mxu0 0
      %3603 = vmatpush1.bf16.msra.mxu0 0
      %3604 = vmatprep.subr.bf16.mxu0 0
      %3605 = vmatpush1.bf16.msra.mxu0 0
      %3606 = vmatprep.subr.bf16.mxu0 0
      %3607 = vmatpush1.bf16.msra.mxu0 0
      %3608 = vmatprep.subr.bf16.mxu0 0
      %3609 = vmatpush1.bf16.msra.mxu0 0
      %3610 = vmatprep.subr.bf16.mxu0 0
      %3611 = vmatpush1.bf16.msra.mxu0 0
      %3612 = vmatprep.subr.bf16.mxu0 0
      %3613 = vmatpush1.bf16.msra.mxu0 0
      %3614 = vmatprep.subr.bf16.mxu0 0
      %3615 = vmatpush1.bf16.msra.mxu0 0
      %3616 = vmatprep.subr.bf16.mxu0 0
      %3617 = vmatpush1.bf16.msra.mxu0 0
      %3618 = vmatprep.subr.bf16.mxu0 0
      %3619 = vmatpush1.bf16.msra.mxu0 0
      %3620 = vmatprep.mubr.bf16.mxu0 0
      %3621 = vmatmul.mubr.bf16.gmra.mrb[0].mxu0 %v3583
      %v3622 = vpop.f32.mrb[0].mxu0
      %v3623 = vadd.f32 0.0, %v3622
      %v3624 = vpop.f32.mrb[0].mxu0
      %v3625 = vpop.f32.mrb[0].mxu0
      %v3626 = vpop.f32.mrb[0].mxu0
      %3627 = vdwg.mxu0
      %3628 = vrot.lane.b32.xlu0 %v625, 64
      %v3629 = vpop.permute.xlu0 %3628
      %v3631 = vsel %vm733, %v2796, 0
      %v3634 = vsel %vm2816, %v3629, 0
      %3636 = vmatprep.subr.bf16.mxu0 0
      %3637 = vmatpush1.bf16.msra.mxu0 %v3634
      %3638 = vmatprep.subr.bf16.mxu0 0
      %3639 = vmatpush1.bf16.msra.mxu0 0
      %3640 = vmatprep.subr.bf16.mxu0 0
      %3641 = vmatpush1.bf16.msra.mxu0 0
      %3642 = vmatprep.subr.bf16.mxu0 0
      %3643 = vmatpush1.bf16.msra.mxu0 0
      %3644 = vmatprep.subr.bf16.mxu0 0
      %3645 = vmatpush1.bf16.msra.mxu0 0
      %3646 = vmatprep.subr.bf16.mxu0 0
      %3647 = vmatpush1.bf16.msra.mxu0 0
      %3648 = vmatprep.subr.bf16.mxu0 0
      %3649 = vmatpush1.bf16.msra.mxu0 0
      %3650 = vmatprep.subr.bf16.mxu0 0
      %3651 = vmatpush1.bf16.msra.mxu0 0
      %3652 = vmatprep.subr.bf16.mxu0 0
      %3653 = vmatpush1.bf16.msra.mxu0 0
      %3654 = vmatprep.subr.bf16.mxu0 0
      %3655 = vmatpush1.bf16.msra.mxu0 0
      %3656 = vmatprep.subr.bf16.mxu0 0
      %3657 = vmatpush1.bf16.msra.mxu0 0
      %3658 = vmatprep.subr.bf16.mxu0 0
      %3659 = vmatpush1.bf16.msra.mxu0 0
      %3660 = vmatprep.subr.bf16.mxu0 0
      %3661 = vmatpush1.bf16.msra.mxu0 0
      %3662 = vmatprep.subr.bf16.mxu0 0
      %3663 = vmatpush1.bf16.msra.mxu0 0
      %3664 = vmatprep.subr.bf16.mxu0 0
      %3665 = vmatpush1.bf16.msra.mxu0 0
      %3666 = vmatprep.subr.bf16.mxu0 0
      %3667 = vmatpush1.bf16.msra.mxu0 0
      %3668 = vmatprep.mubr.bf16.mxu0 0
      %3669 = vmatmul.mubr.bf16.gmra.mrb[0].mxu0 %v3631
      %v3670 = vpop.f32.mrb[0].mxu0
      %v3671 = vadd.f32 0.0, %v3670
      %v3672 = vpop.f32.mrb[0].mxu0
      %v3673 = vpop.f32.mrb[0].mxu0
      %v3674 = vpop.f32.mrb[0].mxu0
      %3675 = vdwg.mxu0
      %3676 = vrot.lane.b32.xlu0 %v626, 64
      %v3677 = vpop.permute.xlu0 %3676
      %v3679 = vsel %vm733, %v2797, 0
      %v3682 = vsel %vm2816, %v3677, 0
      %3684 = vmatprep.subr.bf16.mxu0 0
      %3685 = vmatpush1.bf16.msra.mxu0 %v3682
      %3686 = vmatprep.subr.bf16.mxu0 0
      %3687 = vmatpush1.bf16.msra.mxu0 0
      %3688 = vmatprep.subr.bf16.mxu0 0
      %3689 = vmatpush1.bf16.msra.mxu0 0
      %3690 = vmatprep.subr.bf16.mxu0 0
      %3691 = vmatpush1.bf16.msra.mxu0 0
      %3692 = vmatprep.subr.bf16.mxu0 0
      %3693 = vmatpush1.bf16.msra.mxu0 0
      %3694 = vmatprep.subr.bf16.mxu0 0
      %3695 = vmatpush1.bf16.msra.mxu0 0
      %3696 = vmatprep.subr.bf16.mxu0 0
      %3697 = vmatpush1.bf16.msra.mxu0 0
      %3698 = vmatprep.subr.bf16.mxu0 0
      %3699 = vmatpush1.bf16.msra.mxu0 0
      %3700 = vmatprep.subr.bf16.mxu0 0
      %3701 = vmatpush1.bf16.msra.mxu0 0
      %3702 = vmatprep.subr.bf16.mxu0 0
      %3703 = vmatpush1.bf16.msra.mxu0 0
      %3704 = vmatprep.subr.bf16.mxu0 0
      %3705 = vmatpush1.bf16.msra.mxu0 0
      %3706 = vmatprep.subr.bf16.mxu0 0
      %3707 = vmatpush1.bf16.msra.mxu0 0
      %3708 = vmatprep.subr.bf16.mxu0 0
      %3709 = vmatpush1.bf16.msra.mxu0 0
      %3710 = vmatprep.subr.bf16.mxu0 0
      %3711 = vmatpush1.bf16.msra.mxu0 0
      %3712 = vmatprep.subr.bf16.mxu0 0
      %3713 = vmatpush1.bf16.msra.mxu0 0
      %3714 = vmatprep.subr.bf16.mxu0 0
      %3715 = vmatpush1.bf16.msra.mxu0 0
      %3716 = vmatprep.mubr.bf16.mxu0 0
      %3717 = vmatmul.mubr.bf16.gmra.mrb[0].mxu0 %v3679
      %v3718 = vpop.f32.mrb[0].mxu0
      %v3719 = vadd.f32 0.0, %v3718
      %v3720 = vpop.f32.mrb[0].mxu0
      %v3721 = vpop.f32.mrb[0].mxu0
      %v3722 = vpop.f32.mrb[0].mxu0
      %3723 = vdwg.mxu0
      %3724 = vrot.lane.b32.xlu0 %v627, 64
      %v3725 = vpop.permute.xlu0 %3724
      %v3727 = vsel %vm733, %v2798, 0
      %v3730 = vsel %vm2816, %v3725, 0
      %3732 = vmatprep.subr.bf16.mxu0 0
      %3733 = vmatpush1.bf16.msra.mxu0 %v3730
      %3734 = vmatprep.subr.bf16.mxu0 0
      %3735 = vmatpush1.bf16.msra.mxu0 0
      %3736 = vmatprep.subr.bf16.mxu0 0
      %3737 = vmatpush1.bf16.msra.mxu0 0
      %3738 = vmatprep.subr.bf16.mxu0 0
      %3739 = vmatpush1.bf16.msra.mxu0 0
      %3740 = vmatprep.subr.bf16.mxu0 0
      %3741 = vmatpush1.bf16.msra.mxu0 0
      %3742 = vmatprep.subr.bf16.mxu0 0
      %3743 = vmatpush1.bf16.msra.mxu0 0
      %3744 = vmatprep.subr.bf16.mxu0 0
      %3745 = vmatpush1.bf16.msra.mxu0 0
      %3746 = vmatprep.subr.bf16.mxu0 0
      %3747 = vmatpush1.bf16.msra.mxu0 0
      %3748 = vmatprep.subr.bf16.mxu0 0
      %3749 = vmatpush1.bf16.msra.mxu0 0
      %3750 = vmatprep.subr.bf16.mxu0 0
      %3751 = vmatpush1.bf16.msra.mxu0 0
      %3752 = vmatprep.subr.bf16.mxu0 0
      %3753 = vmatpush1.bf16.msra.mxu0 0
      %3754 = vmatprep.subr.bf16.mxu0 0
      %3755 = vmatpush1.bf16.msra.mxu0 0
      %3756 = vmatprep.subr.bf16.mxu0 0
      %3757 = vmatpush1.bf16.msra.mxu0 0
      %3758 = vmatprep.subr.bf16.mxu0 0
      %3759 = vmatpush1.bf16.msra.mxu0 0
      %3760 = vmatprep.subr.bf16.mxu0 0
      %3761 = vmatpush1.bf16.msra.mxu0 0
      %3762 = vmatprep.subr.bf16.mxu0 0
      %3763 = vmatpush1.bf16.msra.mxu0 0
      %3764 = vmatprep.mubr.bf16.mxu0 0
      %3765 = vmatmul.mubr.bf16.gmra.mrb[0].mxu0 %v3727
      %v3766 = vpop.f32.mrb[0].mxu0
      %v3767 = vadd.f32 0.0, %v3766
      %v3768 = vpop.f32.mrb[0].mxu0
      %v3769 = vpop.f32.mrb[0].mxu0
      %v3770 = vpop.f32.mrb[0].mxu0
      %3771 = vdwg.mxu0
      %3772 = vrot.lane.b32.xlu0 %v628, 64
      %v3773 = vpop.permute.xlu0 %3772
      %v3775 = vsel %vm733, %v2799, 0
      %v3778 = vsel %vm2816, %v3773, 0
      %3780 = vmatprep.subr.bf16.mxu0 0
      %3781 = vmatpush1.bf16.msra.mxu0 %v3778
      %3782 = vmatprep.subr.bf16.mxu0 0
      %3783 = vmatpush1.bf16.msra.mxu0 0
      %3784 = vmatprep.subr.bf16.mxu0 0
      %3785 = vmatpush1.bf16.msra.mxu0 0
      %3786 = vmatprep.subr.bf16.mxu0 0
      %3787 = vmatpush1.bf16.msra.mxu0 0
      %3788 = vmatprep.subr.bf16.mxu0 0
      %3789 = vmatpush1.bf16.msra.mxu0 0
      %3790 = vmatprep.subr.bf16.mxu0 0
      %3791 = vmatpush1.bf16.msra.mxu0 0
      %3792 = vmatprep.subr.bf16.mxu0 0
      %3793 = vmatpush1.bf16.msra.mxu0 0
      %3794 = vmatprep.subr.bf16.mxu0 0
      %3795 = vmatpush1.bf16.msra.mxu0 0
      %3796 = vmatprep.subr.bf16.mxu0 0
      %3797 = vmatpush1.bf16.msra.mxu0 0
      %3798 = vmatprep.subr.bf16.mxu0 0
      %3799 = vmatpush1.bf16.msra.mxu0 0
      %3800 = vmatprep.subr.bf16.mxu0 0
      %3801 = vmatpush1.bf16.msra.mxu0 0
      %3802 = vmatprep.subr.bf16.mxu0 0
      %3803 = vmatpush1.bf16.msra.mxu0 0
      %3804 = vmatprep.subr.bf16.mxu0 0
      %3805 = vmatpush1.bf16.msra.mxu0 0
      %3806 = vmatprep.subr.bf16.mxu0 0
      %3807 = vmatpush1.bf16.msra.mxu0 0
      %3808 = vmatprep.subr.bf16.mxu0 0
      %3809 = vmatpush1.bf16.msra.mxu0 0
      %3810 = vmatprep.subr.bf16.mxu0 0
      %3811 = vmatpush1.bf16.msra.mxu0 0
      %3812 = vmatprep.mubr.bf16.mxu0 0
      %3813 = vmatmul.mubr.bf16.gmra.mrb[0].mxu0 %v3775
      %v3814 = vpop.f32.mrb[0].mxu0
      %v3815 = vadd.f32 0.0, %v3814
      %v3816 = vpop.f32.mrb[0].mxu0
      %v3817 = vpop.f32.mrb[0].mxu0
      %v3818 = vpop.f32.mrb[0].mxu0
      %3819 = vdwg.mxu0
      %3820 = vrot.lane.b32.xlu0 %v629, 64
      %v3821 = vpop.permute.xlu0 %3820
      %v3823 = vsel %vm733, %v2800, 0
      %v3826 = vsel %vm2816, %v3821, 0
      %3828 = vmatprep.subr.bf16.mxu0 0
      %3829 = vmatpush1.bf16.msra.mxu0 %v3826
      %3830 = vmatprep.subr.bf16.mxu0 0
      %3831 = vmatpush1.bf16.msra.mxu0 0
      %3832 = vmatprep.subr.bf16.mxu0 0
      %3833 = vmatpush1.bf16.msra.mxu0 0
      %3834 = vmatprep.subr.bf16.mxu0 0
      %3835 = vmatpush1.bf16.msra.mxu0 0
      %3836 = vmatprep.subr.bf16.mxu0 0
      %3837 = vmatpush1.bf16.msra.mxu0 0
      %3838 = vmatprep.subr.bf16.mxu0 0
      %3839 = vmatpush1.bf16.msra.mxu0 0
      %3840 = vmatprep.subr.bf16.mxu0 0
      %3841 = vmatpush1.bf16.msra.mxu0 0
      %3842 = vmatprep.subr.bf16.mxu0 0
      %3843 = vmatpush1.bf16.msra.mxu0 0
      %3844 = vmatprep.subr.bf16.mxu0 0
      %3845 = vmatpush1.bf16.msra.mxu0 0
      %3846 = vmatprep.subr.bf16.mxu0 0
      %3847 = vmatpush1.bf16.msra.mxu0 0
      %3848 = vmatprep.subr.bf16.mxu0 0
      %3849 = vmatpush1.bf16.msra.mxu0 0
      %3850 = vmatprep.subr.bf16.mxu0 0
      %3851 = vmatpush1.bf16.msra.mxu0 0
      %3852 = vmatprep.subr.bf16.mxu0 0
      %3853 = vmatpush1.bf16.msra.mxu0 0
      %3854 = vmatprep.subr.bf16.mxu0 0
      %3855 = vmatpush1.bf16.msra.mxu0 0
      %3856 = vmatprep.subr.bf16.mxu0 0
      %3857 = vmatpush1.bf16.msra.mxu0 0
      %3858 = vmatprep.subr.bf16.mxu0 0
      %3859 = vmatpush1.bf16.msra.mxu0 0
      %3860 = vmatprep.mubr.bf16.mxu0 0
      %3861 = vmatmul.mubr.bf16.gmra.mrb[0].mxu0 %v3823
      %v3862 = vpop.f32.mrb[0].mxu0
      %v3863 = vadd.f32 0.0, %v3862
      %v3864 = vpop.f32.mrb[0].mxu0
      %v3865 = vpop.f32.mrb[0].mxu0
      %v3866 = vpop.f32.mrb[0].mxu0
      %3867 = vdwg.mxu0
      %3868 = vrot.lane.b32.xlu0 %v630, 64
      %v3869 = vpop.permute.xlu0 %3868
      %v3871 = vsel %vm733, %v2801, 0
      %v3874 = vsel %vm2816, %v3869, 0
      %3876 = vmatprep.subr.bf16.mxu0 0
      %3877 = vmatpush1.bf16.msra.mxu0 %v3874
      %3878 = vmatprep.subr.bf16.mxu0 0
      %3879 = vmatpush1.bf16.msra.mxu0 0
      %3880 = vmatprep.subr.bf16.mxu0 0
      %3881 = vmatpush1.bf16.msra.mxu0 0
      %3882 = vmatprep.subr.bf16.mxu0 0
      %3883 = vmatpush1.bf16.msra.mxu0 0
      %3884 = vmatprep.subr.bf16.mxu0 0
      %3885 = vmatpush1.bf16.msra.mxu0 0
      %3886 = vmatprep.subr.bf16.mxu0 0
      %3887 = vmatpush1.bf16.msra.mxu0 0
      %3888 = vmatprep.subr.bf16.mxu0 0
      %3889 = vmatpush1.bf16.msra.mxu0 0
      %3890 = vmatprep.subr.bf16.mxu0 0
      %3891 = vmatpush1.bf16.msra.mxu0 0
      %3892 = vmatprep.subr.bf16.mxu0 0
      %3893 = vmatpush1.bf16.msra.mxu0 0
      %3894 = vmatprep.subr.bf16.mxu0 0
      %3895 = vmatpush1.bf16.msra.mxu0 0
      %3896 = vmatprep.subr.bf16.mxu0 0
      %3897 = vmatpush1.bf16.msra.mxu0 0
      %3898 = vmatprep.subr.bf16.mxu0 0
      %3899 = vmatpush1.bf16.msra.mxu0 0
      %3900 = vmatprep.subr.bf16.mxu0 0
      %3901 = vmatpush1.bf16.msra.mxu0 0
      %3902 = vmatprep.subr.bf16.mxu0 0
      %3903 = vmatpush1.bf16.msra.mxu0 0
      %3904 = vmatprep.subr.bf16.mxu0 0
      %3905 = vmatpush1.bf16.msra.mxu0 0
      %3906 = vmatprep.subr.bf16.mxu0 0
      %3907 = vmatpush1.bf16.msra.mxu0 0
      %3908 = vmatprep.mubr.bf16.mxu0 0
      %3909 = vmatmul.mubr.bf16.gmra.mrb[0].mxu0 %v3871
      %v3910 = vpop.f32.mrb[0].mxu0
      %v3911 = vadd.f32 0.0, %v3910
      %v3912 = vpop.f32.mrb[0].mxu0
      %v3913 = vpop.f32.mrb[0].mxu0
      %v3914 = vpop.f32.mrb[0].mxu0
      %3915 = vdwg.mxu0
      %3916 = vrot.lane.b32.xlu0 %v631, 64
      %v3917 = vpop.permute.xlu0 %3916
      %v3919 = vsel %vm733, %v2802, 0
      %v3922 = vsel %vm2816, %v3917, 0
      %3924 = vmatprep.subr.bf16.mxu0 0
      %3925 = vmatpush1.bf16.msra.mxu0 %v3922
      %3926 = vmatprep.subr.bf16.mxu0 0
      %3927 = vmatpush1.bf16.msra.mxu0 0
      %3928 = vmatprep.subr.bf16.mxu0 0
      %3929 = vmatpush1.bf16.msra.mxu0 0
      %3930 = vmatprep.subr.bf16.mxu0 0
      %3931 = vmatpush1.bf16.msra.mxu0 0
      %3932 = vmatprep.subr.bf16.mxu0 0
      %3933 = vmatpush1.bf16.msra.mxu0 0
      %3934 = vmatprep.subr.bf16.mxu0 0
      %3935 = vmatpush1.bf16.msra.mxu0 0
      %3936 = vmatprep.subr.bf16.mxu0 0
      %3937 = vmatpush1.bf16.msra.mxu0 0
      %3938 = vmatprep.subr.bf16.mxu0 0
      %3939 = vmatpush1.bf16.msra.mxu0 0
      %3940 = vmatprep.subr.bf16.mxu0 0
      %3941 = vmatpush1.bf16.msra.mxu0 0
      %3942 = vmatprep.subr.bf16.mxu0 0
      %3943 = vmatpush1.bf16.msra.mxu0 0
      %3944 = vmatprep.subr.bf16.mxu0 0
      %3945 = vmatpush1.bf16.msra.mxu0 0
      %3946 = vmatprep.subr.bf16.mxu0 0
      %3947 = vmatpush1.bf16.msra.mxu0 0
      %3948 = vmatprep.subr.bf16.mxu0 0
      %3949 = vmatpush1.bf16.msra.mxu0 0
      %3950 = vmatprep.subr.bf16.mxu0 0
      %3951 = vmatpush1.bf16.msra.mxu0 0
      %3952 = vmatprep.subr.bf16.mxu0 0
      %3953 = vmatpush1.bf16.msra.mxu0 0
      %3954 = vmatprep.subr.bf16.mxu0 0
      %3955 = vmatpush1.bf16.msra.mxu0 0
      %3956 = vmatprep.mubr.bf16.mxu0 0
      %3957 = vmatmul.mubr.bf16.gmra.mrb[0].mxu0 %v3919
      %v3958 = vpop.f32.mrb[0].mxu0
      %v3959 = vadd.f32 0.0, %v3958
      %v3960 = vpop.f32.mrb[0].mxu0
      %v3961 = vpop.f32.mrb[0].mxu0
      %v3962 = vpop.f32.mrb[0].mxu0
      %3963 = vdwg.mxu0
      %3964 = vrot.lane.b32.xlu0 %v632, 64
      %v3965 = vpop.permute.xlu0 %3964
      %v3967 = vsel %vm733, %v2803, 0
      %v3970 = vsel %vm2816, %v3965, 0
      %3972 = vmatprep.subr.bf16.mxu0 0
      %3973 = vmatpush1.bf16.msra.mxu0 %v3970
      %3974 = vmatprep.subr.bf16.mxu0 0
      %3975 = vmatpush1.bf16.msra.mxu0 0
      %3976 = vmatprep.subr.bf16.mxu0 0
      %3977 = vmatpush1.bf16.msra.mxu0 0
      %3978 = vmatprep.subr.bf16.mxu0 0
      %3979 = vmatpush1.bf16.msra.mxu0 0
      %3980 = vmatprep.subr.bf16.mxu0 0
      %3981 = vmatpush1.bf16.msra.mxu0 0
      %3982 = vmatprep.subr.bf16.mxu0 0
      %3983 = vmatpush1.bf16.msra.mxu0 0
      %3984 = vmatprep.subr.bf16.mxu0 0
      %3985 = vmatpush1.bf16.msra.mxu0 0
      %3986 = vmatprep.subr.bf16.mxu0 0
      %3987 = vmatpush1.bf16.msra.mxu0 0
      %3988 = vmatprep.subr.bf16.mxu0 0
      %3989 = vmatpush1.bf16.msra.mxu0 0
      %3990 = vmatprep.subr.bf16.mxu0 0
      %3991 = vmatpush1.bf16.msra.mxu0 0
      %3992 = vmatprep.subr.bf16.mxu0 0
      %3993 = vmatpush1.bf16.msra.mxu0 0
      %3994 = vmatprep.subr.bf16.mxu0 0
      %3995 = vmatpush1.bf16.msra.mxu0 0
      %3996 = vmatprep.subr.bf16.mxu0 0
      %3997 = vmatpush1.bf16.msra.mxu0 0
      %3998 = vmatprep.subr.bf16.mxu0 0
      %3999 = vmatpush1.bf16.msra.mxu0 0
      %4000 = vmatprep.subr.bf16.mxu0 0
      %4001 = vmatpush1.bf16.msra.mxu0 0
      %4002 = vmatprep.subr.bf16.mxu0 0
      %4003 = vmatpush1.bf16.msra.mxu0 0
      %4004 = vmatprep.mubr.bf16.mxu0 0
      %4005 = vmatmul.mubr.bf16.gmra.mrb[0].mxu0 %v3967
      %v4006 = vpop.f32.mrb[0].mxu0
      %v4007 = vadd.f32 0.0, %v4006
      %v4008 = vpop.f32.mrb[0].mxu0
      %v4009 = vpop.f32.mrb[0].mxu0
      %v4010 = vpop.f32.mrb[0].mxu0
      %4011 = vdwg.mxu0
      %4012 = vrot.lane.b32.xlu0 %v633, 64
      %v4013 = vpop.permute.xlu0 %4012
      %v4015 = vsel %vm733, %v2804, 0
      %v4018 = vsel %vm2816, %v4013, 0
      %4020 = vmatprep.subr.bf16.mxu0 0
      %4021 = vmatpush1.bf16.msra.mxu0 %v4018
      %4022 = vmatprep.subr.bf16.mxu0 0
      %4023 = vmatpush1.bf16.msra.mxu0 0
      %4024 = vmatprep.subr.bf16.mxu0 0
      %4025 = vmatpush1.bf16.msra.mxu0 0
      %4026 = vmatprep.subr.bf16.mxu0 0
      %4027 = vmatpush1.bf16.msra.mxu0 0
      %4028 = vmatprep.subr.bf16.mxu0 0
      %4029 = vmatpush1.bf16.msra.mxu0 0
      %4030 = vmatprep.subr.bf16.mxu0 0
      %4031 = vmatpush1.bf16.msra.mxu0 0
      %4032 = vmatprep.subr.bf16.mxu0 0
      %4033 = vmatpush1.bf16.msra.mxu0 0
      %4034 = vmatprep.subr.bf16.mxu0 0
      %4035 = vmatpush1.bf16.msra.mxu0 0
      %4036 = vmatprep.subr.bf16.mxu0 0
      %4037 = vmatpush1.bf16.msra.mxu0 0
      %4038 = vmatprep.subr.bf16.mxu0 0
      %4039 = vmatpush1.bf16.msra.mxu0 0
      %4040 = vmatprep.subr.bf16.mxu0 0
      %4041 = vmatpush1.bf16.msra.mxu0 0
      %4042 = vmatprep.subr.bf16.mxu0 0
      %4043 = vmatpush1.bf16.msra.mxu0 0
      %4044 = vmatprep.subr.bf16.mxu0 0
      %4045 = vmatpush1.bf16.msra.mxu0 0
      %4046 = vmatprep.subr.bf16.mxu0 0
      %4047 = vmatpush1.bf16.msra.mxu0 0
      %4048 = vmatprep.subr.bf16.mxu0 0
      %4049 = vmatpush1.bf16.msra.mxu0 0
      %4050 = vmatprep.subr.bf16.mxu0 0
      %4051 = vmatpush1.bf16.msra.mxu0 0
      %4052 = vmatprep.mubr.bf16.mxu0 0
      %4053 = vmatmul.mubr.bf16.gmra.mrb[0].mxu0 %v4015
      %v4054 = vpop.f32.mrb[0].mxu0
      %v4055 = vadd.f32 0.0, %v4054
      %v4056 = vpop.f32.mrb[0].mxu0
      %v4057 = vpop.f32.mrb[0].mxu0
      %v4058 = vpop.f32.mrb[0].mxu0
      %4059 = vdwg.mxu0
      %4060 = vrot.lane.b32.xlu0 %v634, 64
      %v4061 = vpop.permute.xlu0 %4060
      %v4063 = vsel %vm733, %v2805, 0
      %v4066 = vsel %vm2816, %v4061, 0
      %4068 = vmatprep.subr.bf16.mxu0 0
      %4069 = vmatpush1.bf16.msra.mxu0 %v4066
      %4070 = vmatprep.subr.bf16.mxu0 0
      %4071 = vmatpush1.bf16.msra.mxu0 0
      %4072 = vmatprep.subr.bf16.mxu0 0
      %4073 = vmatpush1.bf16.msra.mxu0 0
      %4074 = vmatprep.subr.bf16.mxu0 0
      %4075 = vmatpush1.bf16.msra.mxu0 0
      %4076 = vmatprep.subr.bf16.mxu0 0
      %4077 = vmatpush1.bf16.msra.mxu0 0
      %4078 = vmatprep.subr.bf16.mxu0 0
      %4079 = vmatpush1.bf16.msra.mxu0 0
      %4080 = vmatprep.subr.bf16.mxu0 0
      %4081 = vmatpush1.bf16.msra.mxu0 0
      %4082 = vmatprep.subr.bf16.mxu0 0
      %4083 = vmatpush1.bf16.msra.mxu0 0
      %4084 = vmatprep.subr.bf16.mxu0 0
      %4085 = vmatpush1.bf16.msra.mxu0 0
      %4086 = vmatprep.subr.bf16.mxu0 0
      %4087 = vmatpush1.bf16.msra.mxu0 0
      %4088 = vmatprep.subr.bf16.mxu0 0
      %4089 = vmatpush1.bf16.msra.mxu0 0
      %4090 = vmatprep.subr.bf16.mxu0 0
      %4091 = vmatpush1.bf16.msra.mxu0 0
      %4092 = vmatprep.subr.bf16.mxu0 0
      %4093 = vmatpush1.bf16.msra.mxu0 0
      %4094 = vmatprep.subr.bf16.mxu0 0
      %4095 = vmatpush1.bf16.msra.mxu0 0
      %4096 = vmatprep.subr.bf16.mxu0 0
      %4097 = vmatpush1.bf16.msra.mxu0 0
      %4098 = vmatprep.subr.bf16.mxu0 0
      %4099 = vmatpush1.bf16.msra.mxu0 0
      %4100 = vmatprep.mubr.bf16.mxu0 0
      %4101 = vmatmul.mubr.bf16.gmra.mrb[0].mxu0 %v4063
      %v4102 = vpop.f32.mrb[0].mxu0
      %v4103 = vadd.f32 0.0, %v4102
      %v4104 = vpop.f32.mrb[0].mxu0
      %v4105 = vpop.f32.mrb[0].mxu0
      %v4106 = vpop.f32.mrb[0].mxu0
      %4107 = vdwg.mxu0
      %4108 = vrot.lane.b32.xlu0 %v635, 64
      %v4109 = vpop.permute.xlu0 %4108
      %v4111 = vsel %vm733, %v2806, 0
      %v4114 = vsel %vm2816, %v4109, 0
      %4116 = vmatprep.subr.bf16.mxu0 0
      %4117 = vmatpush1.bf16.msra.mxu0 %v4114
      %4118 = vmatprep.subr.bf16.mxu0 0
      %4119 = vmatpush1.bf16.msra.mxu0 0
      %4120 = vmatprep.subr.bf16.mxu0 0
      %4121 = vmatpush1.bf16.msra.mxu0 0
      %4122 = vmatprep.subr.bf16.mxu0 0
      %4123 = vmatpush1.bf16.msra.mxu0 0
      %4124 = vmatprep.subr.bf16.mxu0 0
      %4125 = vmatpush1.bf16.msra.mxu0 0
      %4126 = vmatprep.subr.bf16.mxu0 0
      %4127 = vmatpush1.bf16.msra.mxu0 0
      %4128 = vmatprep.subr.bf16.mxu0 0
      %4129 = vmatpush1.bf16.msra.mxu0 0
      %4130 = vmatprep.subr.bf16.mxu0 0
      %4131 = vmatpush1.bf16.msra.mxu0 0
      %4132 = vmatprep.subr.bf16.mxu0 0
      %4133 = vmatpush1.bf16.msra.mxu0 0
      %4134 = vmatprep.subr.bf16.mxu0 0
      %4135 = vmatpush1.bf16.msra.mxu0 0
      %4136 = vmatprep.subr.bf16.mxu0 0
      %4137 = vmatpush1.bf16.msra.mxu0 0
      %4138 = vmatprep.subr.bf16.mxu0 0
      %4139 = vmatpush1.bf16.msra.mxu0 0
      %4140 = vmatprep.subr.bf16.mxu0 0
      %4141 = vmatpush1.bf16.msra.mxu0 0
      %4142 = vmatprep.subr.bf16.mxu0 0
      %4143 = vmatpush1.bf16.msra.mxu0 0
      %4144 = vmatprep.subr.bf16.mxu0 0
      %4145 = vmatpush1.bf16.msra.mxu0 0
      %4146 = vmatprep.subr.bf16.mxu0 0
      %4147 = vmatpush1.bf16.msra.mxu0 0
      %4148 = vmatprep.mubr.bf16.mxu0 0
      %4149 = vmatmul.mubr.bf16.gmra.mrb[0].mxu0 %v4111
      %v4150 = vpop.f32.mrb[0].mxu0
      %v4151 = vadd.f32 0.0, %v4150
      %v4152 = vpop.f32.mrb[0].mxu0
      %v4153 = vpop.f32.mrb[0].mxu0
      %v4154 = vpop.f32.mrb[0].mxu0
      %4155 = vdwg.mxu0
      %4156 = vrot.lane.b32.xlu0 %v636, 64
      %v4157 = vpop.permute.xlu0 %4156
      %v4159 = vsel %vm733, %v2807, 0
      %v4162 = vsel %vm2816, %v4157, 0
      %4164 = vmatprep.subr.bf16.mxu0 0
      %4165 = vmatpush1.bf16.msra.mxu0 %v4162
      %4166 = vmatprep.subr.bf16.mxu0 0
      %4167 = vmatpush1.bf16.msra.mxu0 0
      %4168 = vmatprep.subr.bf16.mxu0 0
      %4169 = vmatpush1.bf16.msra.mxu0 0
      %4170 = vmatprep.subr.bf16.mxu0 0
      %4171 = vmatpush1.bf16.msra.mxu0 0
      %4172 = vmatprep.subr.bf16.mxu0 0
      %4173 = vmatpush1.bf16.msra.mxu0 0
      %4174 = vmatprep.subr.bf16.mxu0 0
      %4175 = vmatpush1.bf16.msra.mxu0 0
      %4176 = vmatprep.subr.bf16.mxu0 0
      %4177 = vmatpush1.bf16.msra.mxu0 0
      %4178 = vmatprep.subr.bf16.mxu0 0
      %4179 = vmatpush1.bf16.msra.mxu0 0
      %4180 = vmatprep.subr.bf16.mxu0 0
      %4181 = vmatpush1.bf16.msra.mxu0 0
      %4182 = vmatprep.subr.bf16.mxu0 0
      %4183 = vmatpush1.bf16.msra.mxu0 0
      %4184 = vmatprep.subr.bf16.mxu0 0
      %4185 = vmatpush1.bf16.msra.mxu0 0
      %4186 = vmatprep.subr.bf16.mxu0 0
      %4187 = vmatpush1.bf16.msra.mxu0 0
      %4188 = vmatprep.subr.bf16.mxu0 0
      %4189 = vmatpush1.bf16.msra.mxu0 0
      %4190 = vmatprep.subr.bf16.mxu0 0
      %4191 = vmatpush1.bf16.msra.mxu0 0
      %4192 = vmatprep.subr.bf16.mxu0 0
      %4193 = vmatpush1.bf16.msra.mxu0 0
      %4194 = vmatprep.subr.bf16.mxu0 0
      %4195 = vmatpush1.bf16.msra.mxu0 0
      %4196 = vmatprep.mubr.bf16.mxu0 0
      %4197 = vmatmul.mubr.bf16.gmra.mrb[0].mxu0 %v4159
      %v4198 = vpop.f32.mrb[0].mxu0
      %v4199 = vadd.f32 0.0, %v4198
      %v4200 = vpop.f32.mrb[0].mxu0
      %v4201 = vpop.f32.mrb[0].mxu0
      %v4202 = vpop.f32.mrb[0].mxu0
      %4203 = vdwg.mxu0
      %4204 = vrot.lane.b32.xlu0 %v637, 64
      %v4205 = vpop.permute.xlu0 %4204
      %v4207 = vsel %vm733, %v2808, 0
      %v4210 = vsel %vm2816, %v4205, 0
      %4212 = vmatprep.subr.bf16.mxu0 0
      %4213 = vmatpush1.bf16.msra.mxu0 %v4210
      %4214 = vmatprep.subr.bf16.mxu0 0
      %4215 = vmatpush1.bf16.msra.mxu0 0
      %4216 = vmatprep.subr.bf16.mxu0 0
      %4217 = vmatpush1.bf16.msra.mxu0 0
      %4218 = vmatprep.subr.bf16.mxu0 0
      %4219 = vmatpush1.bf16.msra.mxu0 0
      %4220 = vmatprep.subr.bf16.mxu0 0
      %4221 = vmatpush1.bf16.msra.mxu0 0
      %4222 = vmatprep.subr.bf16.mxu0 0
      %4223 = vmatpush1.bf16.msra.mxu0 0
      %4224 = vmatprep.subr.bf16.mxu0 0
      %4225 = vmatpush1.bf16.msra.mxu0 0
      %4226 = vmatprep.subr.bf16.mxu0 0
      %4227 = vmatpush1.bf16.msra.mxu0 0
      %4228 = vmatprep.subr.bf16.mxu0 0
      %4229 = vmatpush1.bf16.msra.mxu0 0
      %4230 = vmatprep.subr.bf16.mxu0 0
      %4231 = vmatpush1.bf16.msra.mxu0 0
      %4232 = vmatprep.subr.bf16.mxu0 0
      %4233 = vmatpush1.bf16.msra.mxu0 0
      %4234 = vmatprep.subr.bf16.mxu0 0
      %4235 = vmatpush1.bf16.msra.mxu0 0
      %4236 = vmatprep.subr.bf16.mxu0 0
      %4237 = vmatpush1.bf16.msra.mxu0 0
      %4238 = vmatprep.subr.bf16.mxu0 0
      %4239 = vmatpush1.bf16.msra.mxu0 0
      %4240 = vmatprep.subr.bf16.mxu0 0
      %4241 = vmatpush1.bf16.msra.mxu0 0
      %4242 = vmatprep.subr.bf16.mxu0 0
      %4243 = vmatpush1.bf16.msra.mxu0 0
      %4244 = vmatprep.mubr.bf16.mxu0 0
      %4245 = vmatmul.mubr.bf16.gmra.mrb[0].mxu0 %v4207
      %v4246 = vpop.f32.mrb[0].mxu0
      %v4247 = vadd.f32 0.0, %v4246
      %v4248 = vpop.f32.mrb[0].mxu0
      %v4249 = vpop.f32.mrb[0].mxu0
      %v4250 = vpop.f32.mrb[0].mxu0
      %4251 = vdwg.mxu0
      %4252 = vrot.lane.b32.xlu0 %v638, 64
      %v4253 = vpop.permute.xlu0 %4252
      %v4255 = vsel %vm733, %v2809, 0
      %v4258 = vsel %vm2816, %v4253, 0
      %4260 = vmatprep.subr.bf16.mxu0 0
      %4261 = vmatpush1.bf16.msra.mxu0 %v4258
      %4262 = vmatprep.subr.bf16.mxu0 0
      %4263 = vmatpush1.bf16.msra.mxu0 0
      %4264 = vmatprep.subr.bf16.mxu0 0
      %4265 = vmatpush1.bf16.msra.mxu0 0
      %4266 = vmatprep.subr.bf16.mxu0 0
      %4267 = vmatpush1.bf16.msra.mxu0 0
      %4268 = vmatprep.subr.bf16.mxu0 0
      %4269 = vmatpush1.bf16.msra.mxu0 0
      %4270 = vmatprep.subr.bf16.mxu0 0
      %4271 = vmatpush1.bf16.msra.mxu0 0
      %4272 = vmatprep.subr.bf16.mxu0 0
      %4273 = vmatpush1.bf16.msra.mxu0 0
      %4274 = vmatprep.subr.bf16.mxu0 0
      %4275 = vmatpush1.bf16.msra.mxu0 0
      %4276 = vmatprep.subr.bf16.mxu0 0
      %4277 = vmatpush1.bf16.msra.mxu0 0
      %4278 = vmatprep.subr.bf16.mxu0 0
      %4279 = vmatpush1.bf16.msra.mxu0 0
      %4280 = vmatprep.subr.bf16.mxu0 0
      %4281 = vmatpush1.bf16.msra.mxu0 0
      %4282 = vmatprep.subr.bf16.mxu0 0
      %4283 = vmatpush1.bf16.msra.mxu0 0
      %4284 = vmatprep.subr.bf16.mxu0 0
      %4285 = vmatpush1.bf16.msra.mxu0 0
      %4286 = vmatprep.subr.bf16.mxu0 0
      %4287 = vmatpush1.bf16.msra.mxu0 0
      %4288 = vmatprep.subr.bf16.mxu0 0
      %4289 = vmatpush1.bf16.msra.mxu0 0
      %4290 = vmatprep.subr.bf16.mxu0 0
      %4291 = vmatpush1.bf16.msra.mxu0 0
      %4292 = vmatprep.mubr.bf16.mxu0 0
      %4293 = vmatmul.mubr.bf16.gmra.mrb[0].mxu0 %v4255
      %v4294 = vpop.f32.mrb[0].mxu0
      %v4295 = vadd.f32 0.0, %v4294
      %v4296 = vpop.f32.mrb[0].mxu0
      %v4297 = vpop.f32.mrb[0].mxu0
      %v4298 = vpop.f32.mrb[0].mxu0
      %4299 = vdwg.mxu0
      %4300 = vrot.lane.b32.xlu0 %v639, 64
      %v4301 = vpop.permute.xlu0 %4300
      %v4303 = vsel %vm733, %v2810, 0
      %v4306 = vsel %vm2816, %v4301, 0
      %4308 = vmatprep.subr.bf16.mxu0 0
      %4309 = vmatpush1.bf16.msra.mxu0 %v4306
      %4310 = vmatprep.subr.bf16.mxu0 0
      %4311 = vmatpush1.bf16.msra.mxu0 0
      %4312 = vmatprep.subr.bf16.mxu0 0
      %4313 = vmatpush1.bf16.msra.mxu0 0
      %4314 = vmatprep.subr.bf16.mxu0 0
      %4315 = vmatpush1.bf16.msra.mxu0 0
      %4316 = vmatprep.subr.bf16.mxu0 0
      %4317 = vmatpush1.bf16.msra.mxu0 0
      %4318 = vmatprep.subr.bf16.mxu0 0
      %4319 = vmatpush1.bf16.msra.mxu0 0
      %4320 = vmatprep.subr.bf16.mxu0 0
      %4321 = vmatpush1.bf16.msra.mxu0 0
      %4322 = vmatprep.subr.bf16.mxu0 0
      %4323 = vmatpush1.bf16.msra.mxu0 0
      %4324 = vmatprep.subr.bf16.mxu0 0
      %4325 = vmatpush1.bf16.msra.mxu0 0
      %4326 = vmatprep.subr.bf16.mxu0 0
      %4327 = vmatpush1.bf16.msra.mxu0 0
      %4328 = vmatprep.subr.bf16.mxu0 0
      %4329 = vmatpush1.bf16.msra.mxu0 0
      %4330 = vmatprep.subr.bf16.mxu0 0
      %4331 = vmatpush1.bf16.msra.mxu0 0
      %4332 = vmatprep.subr.bf16.mxu0 0
      %4333 = vmatpush1.bf16.msra.mxu0 0
      %4334 = vmatprep.subr.bf16.mxu0 0
      %4335 = vmatpush1.bf16.msra.mxu0 0
      %4336 = vmatprep.subr.bf16.mxu0 0
      %4337 = vmatpush1.bf16.msra.mxu0 0
      %4338 = vmatprep.subr.bf16.mxu0 0
      %4339 = vmatpush1.bf16.msra.mxu0 0
      %4340 = vmatprep.mubr.bf16.mxu0 0
      %4341 = vmatmul.mubr.bf16.gmra.mrb[0].mxu0 %v4303
      %v4342 = vpop.f32.mrb[0].mxu0
      %v4343 = vadd.f32 0.0, %v4342
      %v4344 = vpop.f32.mrb[0].mxu0
      %v4345 = vpop.f32.mrb[0].mxu0
      %v4346 = vpop.f32.mrb[0].mxu0
      %4347 = vdwg.mxu0
      %v4348 = vrcp.pop %v2747
      %v4349 = vmul.f32 %v2855, %v4348
      %v4350 = vrcp.pop %v2748
      %v4351 = vmul.f32 %v2903, %v4350
      %v4352 = vrcp.pop %v2749
      %v4353 = vmul.f32 %v2951, %v4352
      %v4354 = vrcp.pop %v2750
      %v4355 = vmul.f32 %v2999, %v4354
      %v4356 = vrcp.pop %v2751
      %v4357 = vmul.f32 %v3047, %v4356
      %v4358 = vrcp.pop %v2752
      %v4359 = vmul.f32 %v3095, %v4358
      %v4360 = vrcp.pop %v2753
      %v4361 = vmul.f32 %v3143, %v4360
      %v4362 = vrcp.pop %v2754
      %v4363 = vmul.f32 %v3191, %v4362
      %v4364 = vrcp.pop %v2755
      %v4365 = vmul.f32 %v3239, %v4364
      %v4366 = vrcp.pop %v2756
      %v4367 = vmul.f32 %v3287, %v4366
      %v4368 = vrcp.pop %v2757
      %v4369 = vmul.f32 %v3335, %v4368
      %v4370 = vrcp.pop %v2758
      %v4371 = vmul.f32 %v3383, %v4370
      %v4372 = vrcp.pop %v2759
      %v4373 = vmul.f32 %v3431, %v4372
      %v4374 = vrcp.pop %v2760
      %v4375 = vmul.f32 %v3479, %v4374
      %v4376 = vrcp.pop %v2761
      %v4377 = vmul.f32 %v3527, %v4376
      %v4378 = vrcp.pop %v2762
      %v4379 = vmul.f32 %v3575, %v4378
      %v4380 = vrcp.pop %v2763
      %v4381 = vmul.f32 %v3623, %v4380
      %v4382 = vrcp.pop %v2764
      %v4383 = vmul.f32 %v3671, %v4382
      %v4384 = vrcp.pop %v2765
      %v4385 = vmul.f32 %v3719, %v4384
      %v4386 = vrcp.pop %v2766
      %v4387 = vmul.f32 %v3767, %v4386
      %v4388 = vrcp.pop %v2767
      %v4389 = vmul.f32 %v3815, %v4388
      %v4390 = vrcp.pop %v2768
      %v4391 = vmul.f32 %v3863, %v4390
      %v4392 = vrcp.pop %v2769
      %v4393 = vmul.f32 %v3911, %v4392
      %v4394 = vrcp.pop %v2770
      %v4395 = vmul.f32 %v3959, %v4394
      %v4396 = vrcp.pop %v2771
      %v4397 = vmul.f32 %v4007, %v4396
      %v4398 = vrcp.pop %v2772
      %v4399 = vmul.f32 %v4055, %v4398
      %v4400 = vrcp.pop %v2773
      %v4401 = vmul.f32 %v4103, %v4400
      %v4402 = vrcp.pop %v2774
      %v4403 = vmul.f32 %v4151, %v4402
      %v4404 = vrcp.pop %v2775
      %v4405 = vmul.f32 %v4199, %v4404
      %v4406 = vrcp.pop %v2776
      %v4407 = vmul.f32 %v4247, %v4406
      %v4408 = vrcp.pop %v2777
      %v4409 = vmul.f32 %v4295, %v4408
      %v4410 = vrcp.pop %v2778
      %v4411 = vmul.f32 %v4343, %v4410
      %4420 = vrot.lane.b32.xlu0 %v4365, 8
      %v4421 = vpop.permute.xlu0 %4420
      %4422 = vrot.lane.b32.xlu0 %v4367, 8
      %v4423 = vpop.permute.xlu0 %4422
      %4424 = vrot.lane.b32.xlu0 %v4369, 8
      %v4425 = vpop.permute.xlu0 %4424
      %4426 = vrot.lane.b32.xlu0 %v4371, 8
      %v4427 = vpop.permute.xlu0 %4426
      %4428 = vrot.lane.b32.xlu0 %v4373, 8
      %v4429 = vpop.permute.xlu0 %4428
      %4430 = vrot.lane.b32.xlu0 %v4375, 8
      %v4431 = vpop.permute.xlu0 %4430
      %4432 = vrot.lane.b32.xlu0 %v4377, 8
      %v4433 = vpop.permute.xlu0 %4432
      %4434 = vrot.lane.b32.xlu0 %v4379, 8
      %v4435 = vpop.permute.xlu0 %4434
      %4452 = vrot.lane.b32.xlu0 %v4381, 16
      %v4453 = vpop.permute.xlu0 %4452
      %4454 = vrot.lane.b32.xlu0 %v4383, 16
      %v4455 = vpop.permute.xlu0 %4454
      %4456 = vrot.lane.b32.xlu0 %v4385, 16
      %v4457 = vpop.permute.xlu0 %4456
      %4458 = vrot.lane.b32.xlu0 %v4387, 16
      %v4459 = vpop.permute.xlu0 %4458
      %4460 = vrot.lane.b32.xlu0 %v4389, 16
      %v4461 = vpop.permute.xlu0 %4460
      %4462 = vrot.lane.b32.xlu0 %v4391, 16
      %v4463 = vpop.permute.xlu0 %4462
      %4464 = vrot.lane.b32.xlu0 %v4393, 16
      %v4465 = vpop.permute.xlu0 %4464
      %4466 = vrot.lane.b32.xlu0 %v4395, 16
      %v4467 = vpop.permute.xlu0 %4466
      %4484 = vrot.lane.b32.xlu0 %v4397, 24
      %v4485 = vpop.permute.xlu0 %4484
      %4486 = vrot.lane.b32.xlu0 %v4399, 24
      %v4487 = vpop.permute.xlu0 %4486
      %4488 = vrot.lane.b32.xlu0 %v4401, 24
      %v4489 = vpop.permute.xlu0 %4488
      %4490 = vrot.lane.b32.xlu0 %v4403, 24
      %v4491 = vpop.permute.xlu0 %4490
      %4492 = vrot.lane.b32.xlu0 %v4405, 24
      %v4493 = vpop.permute.xlu0 %4492
      %4494 = vrot.lane.b32.xlu0 %v4407, 24
      %v4495 = vpop.permute.xlu0 %4494
      %4496 = vrot.lane.b32.xlu0 %v4409, 24
      %v4497 = vpop.permute.xlu0 %4496
      %4498 = vrot.lane.b32.xlu0 %v4411, 24
      %v4499 = vpop.permute.xlu0 %4498
      %v4508 = vsel %vm733, %v4349, %v4421
      %v4509 = vsel %vm733, %v4351, %v4423
      %v4510 = vsel %vm733, %v4353, %v4425
      %v4511 = vsel %vm733, %v4355, %v4427
      %v4512 = vsel %vm733, %v4357, %v4429
      %v4513 = vsel %vm733, %v4359, %v4431
      %v4514 = vsel %vm733, %v4361, %v4433
      %v4515 = vsel %vm733, %v4363, %v4435
      %vm4516 = vcmask 130048
      %v4517 = vsel %vm4516, %v4508, %v4453
      %v4518 = vsel %vm4516, %v4509, %v4455
      %v4519 = vsel %vm4516, %v4510, %v4457
      %v4520 = vsel %vm4516, %v4511, %v4459
      %v4521 = vsel %vm4516, %v4512, %v4461
      %v4522 = vsel %vm4516, %v4513, %v4463
      %v4523 = vsel %vm4516, %v4514, %v4465
      %v4524 = vsel %vm4516, %v4515, %v4467
      %vm4525 = vcmask 195584
      %v4526 = vsel %vm4525, %v4517, %v4485
      %v4527 = vsel %vm4525, %v4518, %v4487
      %v4528 = vsel %vm4525, %v4519, %v4489
      %v4529 = vsel %vm4525, %v4520, %v4491
      %v4530 = vsel %vm4525, %v4521, %v4493
      %v4531 = vsel %vm4525, %v4522, %v4495
      %v4532 = vsel %vm4525, %v4523, %v4497
      %v4533 = vsel %vm4525, %v4524, %v4499
      %v4534 = vpack.c.bf16 %v4527, %v4526
      %v4535 = vpack.c.bf16 %v4529, %v4528
      %v4536 = vpack.c.bf16 %v4531, %v4530
      %v4537 = vpack.c.bf16 %v4533, %v4532
      %v4538 = vpack.c.bf16 %v370, %v369
      %v4539 = vpack.c.bf16 %v372, %v371
      %v4541 = vlaneseq
      %v4542 = vshrl.u32 %v4541, 7
      %v4543 = vsub.s32 0, %v4542
      %v4544 = vrot.slane %v373, %v4543
      %v4547 = vsel %vm386, %v4534, 0
      %v4550 = vsel %vm386, %v4535, 0
      %v4553 = vsel %vm386, %v4536, 0
      %v4556 = vsel %vm386, %v4537, 0
      %4558 = vmatprep.subr.bf16.mxu0 0
      %4559 = vmatpush1.bf16.msra.mxu0 %v4538
      %4560 = vmatprep.subr.bf16.mxu0 0
      %4561 = vmatpush1.bf16.msra.mxu0 %v4539
      %4562 = vmatprep.subr.bf16.mxu0 0
      %4563 = vmatpush1.bf16.msra.mxu0 0
      %4564 = vmatprep.subr.bf16.mxu0 0
      %4565 = vmatpush1.bf16.msra.mxu0 0
      %4566 = vmatprep.subr.bf16.mxu0 0
      %4567 = vmatpush1.bf16.msra.mxu0 0
      %4568 = vmatprep.subr.bf16.mxu0 0
      %4569 = vmatpush1.bf16.msra.mxu0 0
      %4570 = vmatprep.subr.bf16.mxu0 0
      %4571 = vmatpush1.bf16.msra.mxu0 0
      %4572 = vmatprep.subr.bf16.mxu0 0
      %4573 = vmatpush1.bf16.msra.mxu0 0
      %4574 = vmatprep.subr.bf16.mxu0 0
      %4575 = vmatpush1.bf16.msra.mxu0 0
      %4576 = vmatprep.subr.bf16.mxu0 0
      %4577 = vmatpush1.bf16.msra.mxu0 0
      %4578 = vmatprep.subr.bf16.mxu0 0
      %4579 = vmatpush1.bf16.msra.mxu0 0
      %4580 = vmatprep.subr.bf16.mxu0 0
      %4581 = vmatpush1.bf16.msra.mxu0 0
      %4582 = vmatprep.subr.bf16.mxu0 0
      %4583 = vmatpush1.bf16.msra.mxu0 0
      %4584 = vmatprep.subr.bf16.mxu0 0
      %4585 = vmatpush1.bf16.msra.mxu0 0
      %4586 = vmatprep.subr.bf16.mxu0 0
      %4587 = vmatpush1.bf16.msra.mxu0 0
      %4588 = vmatprep.subr.bf16.mxu0 0
      %4589 = vmatpush1.bf16.msra.mxu0 0
      %4590 = vmatprep.mubr.bf16.mxu0 0
      %4591 = vmatmul.mubr.bf16.gmra.mrb[0].mxu0 %v4547
      %v4592 = vpop.f32.mrb[0].mxu0
      %v4593 = vadd.f32 %v4544, %v4592
      %v4594 = vpop.f32.mrb[0].mxu0
      %v4595 = vpop.f32.mrb[0].mxu0
      %v4596 = vadd.f32 %v4544, %v4595
      %v4597 = vpop.f32.mrb[0].mxu0
      %4598 = vmatprep.mubr.bf16.mxu0 0
      %4599 = vmatmul.mubr.bf16.gmra.mrb[0].mxu0 %v4550
      %v4600 = vpop.f32.mrb[0].mxu0
      %v4601 = vadd.f32 %v4544, %v4600
      %v4602 = vpop.f32.mrb[0].mxu0
      %v4603 = vpop.f32.mrb[0].mxu0
      %v4604 = vadd.f32 %v4544, %v4603
      %v4605 = vpop.f32.mrb[0].mxu0
      %4606 = vmatprep.mubr.bf16.mxu0 0
      %4607 = vmatmul.mubr.bf16.gmra.mrb[0].mxu0 %v4553
      %v4608 = vpop.f32.mrb[0].mxu0
      %v4609 = vadd.f32 %v4544, %v4608
      %v4610 = vpop.f32.mrb[0].mxu0
      %v4611 = vpop.f32.mrb[0].mxu0
      %v4612 = vadd.f32 %v4544, %v4611
      %v4613 = vpop.f32.mrb[0].mxu0
      %4614 = vmatprep.mubr.bf16.mxu0 0
      %4615 = vmatmul.mubr.bf16.gmra.mrb[0].mxu0 %v4556
      %v4616 = vpop.f32.mrb[0].mxu0
      %v4617 = vadd.f32 %v4544, %v4616
      %v4618 = vpop.f32.mrb[0].mxu0
      %v4619 = vpop.f32.mrb[0].mxu0
      %v4620 = vadd.f32 %v4544, %v4619
      %v4621 = vpop.f32.mrb[0].mxu0
      %4622 = vdwg.mxu0
      %v4623 = vld [vmem:[%s7] sm:$0x1]
      %v4624 = vld [vmem:[%s8] sm:$0x1]
      %v4625 = vadd.f32 %v354, %v4593
      %v4626 = vadd.f32 %v355, %v4596
      %v4627 = vadd.f32 %v356, %v4601
      %v4628 = vadd.f32 %v357, %v4604
      %v4629 = vadd.f32 %v358, %v4609
      %v4630 = vadd.f32 %v359, %v4612
      %v4631 = vadd.f32 %v360, %v4617
      %v4632 = vadd.f32 %v361, %v4620
      %v4633 = vsel %vm386, %v4625, 0.0
      %4634 = vadd.xlane.f32.xlu0 %v4633
      %v4635 = vpop.xlane.xlu0 %4634
      %v4636 = vsel %vm386, %v4626, 0.0
      %4637 = vadd.xlane.f32.xlu0 %v4636
      %v4638 = vpop.xlane.xlu0 %4637
      %v4639 = vsel %vm386, %v4627, 0.0
      %4640 = vadd.xlane.f32.xlu0 %v4639
      %v4641 = vpop.xlane.xlu0 %4640
      %v4642 = vsel %vm386, %v4628, 0.0
      %4643 = vadd.xlane.f32.xlu0 %v4642
      %v4644 = vpop.xlane.xlu0 %4643
      %v4645 = vsel %vm386, %v4629, 0.0
      %4646 = vadd.xlane.f32.xlu0 %v4645
      %v4647 = vpop.xlane.xlu0 %4646
      %v4648 = vsel %vm386, %v4630, 0.0
      %4649 = vadd.xlane.f32.xlu0 %v4648
      %v4650 = vpop.xlane.xlu0 %4649
      %v4651 = vsel %vm386, %v4631, 0.0
      %4652 = vadd.xlane.f32.xlu0 %v4651
      %v4653 = vpop.xlane.xlu0 %4652
      %v4654 = vsel %vm386, %v4632, 0.0
      %4655 = vadd.xlane.f32.xlu0 %v4654
      %v4656 = vpop.xlane.xlu0 %4655
      %v4657 = vrcp.pop 32.0
      %v4658 = vmul.f32 %v4635, %v4657
      %v4659 = vmul.f32 %v4638, %v4657
      %v4660 = vmul.f32 %v4641, %v4657
      %v4661 = vmul.f32 %v4644, %v4657
      %v4662 = vmul.f32 %v4647, %v4657
      %v4663 = vmul.f32 %v4650, %v4657
      %v4664 = vmul.f32 %v4653, %v4657
      %v4665 = vmul.f32 %v4656, %v4657
      %v4666 = vsub.f32 %v4625, %v4658
      %v4667 = vsub.f32 %v4626, %v4659
      %v4668 = vsub.f32 %v4627, %v4660
      %v4669 = vsub.f32 %v4628, %v4661
      %v4670 = vsub.f32 %v4629, %v4662
      %v4671 = vsub.f32 %v4630, %v4663
      %v4672 = vsub.f32 %v4631, %v4664
      %v4673 = vsub.f32 %v4632, %v4665
      %v4674 = vmul.f32 %v4666, %v4666
      %v4675 = vmul.f32 %v4667, %v4667
      %v4676 = vmul.f32 %v4668, %v4668
      %v4677 = vmul.f32 %v4669, %v4669
      %v4678 = vmul.f32 %v4670, %v4670
      %v4679 = vmul.f32 %v4671, %v4671
      %v4680 = vmul.f32 %v4672, %v4672
      %v4681 = vmul.f32 %v4673, %v4673
      %v4682 = vsel %vm386, %v4674, 0.0
      %4683 = vadd.xlane.f32.xlu0 %v4682
      %v4684 = vpop.xlane.xlu0 %4683
      %v4685 = vsel %vm386, %v4675, 0.0
      %4686 = vadd.xlane.f32.xlu0 %v4685
      %v4687 = vpop.xlane.xlu0 %4686
      %v4688 = vsel %vm386, %v4676, 0.0
      %4689 = vadd.xlane.f32.xlu0 %v4688
      %v4690 = vpop.xlane.xlu0 %4689
      %v4691 = vsel %vm386, %v4677, 0.0
      %4692 = vadd.xlane.f32.xlu0 %v4691
      %v4693 = vpop.xlane.xlu0 %4692
      %v4694 = vsel %vm386, %v4678, 0.0
      %4695 = vadd.xlane.f32.xlu0 %v4694
      %v4696 = vpop.xlane.xlu0 %4695
      %v4697 = vsel %vm386, %v4679, 0.0
      %4698 = vadd.xlane.f32.xlu0 %v4697
      %v4699 = vpop.xlane.xlu0 %4698
      %v4700 = vsel %vm386, %v4680, 0.0
      %4701 = vadd.xlane.f32.xlu0 %v4700
      %v4702 = vpop.xlane.xlu0 %4701
      %v4703 = vsel %vm386, %v4681, 0.0
      %4704 = vadd.xlane.f32.xlu0 %v4703
      %v4705 = vpop.xlane.xlu0 %4704
      %v4706 = vmul.f32 %v4684, %v4657
      %v4707 = vmul.f32 %v4687, %v4657
      %v4708 = vmul.f32 %v4690, %v4657
      %v4709 = vmul.f32 %v4693, %v4657
      %v4710 = vmul.f32 %v4696, %v4657
      %v4711 = vmul.f32 %v4699, %v4657
      %v4712 = vmul.f32 %v4702, %v4657
      %v4713 = vmul.f32 %v4705, %v4657
      %v4714 = vadd.f32 %v4706, 1e-05
      %v4715 = vadd.f32 %v4707, 1e-05
      %v4716 = vadd.f32 %v4708, 1e-05
      %v4717 = vadd.f32 %v4709, 1e-05
      %v4718 = vadd.f32 %v4710, 1e-05
      %v4719 = vadd.f32 %v4711, 1e-05
      %v4720 = vadd.f32 %v4712, 1e-05
      %v4721 = vadd.f32 %v4713, 1e-05
      %v4722 = vrsqrt.pop %v4714
      %v4723 = vrsqrt.pop %v4715
      %v4724 = vrsqrt.pop %v4716
      %v4725 = vrsqrt.pop %v4717
      %v4726 = vrsqrt.pop %v4718
      %v4727 = vrsqrt.pop %v4719
      %v4728 = vrsqrt.pop %v4720
      %v4729 = vrsqrt.pop %v4721
      %v4730 = vmul.f32 %v4666, %v4722
      %v4731 = vmul.f32 %v4667, %v4723
      %v4732 = vmul.f32 %v4668, %v4724
      %v4733 = vmul.f32 %v4669, %v4725
      %v4734 = vmul.f32 %v4670, %v4726
      %v4735 = vmul.f32 %v4671, %v4727
      %v4736 = vmul.f32 %v4672, %v4728
      %v4737 = vmul.f32 %v4673, %v4729
      %v4739 = vlaneseq
      %v4740 = vshrl.u32 %v4739, 7
      %v4741 = vsub.s32 0, %v4740
      %v4742 = vrot.slane %v4623, %v4741
      %v4744 = vmul.f32 %v4730, %v4742
      %v4745 = vmul.f32 %v4731, %v4742
      %v4746 = vmul.f32 %v4732, %v4742
      %v4747 = vmul.f32 %v4733, %v4742
      %v4748 = vmul.f32 %v4734, %v4742
      %v4749 = vmul.f32 %v4735, %v4742
      %v4750 = vmul.f32 %v4736, %v4742
      %v4751 = vmul.f32 %v4737, %v4742
      %v4753 = vlaneseq
      %v4754 = vshrl.u32 %v4753, 7
      %v4755 = vsub.s32 0, %v4754
      %v4756 = vrot.slane %v4624, %v4755
      %v4758 = vadd.f32 %v4744, %v4756
      %v4759 = vadd.f32 %v4745, %v4756
      %v4760 = vadd.f32 %v4746, %v4756
      %v4761 = vadd.f32 %v4747, %v4756
      %v4762 = vadd.f32 %v4748, %v4756
      %v4763 = vadd.f32 %v4749, %v4756
      %v4764 = vadd.f32 %v4750, %v4756
      %v4765 = vadd.f32 %v4751, %v4756
      %4766 = vst.msk [vmem:[%s351] sm:$0xff] %vm386, %v4758
      %4767 = vst.msk [vmem:[%s351 + $0x8] sm:$0xff] %vm386, %v4759
      %4768 = vst.msk [vmem:[%s351 + $0x10] sm:$0xff] %vm386, %v4760
      %4769 = vst.msk [vmem:[%s351 + $0x18] sm:$0xff] %vm386, %v4761
      %4770 = vst.msk [vmem:[%s351 + $0x20] sm:$0xff] %vm386, %v4762
      %4771 = vst.msk [vmem:[%s351 + $0x28] sm:$0xff] %vm386, %v4763
      %4772 = vst.msk [vmem:[%s351 + $0x30] sm:$0xff] %vm386, %v4764
      %4773 = vst.msk [vmem:[%s351 + $0x38] sm:$0xff] %vm386, %v4765
      %s4774 = smul.u32 8, %s20
      %p4775 = scmp.lt.s32.totalorder %s4774, 15
      %s4776 = scalar_select %p4775, %s4774, 15
      %s4777 = smul.addr %s4776, 8
      %s4778 = scalar_lea.vmem %s9, %s4777
      // Predicated region
      $region57: #{tpu_custom_call.1} parent=55 // pred_check
        %p4779 = pneg %p237
      $region58: #{tpu_custom_call.1} parent=55 // pred_check_branch
        %4781 = sbr.rel (%p4779) target = $region60
      $region59: #{tpu_custom_call.1} parent=55 // pred_region
        %s4782 = smul.u32 8, %s20
      $region60: #{tpu_custom_call.1} parent=55 // pred_fallthru
        _
    $region56: #{tpu_custom_call.1} parent=5 // pred_fallthru
      _
    %p4783 = scmp.le.s32.totalorder 2, %s15
    // Predicated region
    $region61: #{tpu_custom_call.1} parent=5 // pred_check
      %p4784 = pneg %p4783
    $region62: #{tpu_custom_call.1} parent=5 // pred_check_branch
      %4786 = sbr.rel (%p4784) target = $region64
    $region63: #{tpu_custom_call.1} parent=5 // pred_region
      %s4787 = ssub.s32 %s15, 2
      // Predicated region
      $region65: #{tpu_custom_call.1} parent=63 // pred_check
        %p4788 = pneg %p243
      $region66: #{tpu_custom_call.1} parent=63 // pred_check_branch
        %4790 = sbr.rel (%p4788) target = $region68
      $region67: #{tpu_custom_call.1} parent=63 // pred_region
        %s4791 = smul.u32 8, %s21
        %p4792 = scmp.lt.s32.totalorder %s4791, 15
        %s4793 = scalar_select %p4792, %s4791, 15
        %s4794 = smul.addr %s4793, 8
        %s4795 = scalar_lea.vmem %s9, %s4794
      $region68: #{tpu_custom_call.1} parent=63 // pred_fallthru
        _
    $region64: #{tpu_custom_call.1} parent=5 // pred_fallthru
      _
  $region6: #{tpu_custom_call.1} parent=0 // loop_footer
    %s19 = sadd.s32 1, %s15
  $region7: #{tpu_custom_call.1} parent=0 // loop_footer_branch
    %14 = sbr.rel target = $region3
  $region8: #{tpu_custom_call.1} parent=0 // loop_exit
    _

</llo_original>
